<compile_context>
chip_gen: v6e
topology: v6e:2x2x1
jax: 0.10.0
libtpu: 0.0.40
codegen_flags: <defaults>
</compile_context>

<pallas_src>
import numpy as np
import jax
import jax.numpy as jnp
from jax import lax
from jax.experimental import pallas as pl
from jax.experimental.pallas import tpu as pltpu

BN_EPS = 1e-5


# ----------------------------- layout helpers (glue) -----------------------------
def nhwc_to_rp(x):
    # logical NHWC -> row-pair packed: (N, H, W, C) -> (N, H//2, W, 2*C)
    N, H, W, C = x.shape
    assert H % 2 == 0
    return (x.reshape(N, H // 2, 2, W, C)
             .transpose(0, 1, 3, 2, 4)
             .reshape(N, H // 2, W, 2 * C))


def rp_to_nhwc(x_rp):
    # row-pair packed -> logical NHWC
    N, Hp, W, C2 = x_rp.shape
    C = C2 // 2
    return (x_rp.reshape(N, Hp, W, 2, C)
                .transpose(0, 1, 3, 2, 4)
                .reshape(N, 2 * Hp, W, C))


# --------------------------------- stage kernel ----------------------------------
def _merge_kernel(x_ref, hp_ref, hn_ref, w_ref, l_ref, o_ref):
    # x_ref:  (1, TJ, W, 2*Cin)      row-pair packed bottom tile (bf16)
    # hp_ref: (1, 1,  W, 2*Cin)      packed bottom row just above the tile (clamped)
    # hn_ref: (1, 1,  W, 2*Cin)      packed bottom row just below the tile (clamped)
    # w_ref:  (2*Cin, 2*Cout)        block-diagonal 1x1 conv weight (BN folded), bf16
    # l_ref:  (1, TJ, 2, W, 4*Cout)  left tile, phase-packed (see wrapper reshape)
    # o_ref:  (1, TJ, 2, W, 4*Cout)  output tile, same layout as l_ref
    _, TJ, W, Cin2 = x_ref.shape
    Cout2 = w_ref.shape[1]
    C = Cout2 // 2

    w = w_ref[...]

    # 1x1 conv (+ folded BN scale) + ReLU on the packed tile: per-pixel MXU matmul.
    xb = x_ref[0].reshape(TJ * W, Cin2).astype(jnp.bfloat16)
    y = jnp.dot(xb, w, preferred_element_type=jnp.float32)
    y = jnp.maximum(y, 0.0).reshape(TJ, W, Cout2)
    y0 = y[:, :, :C]          # y rows 2j   within the tile
    y1 = y[:, :, C:]          # y rows 2j+1 within the tile

    # conv + ReLU of the two halo rows (cheap recompute of a single row each).
    xh = jnp.concatenate([hp_ref[0], hn_ref[0]], axis=0).reshape(2 * W, Cin2)
    yh = jnp.dot(xh.astype(jnp.bfloat16), w, preferred_element_type=jnp.float32)
    yh = jnp.maximum(yh, 0.0).reshape(2, W, Cout2)

    t = pl.program_id(1)
    nt = pl.num_programs(1)
    # y row just above / below the tile; at the image border clamp to the tile edge
    # (exactly the align_corners=False edge clamp).
    y_top = jnp.where(t == 0, y0[:1], yh[0:1, :, C:])                # y row (first-1)
    y_bot = jnp.where(t == nt - 1, y1[TJ - 1:TJ], yh[1:2, :, :C])    # y row (last+1)

    # Reused blend products (VPU micro-opt: 0.25*/0.75* computed once).
    q0, t0 = 0.25 * y0, 0.75 * y0
    q1, t1 = 0.25 * y1, 0.75 * y1
    if TJ > 1:
        q1_up = jnp.concatenate([0.25 * y_top, q1[:-1]], axis=0)     # 0.25 * y[2j-1]
        q0_dn = jnp.concatenate([q0[1:], 0.25 * y_bot], axis=0)      # 0.25 * y[2j+2]
    else:
        q1_up, q0_dn = 0.25 * y_top, 0.25 * y_bot

    col = lax.broadcasted_iota(jnp.int32, (1, W, 1), 1)

    def col_upsample(p):
        # p: (TJ, W, K) -> (TJ, W, 2K) = [0.25*p[k-1]+0.75*p[k] | 0.75*p[k]+0.25*p[k+1]]
        # neighbours via XLU roll (non-negative shifts); edges clamped
        # (align_corners=False).
        p75 = 0.75 * p
        p_l = jnp.where(col == 0, p, pltpu.roll(p, 1, axis=1))
        p_r = jnp.where(col == W - 1, p, pltpu.roll(p, W - 1, axis=1))
        return jnp.concatenate([0.25 * p_l + p75, p75 + 0.25 * p_r], axis=-1)

    # s = 0: output rows 4j+0 / 4j+1 ; s = 1: output rows 4j+2 / 4j+3 (the row pair is
    # packed into the lane axis).  Row-direction upsample first (linear -> order-free),
    # then the lane-packed column upsample, then add `left` (f32) and store lane-dense.
    for s in range(2):
        if s == 0:
            ra = q1_up + t0          # 0.25*y[2j-1] + 0.75*y[2j]
            rb = t0 + q1             # 0.75*y[2j]   + 0.25*y[2j+1]
        else:
            ra = q0 + t1             # 0.25*y[2j]   + 0.75*y[2j+1]
            rb = t1 + q0_dn          # 0.75*y[2j+1] + 0.25*y[2j+2]
        p = jnp.concatenate([ra, rb], axis=-1)                        # (TJ, W, 2*Cout)
        out = col_upsample(p) + l_ref[0, :, s].astype(jnp.float32)    # (TJ, W, 4*Cout)
        o_ref[0, :, s] = out.astype(o_ref.dtype)


# ------------------------------ VMEM / tile sizing --------------------------------
def _vmem_budget():
    # Derive budgets from the actual per-core VMEM capacity (v5e/v6e: 128 MiB,
    # v7x: 64 MiB).  Fall back to a v7x-safe value if the query is unavailable
    # (e.g. interpret mode).
    try:
        cap = int(pltpu.get_tpu_info().vmem_capacity_bytes)
    except Exception:
        cap = 64 << 20
    vmem_limit = min(int(cap * 0.82), 106 << 20)
    tile_budget = int(vmem_limit * 0.55)
    return tile_budget, vmem_limit


def _pick_tile_rows(N, Hbp, W, Cin2, Cout2, budget_bytes, out_itemsize,
                    max_tile_rows=None):
    # Fixed VMEM: double-buffered bf16 block-diagonal weight + 2 double-buffered
    # 1-row bf16 halo streams.
    fixed = 4 * Cin2 * Cout2 + 8 * W * Cin2
    # Per packed bottom row: double-buffered bf16 bottom + bf16 left + out blocks,
    # plus ~12 live full-width f32 temporaries inside the kernel.
    per_row = 4 * W * Cin2 + W * Cout2 * (64 + 8 * out_itemsize)
    cap = max(1, (int(budget_bytes) - fixed) // max(1, per_row))
    cap = max(cap, pl.cdiv(256, W))          # keep the matmul M dim MXU-sized
    if max_tile_rows is not None:
        cap = min(cap, max_tile_rows)

    def largest_divisor(limit):
        best = 1
        for d in range(1, Hbp + 1):
            if Hbp % d == 0 and d <= limit:
                best = d
        return best

    tj = largest_divisor(cap)
    # Keep >= 2 grid steps so both v7x TensorCores get work.
    if N * (Hbp // tj) < 2 and Hbp > 1:
        tj = largest_divisor(max(1, min(cap, Hbp // 2)))
    return tj


# --------------------------------- stage wrapper ----------------------------------
def upsample_merge(bottom_rp, left_rp, w_bd, *, out_dtype=jnp.bfloat16,
                   tile_budget_bytes=None, vmem_limit_bytes=None,
                   max_tile_rows=None):
    # bottom_rp: (N, Hbp, W, 2*Cin)        row-pair packed bottom (bf16)
    # left_rp:   (N, 2*Hbp, 2*W, 2*Cout)   row-pair packed left (bf16)
    # w_bd:      (2*Cin, 2*Cout) bf16      block-diagonal folded 1x1 conv weight
    # returns the merged map, row-pair packed: (N, 2*Hbp, 2*W, 2*Cout) in out_dtype
    N, Hbp, W, Cin2 = bottom_rp.shape
    Cout2 = w_bd.shape[1]
    Cout = Cout2 // 2
    assert w_bd.shape[0] == Cin2
    assert left_rp.shape == (N, 2 * Hbp, 2 * W, Cout2)

    auto_budget, auto_limit = _vmem_budget()
    if tile_budget_bytes is None:
        tile_budget_bytes = auto_budget
    if vmem_limit_bytes is None:
        vmem_limit_bytes = auto_limit

    TJ = _pick_tile_rows(N, Hbp, W, Cin2, Cout2, tile_budget_bytes,
                         jnp.dtype(out_dtype).itemsize, max_tile_rows)
    assert Hbp % TJ == 0
    nT = Hbp // TJ

    # Free (bitcast) reshape: split packed output rows into (pair, parity) and fold
    # the output column parity into the lane axis -> last dim 4*Cout (lane-dense).
    left5 = left_rp.reshape(N, Hbp, 2, W, 4 * Cout)

    out5 = pl.pallas_call(
        _merge_kernel,
        out_shape=jax.ShapeDtypeStruct((N, Hbp, 2, W, 4 * Cout), out_dtype),
        grid=(N, nT),
        in_specs=[
            pl.BlockSpec((1, TJ, W, Cin2), lambda n, t: (n, t, 0, 0)),
            pl.BlockSpec((1, 1, W, Cin2),
                         lambda n, t: (n, jnp.maximum(t * TJ - 1, 0), 0, 0)),
            pl.BlockSpec((1, 1, W, Cin2),
                         lambda n, t: (n, jnp.minimum((t + 1) * TJ, Hbp - 1), 0, 0)),
            pl.BlockSpec((Cin2, Cout2), lambda n, t: (0, 0)),
            pl.BlockSpec((1, TJ, 2, W, 4 * Cout), lambda n, t: (n, t, 0, 0, 0)),
        ],
        out_specs=pl.BlockSpec((1, TJ, 2, W, 4 * Cout), lambda n, t: (n, t, 0, 0, 0)),
        compiler_params=pltpu.CompilerParams(
            dimension_semantics=("parallel", "parallel"),
            vmem_limit_bytes=vmem_limit_bytes),
    )(bottom_rp, bottom_rp, bottom_rp, w_bd, left5)

    # Free (bitcast) reshape back to the canonical row-pair packed layout; this array
    # is exactly the next stage's packed bottom.
    return out5.reshape(N, 2 * Hbp, 2 * W, Cout2)


# ----------------------------------- weights --------------------------------------
def make_decoder_weights(key):
    # 1x1 conv weights (Cout, Cin), kaiming_normal(fan_out, relu): std = sqrt(2/Cout).
    # Eval-mode BatchNorm (mean=0, var=1, gamma=1, beta=0) folds to a 1/sqrt(1+eps)
    # scale.  Stored block-diagonally (2*Cin, 2*Cout) so one matmul handles both
    # lane-packed rows; cast to bf16 (MXU operands; accumulation stays f32).
    specs = [(512, 256), (256, 128), (128, 64), (64, 64)]  # merge4, merge3, merge2, merge1
    bn_scale = 1.0 / np.sqrt(1.0 + BN_EPS)
    ws = []
    for i, (cin, cout) in enumerate(specs):
        k = jax.random.fold_in(key, i)
        w = jax.random.normal(k, (cout, cin), jnp.float32) * np.sqrt(2.0 / cout)
        wt = (w.T * bn_scale).astype(jnp.float32)            # (Cin, Cout)
        wbd = jnp.zeros((2 * cin, 2 * cout), jnp.float32)
        wbd = wbd.at[:cin, :cout].set(wt)
        wbd = wbd.at[cin:, cout:].set(wt)
        ws.append(wbd.astype(jnp.bfloat16))
    return ws


def decoder_forward(fmaps_rp, weights, *, tile_budget_bytes=None, max_tile_rows=None):
    # fmaps_rp: dict {1..5} of row-pair packed (preferably bf16) maps.  Returns the
    # merge1 result, row-pair packed, f32 (inter-stage traffic stays bf16).
    x = fmaps_rp[5]
    lefts = (fmaps_rp[4], fmaps_rp[3], fmaps_rp[2], fmaps_rp[1])
    for i, (left, w) in enumerate(zip(lefts, weights)):
        out_dtype = jnp.float32 if i == len(weights) - 1 else jnp.bfloat16
        x = upsample_merge(x, left, w, out_dtype=out_dtype,
                           tile_budget_bytes=tile_budget_bytes,
                           max_tile_rows=max_tile_rows)
    return x


# ---------------- pure numpy reference (independent of the kernel) ----------------
def _ref_upsample2x(x):
    # x: (N, H, W, C); PyTorch bilinear, align_corners=False, scale_factor=2.
    def iw(L):
        dst = np.arange(2 * L)
        src = np.maximum(dst * 0.5 - 0.25, 0.0)
        i0 = np.minimum(np.floor(src).astype(np.int64), L - 1)
        i1 = np.minimum(i0 + 1, L - 1)
        lam = src - i0
        return i0, i1, lam

    _, H, W, _ = x.shape
    r0, r1, rl = iw(H)
    c0, c1, cl = iw(W)
    xr = x[:, r0] * (1.0 - rl)[None, :, None, None] + x[:, r1] * rl[None, :, None, None]
    return (xr[:, :, c0] * (1.0 - cl)[None, None, :, None]
            + xr[:, :, c1] * cl[None, None, :, None])


def _ref_decoder(fmaps_nhwc, weights_bd):
    # float64 reference; the conv weights are taken from the bf16 block-diagonal
    # weights so both paths use identical weight values.
    x = np.asarray(fmaps_nhwc[5], dtype=np.float64)
    lefts = (fmaps_nhwc[4], fmaps_nhwc[3], fmaps_nhwc[2], fmaps_nhwc[1])
    for left, wbd in zip(lefts, weights_bd):
        cin, cout = wbd.shape[0] // 2, wbd.shape[1] // 2
        w = np.asarray(wbd[:cin, :cout].astype(jnp.float32), dtype=np.float64)
        y = np.maximum(np.einsum('nhwc,cd->nhwd', x, w), 0.0)
        x = _ref_upsample2x(y) + np.asarray(left, np.float64)
    return x


if __name__ == "__main__":
    N = 2
    H5, W5 = 4, 8   # spatial size of fmaps[5]; fmaps[i] is 2**(5-i) times larger
    chans = {5: 512, 4: 256, 3: 128, 2: 64, 1: 64}

    key = jax.random.PRNGKey(0)
    fmaps = {}
    for i in (5, 4, 3, 2, 1):
        key, sub = jax.random.split(key)
        s = 2 ** (5 - i)
        fmaps[i] = jax.random.normal(sub, (N, H5 * s, W5 * s, chans[i]), jnp.float32)

    weights = make_decoder_weights(jax.random.PRNGKey(42))

    # Layout glue: pack every external input once, cast to bf16 once (all inter-stage
    # HBM traffic is bf16); unpack the final (f32) result once.
    fmaps_rp = {i: nhwc_to_rp(v).astype(jnp.bfloat16) for i, v in fmaps.items()}

    ref = _ref_decoder({i: np.asarray(v) for i, v in fmaps.items()}, weights)

    def check(out_rp):
        out = jax.block_until_ready(rp_to_nhwc(out_rp))
        assert out.shape == (N, 16 * H5, 16 * W5, 64)
        out_np = np.asarray(out, dtype=np.float64)
        err = np.abs(out_np - ref)
        # bf16 MXU operands / bf16 inter-stage storage (f32 accumulation) across 4
        # chained stages: loose max-error bound plus a tight mean-error bound.
        np.testing.assert_allclose(out_np, ref, rtol=2e-2, atol=2e-1)
        assert float(err.mean()) < 5e-2, float(err.mean())

    # 1) default (VMEM-roofline-sized) tiles.
    check(decoder_forward(fmaps_rp, weights))
    # 2) forced 1-row tiles: exercises multi-tile grids, the TJ==1 path and the halo
    #    clamping logic at these small test shapes.
    check(decoder_forward(fmaps_rp, weights, max_tile_rows=1))

    print("KERNEL_OK")
</pallas_src>

<mosaic_0001>
module attributes {stable_mosaic.version = 11 : i64} {
  func.func @_merge_kernel(%arg0: i32, %arg1: i32, %arg2: memref<1x2x8x1024xbf16, #tpu.memory_space<vmem>>, %arg3: memref<1x1x8x1024xbf16, #tpu.memory_space<vmem>>, %arg4: memref<1x1x8x1024xbf16, #tpu.memory_space<vmem>>, %arg5: memref<1024x512xbf16, #tpu.memory_space<vmem>>, %arg6: memref<1x2x2x8x1024xbf16, #tpu.memory_space<vmem>>, %arg7: memref<1x2x2x8x1024xbf16, #tpu.memory_space<vmem>>) attributes {dimension_semantics = [#tpu.dimension_semantics<parallel>, #tpu.dimension_semantics<parallel>], iteration_bounds = array<i64: 2, 1>, scalar_prefetch = 0 : i64, scratch_operands = 0 : i64, tpu.core_type = #tpu.core_type<tc>, window_params = [{transform_indices = @transform_0, window_bounds = array<i64: 1, 2, 8, 1024>}, {transform_indices = @transform_1, window_bounds = array<i64: 1, 1, 8, 1024>}, {transform_indices = @transform_2, window_bounds = array<i64: 1, 1, 8, 1024>}, {pipeline_mode = #tpu.pipeline_mode<synchronous>, transform_indices = @transform_3, window_bounds = array<i64: 1024, 512>}, {transform_indices = @transform_4, window_bounds = array<i64: 1, 2, 2, 8, 1024>}, {transform_indices = @transform_5, window_bounds = array<i64: 1, 2, 2, 8, 1024>}]} {
    %c0 = arith.constant 0 : index
    %c0_0 = arith.constant 0 : index
    %0 = vector.load %arg5[%c0, %c0_0] : memref<1024x512xbf16, #tpu.memory_space<vmem>>, vector<1024x512xbf16>
    %c0_1 = arith.constant 0 : index
    %c0_2 = arith.constant 0 : index
    %c0_3 = arith.constant 0 : index
    %c0_4 = arith.constant 0 : index
    %1 = vector.load %arg2[%c0_1, %c0_2, %c0_3, %c0_4] : memref<1x2x8x1024xbf16, #tpu.memory_space<vmem>>, vector<1x2x8x1024xbf16>
    %2 = vector.shape_cast %1 : vector<1x2x8x1024xbf16> to vector<2x8x1024xbf16>
    %3 = vector.shape_cast %2 : vector<2x8x1024xbf16> to vector<16x1024xbf16>
    %cst = arith.constant dense<0.000000e+00> : vector<16x512xf32>
    %4 = tpu.matmul %3, %0, %cst {dimension_numbers = #tpu.dot_dimension_numbers<[1], [0], [0], [1], [0, 0, 1, 1], [], []>} : vector<16x1024xbf16>, vector<1024x512xbf16>, vector<16x512xf32> -> vector<16x512xf32>
    %cst_5 = arith.constant 0.000000e+00 : f32
    %5 = vector.broadcast %cst_5 : f32 to vector<16x512xf32>
    %6 = arith.maximumf %4, %5 : vector<16x512xf32>
    %7 = vector.shape_cast %6 : vector<16x512xf32> to vector<2x8x512xf32>
    %8 = vector.extract_strided_slice %7 {offsets = [0, 0, 0], sizes = [2, 8, 256], strides = [1, 1, 1]} : vector<2x8x512xf32> to vector<2x8x256xf32>
    %9 = vector.extract_strided_slice %7 {offsets = [0, 0, 256], sizes = [2, 8, 256], strides = [1, 1, 1]} : vector<2x8x512xf32> to vector<2x8x256xf32>
    %c0_6 = arith.constant 0 : index
    %c0_7 = arith.constant 0 : index
    %c0_8 = arith.constant 0 : index
    %c0_9 = arith.constant 0 : index
    %10 = vector.load %arg3[%c0_6, %c0_7, %c0_8, %c0_9] : memref<1x1x8x1024xbf16, #tpu.memory_space<vmem>>, vector<1x1x8x1024xbf16>
    %11 = vector.shape_cast %10 : vector<1x1x8x1024xbf16> to vector<1x8x1024xbf16>
    %c0_10 = arith.constant 0 : index
    %c0_11 = arith.constant 0 : index
    %c0_12 = arith.constant 0 : index
    %c0_13 = arith.constant 0 : index
    %12 = vector.load %arg4[%c0_10, %c0_11, %c0_12, %c0_13] : memref<1x1x8x1024xbf16, #tpu.memory_space<vmem>>, vector<1x1x8x1024xbf16>
    %13 = vector.shape_cast %12 : vector<1x1x8x1024xbf16> to vector<1x8x1024xbf16>
    %14 = tpu.concatenate %11, %13 in 0 : vector<1x8x1024xbf16>, vector<1x8x1024xbf16> -> vector<2x8x1024xbf16>
    %15 = vector.shape_cast %14 : vector<2x8x1024xbf16> to vector<16x1024xbf16>
    %cst_14 = arith.constant dense<0.000000e+00> : vector<16x512xf32>
    %16 = tpu.matmul %15, %0, %cst_14 {dimension_numbers = #tpu.dot_dimension_numbers<[1], [0], [0], [1], [0, 0, 1, 1], [], []>} : vector<16x1024xbf16>, vector<1024x512xbf16>, vector<16x512xf32> -> vector<16x512xf32>
    %cst_15 = arith.constant 0.000000e+00 : f32
    %17 = vector.broadcast %cst_15 : f32 to vector<16x512xf32>
    %18 = arith.maximumf %16, %17 : vector<16x512xf32>
    %19 = vector.shape_cast %18 : vector<16x512xf32> to vector<2x8x512xf32>
    %c0_i32 = arith.constant 0 : i32
    %20 = arith.cmpi eq, %arg1, %c0_i32 : i32
    %21 = vector.extract_strided_slice %8 {offsets = [0, 0, 0], sizes = [1, 8, 256], strides = [1, 1, 1]} : vector<2x8x256xf32> to vector<1x8x256xf32>
    %22 = vector.extract_strided_slice %19 {offsets = [0, 0, 256], sizes = [1, 8, 256], strides = [1, 1, 1]} : vector<2x8x512xf32> to vector<1x8x256xf32>
    %23 = arith.select %20, %21, %22 : vector<1x8x256xf32>
    %c0_i32_16 = arith.constant 0 : i32
    %24 = arith.cmpi eq, %arg1, %c0_i32_16 : i32
    %25 = vector.extract_strided_slice %9 {offsets = [1, 0, 0], sizes = [1, 8, 256], strides = [1, 1, 1]} : vector<2x8x256xf32> to vector<1x8x256xf32>
    %26 = vector.extract_strided_slice %19 {offsets = [1, 0, 0], sizes = [1, 8, 256], strides = [1, 1, 1]} : vector<2x8x512xf32> to vector<1x8x256xf32>
    %27 = arith.select %24, %25, %26 : vector<1x8x256xf32>
    %cst_17 = arith.constant 2.500000e-01 : f32
    %28 = vector.broadcast %cst_17 : f32 to vector<2x8x256xf32>
    %29 = arith.mulf %28, %8 : vector<2x8x256xf32>
    %cst_18 = arith.constant 7.500000e-01 : f32
    %30 = vector.broadcast %cst_18 : f32 to vector<2x8x256xf32>
    %31 = arith.mulf %30, %8 : vector<2x8x256xf32>
    %cst_19 = arith.constant 2.500000e-01 : f32
    %32 = vector.broadcast %cst_19 : f32 to vector<2x8x256xf32>
    %33 = arith.mulf %32, %9 : vector<2x8x256xf32>
    %cst_20 = arith.constant 7.500000e-01 : f32
    %34 = vector.broadcast %cst_20 : f32 to vector<2x8x256xf32>
    %35 = arith.mulf %34, %9 : vector<2x8x256xf32>
    %cst_21 = arith.constant 2.500000e-01 : f32
    %36 = vector.broadcast %cst_21 : f32 to vector<1x8x256xf32>
    %37 = arith.mulf %36, %23 : vector<1x8x256xf32>
    %38 = vector.extract_strided_slice %33 {offsets = [0, 0, 0], sizes = [1, 8, 256], strides = [1, 1, 1]} : vector<2x8x256xf32> to vector<1x8x256xf32>
    %39 = tpu.concatenate %37, %38 in 0 : vector<1x8x256xf32>, vector<1x8x256xf32> -> vector<2x8x256xf32>
    %40 = vector.extract_strided_slice %29 {offsets = [1, 0, 0], sizes = [1, 8, 256], strides = [1, 1, 1]} : vector<2x8x256xf32> to vector<1x8x256xf32>
    %cst_22 = arith.constant 2.500000e-01 : f32
    %41 = vector.broadcast %cst_22 : f32 to vector<1x8x256xf32>
    %42 = arith.mulf %41, %27 : vector<1x8x256xf32>
    %43 = tpu.concatenate %40, %42 in 0 : vector<1x8x256xf32>, vector<1x8x256xf32> -> vector<2x8x256xf32>
    %44 = tpu.iota {dimensions = array<i32: 1>} : vector<1x8x1xi32>
    %45 = arith.addf %39, %31 : vector<2x8x256xf32>
    %46 = arith.addf %31, %33 : vector<2x8x256xf32>
    %47 = tpu.concatenate %45, %46 in 2 : vector<2x8x256xf32>, vector<2x8x256xf32> -> vector<2x8x512xf32>
    %cst_23 = arith.constant 7.500000e-01 : f32
    %48 = vector.broadcast %cst_23 : f32 to vector<2x8x512xf32>
    %49 = arith.mulf %48, %47 : vector<2x8x512xf32>
    %c0_i32_24 = arith.constant 0 : i32
    %50 = vector.broadcast %c0_i32_24 : i32 to vector<1x8x1xi32>
    %51 = arith.cmpi eq, %44, %50 : vector<1x8x1xi32>
    %c1_i32 = arith.constant 1 : i32
    %52 = tpu.dynamic_rotate %47 by %c1_i32 dim 1 : vector<2x8x512xf32>, i32 -> vector<2x8x512xf32>
    %53 = vector.shape_cast %51 : vector<1x8x1xi1> to vector<1x8x1xi1>
    %54 = vector.broadcast %53 : vector<1x8x1xi1> to vector<2x8x512xi1>
    %55 = arith.select %54, %47, %52 : vector<2x8x512xi1>, vector<2x8x512xf32>
    %c7_i32 = arith.constant 7 : i32
    %56 = vector.broadcast %c7_i32 : i32 to vector<1x8x1xi32>
    %57 = arith.cmpi eq, %44, %56 : vector<1x8x1xi32>
    %c7_i32_25 = arith.constant 7 : i32
    %58 = tpu.dynamic_rotate %47 by %c7_i32_25 dim 1 : vector<2x8x512xf32>, i32 -> vector<2x8x512xf32>
    %59 = vector.shape_cast %57 : vector<1x8x1xi1> to vector<1x8x1xi1>
    %60 = vector.broadcast %59 : vector<1x8x1xi1> to vector<2x8x512xi1>
    %61 = arith.select %60, %47, %58 : vector<2x8x512xi1>, vector<2x8x512xf32>
    %cst_26 = arith.constant 2.500000e-01 : f32
    %62 = vector.broadcast %cst_26 : f32 to vector<2x8x512xf32>
    %63 = arith.mulf %62, %55 : vector<2x8x512xf32>
    %64 = arith.addf %63, %49 : vector<2x8x512xf32>
    %cst_27 = arith.constant 2.500000e-01 : f32
    %65 = vector.broadcast %cst_27 : f32 to vector<2x8x512xf32>
    %66 = arith.mulf %65, %61 : vector<2x8x512xf32>
    %67 = arith.addf %49, %66 : vector<2x8x512xf32>
    %68 = tpu.concatenate %64, %67 in 2 : vector<2x8x512xf32>, vector<2x8x512xf32> -> vector<2x8x1024xf32>
    %c0_28 = arith.constant 0 : index
    %c0_29 = arith.constant 0 : index
    %c0_30 = arith.constant 0 : index
    %c0_31 = arith.constant 0 : index
    %c0_32 = arith.constant 0 : index
    %69 = vector.load %arg6[%c0_28, %c0_29, %c0_30, %c0_31, %c0_32] : memref<1x2x2x8x1024xbf16, #tpu.memory_space<vmem>>, vector<1x2x1x8x1024xbf16>
    %70 = vector.shape_cast %69 : vector<1x2x1x8x1024xbf16> to vector<2x8x1024xbf16>
    %71 = arith.extf %70 : vector<2x8x1024xbf16> to vector<2x8x1024xf32>
    %72 = arith.addf %68, %71 : vector<2x8x1024xf32>
    %73 = arith.truncf %72 : vector<2x8x1024xf32> to vector<2x8x1024xbf16>
    %c0_33 = arith.constant 0 : index
    %c0_34 = arith.constant 0 : index
    %c0_35 = arith.constant 0 : index
    %c0_36 = arith.constant 0 : index
    %c0_37 = arith.constant 0 : index
    %74 = vector.load %arg7[%c0_33, %c0_34, %c0_35, %c0_36, %c0_37] : memref<1x2x2x8x1024xbf16, #tpu.memory_space<vmem>>, vector<1x2x1x8x1024xbf16>
    %75 = vector.shape_cast %74 : vector<1x2x1x8x1024xbf16> to vector<2x8x1024xbf16>
    %76 = vector.shape_cast %73 : vector<2x8x1024xbf16> to vector<1x2x1x8x1024xbf16>
    tpu.vector_store %arg7[%c0_33, %c0_34, %c0_35, %c0_36, %c0_37], %76 {strides = array<i32>} : memref<1x2x2x8x1024xbf16, #tpu.memory_space<vmem>>, vector<1x2x1x8x1024xbf16>,
    %77 = arith.addf %29, %35 : vector<2x8x256xf32>
    %78 = arith.addf %35, %43 : vector<2x8x256xf32>
    %79 = tpu.concatenate %77, %78 in 2 : vector<2x8x256xf32>, vector<2x8x256xf32> -> vector<2x8x512xf32>
    %cst_38 = arith.constant 7.500000e-01 : f32
    %80 = vector.broadcast %cst_38 : f32 to vector<2x8x512xf32>
    %81 = arith.mulf %80, %79 : vector<2x8x512xf32>
    %c0_i32_39 = arith.constant 0 : i32
    %82 = vector.broadcast %c0_i32_39 : i32 to vector<1x8x1xi32>
    %83 = arith.cmpi eq, %44, %82 : vector<1x8x1xi32>
    %c1_i32_40 = arith.constant 1 : i32
    %84 = tpu.dynamic_rotate %79 by %c1_i32_40 dim 1 : vector<2x8x512xf32>, i32 -> vector<2x8x512xf32>
    %85 = vector.shape_cast %83 : vector<1x8x1xi1> to vector<1x8x1xi1>
    %86 = vector.broadcast %85 : vector<1x8x1xi1> to vector<2x8x512xi1>
    %87 = arith.select %86, %79, %84 : vector<2x8x512xi1>, vector<2x8x512xf32>
    %c7_i32_41 = arith.constant 7 : i32
    %88 = vector.broadcast %c7_i32_41 : i32 to vector<1x8x1xi32>
    %89 = arith.cmpi eq, %44, %88 : vector<1x8x1xi32>
    %c7_i32_42 = arith.constant 7 : i32
    %90 = tpu.dynamic_rotate %79 by %c7_i32_42 dim 1 : vector<2x8x512xf32>, i32 -> vector<2x8x512xf32>
    %91 = vector.shape_cast %89 : vector<1x8x1xi1> to vector<1x8x1xi1>
    %92 = vector.broadcast %91 : vector<1x8x1xi1> to vector<2x8x512xi1>
    %93 = arith.select %92, %79, %90 : vector<2x8x512xi1>, vector<2x8x512xf32>
    %cst_43 = arith.constant 2.500000e-01 : f32
    %94 = vector.broadcast %cst_43 : f32 to vector<2x8x512xf32>
    %95 = arith.mulf %94, %87 : vector<2x8x512xf32>
    %96 = arith.addf %95, %81 : vector<2x8x512xf32>
    %cst_44 = arith.constant 2.500000e-01 : f32
    %97 = vector.broadcast %cst_44 : f32 to vector<2x8x512xf32>
    %98 = arith.mulf %97, %93 : vector<2x8x512xf32>
    %99 = arith.addf %81, %98 : vector<2x8x512xf32>
    %100 = tpu.concatenate %96, %99 in 2 : vector<2x8x512xf32>, vector<2x8x512xf32> -> vector<2x8x1024xf32>
    %c0_45 = arith.constant 0 : index
    %c0_46 = arith.constant 0 : index
    %c1 = arith.constant 1 : index
    %c0_47 = arith.constant 0 : index
    %c0_48 = arith.constant 0 : index
    %101 = vector.load %arg6[%c0_45, %c0_46, %c1, %c0_47, %c0_48] : memref<1x2x2x8x1024xbf16, #tpu.memory_space<vmem>>, vector<1x2x1x8x1024xbf16>
    %102 = vector.shape_cast %101 : vector<1x2x1x8x1024xbf16> to vector<2x8x1024xbf16>
    %103 = arith.extf %102 : vector<2x8x1024xbf16> to vector<2x8x1024xf32>
    %104 = arith.addf %100, %103 : vector<2x8x1024xf32>
    %105 = arith.truncf %104 : vector<2x8x1024xf32> to vector<2x8x1024xbf16>
    %c0_49 = arith.constant 0 : index
    %c0_50 = arith.constant 0 : index
    %c1_51 = arith.constant 1 : index
    %c0_52 = arith.constant 0 : index
    %c0_53 = arith.constant 0 : index
    %106 = vector.load %arg7[%c0_49, %c0_50, %c1_51, %c0_52, %c0_53] : memref<1x2x2x8x1024xbf16, #tpu.memory_space<vmem>>, vector<1x2x1x8x1024xbf16>
    %107 = vector.shape_cast %106 : vector<1x2x1x8x1024xbf16> to vector<2x8x1024xbf16>
    %108 = vector.shape_cast %105 : vector<2x8x1024xbf16> to vector<1x2x1x8x1024xbf16>
    tpu.vector_store %arg7[%c0_49, %c0_50, %c1_51, %c0_52, %c0_53], %108 {strides = array<i32>} : memref<1x2x2x8x1024xbf16, #tpu.memory_space<vmem>>, vector<1x2x1x8x1024xbf16>,
    return
  }
  func.func @transform_0(%arg0: i32, %arg1: i32) -> (i32, i32, i32, i32) {
    %c0_i32 = arith.constant 0 : i32
    %c0_i32_0 = arith.constant 0 : i32
    %c0_i32_1 = arith.constant 0 : i32
    return %arg0, %arg1, %c0_i32, %c0_i32_0 : i32, i32, i32, i32
  }
  func.func @transform_1(%arg0: i32, %arg1: i32) -> (i32, i32, i32, i32) {
    %c2_i32 = arith.constant 2 : i32
    %0 = arith.muli %arg1, %c2_i32 : i32
    %c1_i32 = arith.constant 1 : i32
    %1 = arith.subi %0, %c1_i32 : i32
    %c0_i32 = arith.constant 0 : i32
    %2 = arith.maxsi %1, %c0_i32 : i32
    %c0_i32_0 = arith.constant 0 : i32
    %c0_i32_1 = arith.constant 0 : i32
    %c0_i32_2 = arith.constant 0 : i32
    return %arg0, %2, %c0_i32_0, %c0_i32_1 : i32, i32, i32, i32
  }
  func.func @transform_2(%arg0: i32, %arg1: i32) -> (i32, i32, i32, i32) {
    %c1_i32 = arith.constant 1 : i32
    %0 = arith.addi %arg1, %c1_i32 : i32
    %c2_i32 = arith.constant 2 : i32
    %1 = arith.muli %0, %c2_i32 : i32
    %c1_i32_0 = arith.constant 1 : i32
    %2 = arith.minsi %1, %c1_i32_0 : i32
    %c0_i32 = arith.constant 0 : i32
    %c0_i32_1 = arith.constant 0 : i32
    %c0_i32_2 = arith.constant 0 : i32
    return %arg0, %2, %c0_i32, %c0_i32_1 : i32, i32, i32, i32
  }
  func.func @transform_3(%arg0: i32, %arg1: i32) -> (i32, i32) {
    %c0_i32 = arith.constant 0 : i32
    %c0_i32_0 = arith.constant 0 : i32
    %c0_i32_1 = arith.constant 0 : i32
    return %c0_i32, %c0_i32_0 : i32, i32
  }
  func.func @transform_4(%arg0: i32, %arg1: i32) -> (i32, i32, i32, i32, i32) {
    %c0_i32 = arith.constant 0 : i32
    %c0_i32_0 = arith.constant 0 : i32
    %c0_i32_1 = arith.constant 0 : i32
    %c0_i32_2 = arith.constant 0 : i32
    return %arg0, %arg1, %c0_i32, %c0_i32_0, %c0_i32_1 : i32, i32, i32, i32, i32
  }
  func.func @transform_5(%arg0: i32, %arg1: i32) -> (i32, i32, i32, i32, i32) {
    %c0_i32 = arith.constant 0 : i32
    %c0_i32_0 = arith.constant 0 : i32
    %c0_i32_1 = arith.constant 0 : i32
    %c0_i32_2 = arith.constant 0 : i32
    return %arg0, %arg1, %c0_i32, %c0_i32_0, %c0_i32_1 : i32, i32, i32, i32, i32
  }
}

</mosaic_0001>

<llo_original>
// kernel: tpu_custom_call.1
$region0: #{tpu_custom_call.1}
  #allocation0 [shape = 'u32[]', space=smem, size = 0x4, offset = 0x4, fixed_abs, tag = 'smem constant byte address 0x4 - core index']
  #allocation1 [shape = 'u32[144,128]{1,0:T(1,128)}', space=vmem, size = 0x12000, scoped, tag = 'internal scratch']
  %s0 = inlined_call_operand.hbm [shape: bf16[2,2,8,1024], index: 0, kind: input, shape index: {}]
  %s1 = inlined_call_operand.hbm [shape: bf16[2,2,8,1024], index: 1, kind: input, shape index: {}]
  %s2 = inlined_call_operand.hbm [shape: bf16[2,2,8,1024], index: 2, kind: input, shape index: {}]
  %s3 = inlined_call_operand.hbm [shape: bf16[1024,512], index: 3, kind: input, shape index: {}]
  %s4 = inlined_call_operand.hbm [shape: bf16[2,2,2,8,1024], index: 4, kind: input, shape index: {}]
  %s5 = inlined_call_operand.hbm [shape: bf16[2,2,2,8,1024], index: 5, kind: output, shape index: {}]
  %s6 = sld [smem:[#allocation0]]
  $region73: #{tpu_custom_call.1} parent=0
    _
  %s8 = ssub.s32 1, %s6
  %s9 = scalar_select 0, %s8, %s6
  $region1: #{tpu_custom_call.1} parent=0
    #allocation2 [shape = 'u8[65536]{0}', space=vmem, size = 0x10000, scoped, tag = 'input window, operand 0']
    #allocation3 [shape = 's32[2]{0}', space=sflag, size = 0x8, scoped, tag = 'scoped memory for tpu_custom_call.1']
    #allocation4 [shape = 's32[2]{0}', space=sflag, size = 0x8, scoped, tag = 'scoped memory for tpu_custom_call.1']
    #allocation5 [shape = 'u8[32768]{0}', space=vmem, size = 0x8000, scoped, tag = 'input window, operand 1']
    #allocation6 [shape = 's32[2]{0}', space=sflag, size = 0x8, scoped, tag = 'scoped memory for tpu_custom_call.1']
    #allocation7 [shape = 'u8[32768]{0}', space=vmem, size = 0x8000, scoped, tag = 'input window, operand 2']
    #allocation8 [shape = 'u8[1048576]{0}', space=vmem, size = 0x100000, scoped, tag = 'input window, operand 3, single buffered']
    #allocation9 [shape = 's32[1]{0}', space=sflag, size = 0x4, scoped, tag = 'scoped memory for tpu_custom_call.1']
    #allocation10 [shape = 'u8[131072]{0}', space=vmem, size = 0x20000, scoped, tag = 'input window, operand 4']
    #allocation11 [shape = 'u8[131072]{0}', space=vmem, size = 0x20000, scoped, tag = 'output window, operand 0']
    %10 = vsyncpa [#allocation3], 0
    %s11 = scalar_lea.sflag [#allocation3], 1
    %12 = vsyncpa %s11, 0
    %13 = vsyncpa [#allocation6], 0
    %s14 = scalar_lea.sflag [#allocation6], 1
    %15 = vsyncpa %s14, 0
    %16 = vsyncpa [#allocation9], 0
    %17 = vsyncpa [#allocation4], 0
    %s18 = scalar_lea.sflag [#allocation4], 1
    %19 = vsyncpa %s18, 0
    loop: start=0, step=1, limit=4
    $region2: #{tpu_custom_call.1} parent=1 // loop_pre_header
      _
    $region3: #{tpu_custom_call.1} parent=1 // loop_header
      %s21 = sphi 0, %s25
      %p22 = scmp.ge.s32.totalorder %s21, 4
      %s28 = sphi 0, %s40
      %s29 = sphi 0, %s36
      %s30 = sphi 0, %s28
      %s31 = sphi 0, %s29
      %s32 = sphi 0, %s30
      %s33 = sphi 0, %s31
      %s45 = sphi 0, %s47
      %s48 = sphi 0, %s45
      %s49 = sphi 0, %s48
      %s65 = sphi 0, %s49
      %s81 = sphi 0, %s83
      %s84 = sphi 0, %s81
      %s85 = sphi 0, %s84
      %s101 = sphi 0, %s85
      %s117 = sphi 0, %s119
      %s120 = sphi 0, %s117
      %s121 = sphi 0, %s120
      %s137 = sphi 0, %s121
      %s141 = sphi 0, %s141
      %s143 = sphi 0, %s141
      %s144 = sphi 0, %s143
      %s158 = sphi 0, %s144
      %s166 = sphi 0, %s168
      %s169 = sphi 0, %s166
      %s170 = sphi 0, %s169
      %s186 = sphi 0, %s170
      %s194 = sphi 0, %s196
      %s197 = sphi 0, %s194
      %s198 = sphi 0, %s197
      %s214 = sphi 0, %s198
    $region4: #{tpu_custom_call.1} parent=1 // loop_header_branch
      %24 = sbr.rel (%p22) target = $region8
    $region5: #{tpu_custom_call.1} parent=1 // loop_body
      %s26 = ssub.s32 %s21, 1
      %s27 = ssub.s32 %s21, 2
      %s34 = sadd.s32 1, %s29
      %p35 = scmp.ge.s32.totalorder %s34, 1
      %s36 = scalar_select %p35, 0, %s34
      %s37 = sadd.s32 1, %s28
      %s38 = scalar_select %p35, %s37, %s28
      %p39 = scmp.ge.s32.totalorder %s38, 2
      %s40 = scalar_select %p39, 0, %s38
      %s41 = ssub.s32 %s28, %s40
      %s42 = ssub.s32 %s29, %s36
      %s43 = sor.u32 %s41, %s42
      %p44 = scmp.eq.s32.totalorder %s43, 0
      %s46 = sadd.s32 %s45, 1
      %s47 = scalar_select %p44, %s45, %s46
      %p50 = pneg %p44
      %p51 = scmp.eq.s32.totalorder %s21, 1
      %p52 = por %p50, %p51
      %p53 = scmp.ne.s32.totalorder %s45, %s48
      %p54 = scmp.eq.s32.totalorder %s21, 0
      %p55 = por %p53, %p54
      %p56 = scmp.ne.s32.totalorder %s45, %s48
      %p57 = scmp.eq.s32.totalorder %s26, 1
      %p58 = por %p56, %p57
      %p59 = scmp.ne.s32.totalorder %s48, %s49
      %p60 = scmp.eq.s32.totalorder %s26, 0
      %p61 = por %p59, %p60
      %p62 = scmp.ne.s32.totalorder %s48, %s49
      %p63 = scmp.eq.s32.totalorder %s27, 1
      %p64 = por %p62, %p63
      %p66 = scmp.ne.s32.totalorder %s49, %s65
      %p67 = scmp.eq.s32.totalorder %s27, 0
      %p68 = por %p66, %p67
      %s69 = smul.u32 %s29, 2
      %s70 = ssub.s32 %s69, 1
      %p71 = scmp.gt.s32.totalorder %s70, 0
      %s72 = scalar_select %p71, %s70, 0
      %s73 = smul.u32 %s36, 2
      %s74 = ssub.s32 %s73, 1
      %p75 = scmp.gt.s32.totalorder %s74, 0
      %s76 = scalar_select %p75, %s74, 0
      %s77 = ssub.s32 %s28, %s40
      %s78 = ssub.s32 %s72, %s76
      %s79 = sor.u32 %s77, %s78
      %p80 = scmp.eq.s32.totalorder %s79, 0
      %s82 = sadd.s32 %s81, 1
      %s83 = scalar_select %p80, %s81, %s82
      %p86 = pneg %p80
      %p87 = scmp.eq.s32.totalorder %s21, 1
      %p88 = por %p86, %p87
      %p89 = scmp.ne.s32.totalorder %s81, %s84
      %p90 = scmp.eq.s32.totalorder %s21, 0
      %p91 = por %p89, %p90
      %p92 = scmp.ne.s32.totalorder %s81, %s84
      %p93 = scmp.eq.s32.totalorder %s26, 1
      %p94 = por %p92, %p93
      %p95 = scmp.ne.s32.totalorder %s84, %s85
      %p96 = scmp.eq.s32.totalorder %s26, 0
      %p97 = por %p95, %p96
      %p98 = scmp.ne.s32.totalorder %s84, %s85
      %p99 = scmp.eq.s32.totalorder %s27, 1
      %p100 = por %p98, %p99
      %p102 = scmp.ne.s32.totalorder %s85, %s101
      %p103 = scmp.eq.s32.totalorder %s27, 0
      %p104 = por %p102, %p103
      %s105 = sadd.s32 %s29, 1
      %s106 = smul.u32 %s105, 2
      %p107 = scmp.lt.s32.totalorder %s106, 1
      %s108 = scalar_select %p107, %s106, 1
      %s109 = sadd.s32 %s36, 1
      %s110 = smul.u32 %s109, 2
      %p111 = scmp.lt.s32.totalorder %s110, 1
      %s112 = scalar_select %p111, %s110, 1
      %s113 = ssub.s32 %s28, %s40
      %s114 = ssub.s32 %s108, %s112
      %s115 = sor.u32 %s113, %s114
      %p116 = scmp.eq.s32.totalorder %s115, 0
      %s118 = sadd.s32 %s117, 1
      %s119 = scalar_select %p116, %s117, %s118
      %p122 = pneg %p116
      %p123 = scmp.eq.s32.totalorder %s21, 1
      %p124 = por %p122, %p123
      %p125 = scmp.ne.s32.totalorder %s117, %s120
      %p126 = scmp.eq.s32.totalorder %s21, 0
      %p127 = por %p125, %p126
      %p128 = scmp.ne.s32.totalorder %s117, %s120
      %p129 = scmp.eq.s32.totalorder %s26, 1
      %p130 = por %p128, %p129
      %p131 = scmp.ne.s32.totalorder %s120, %s121
      %p132 = scmp.eq.s32.totalorder %s26, 0
      %p133 = por %p131, %p132
      %p134 = scmp.ne.s32.totalorder %s120, %s121
      %p135 = scmp.eq.s32.totalorder %s27, 1
      %p136 = por %p134, %p135
      %p138 = scmp.ne.s32.totalorder %s121, %s137
      %p139 = scmp.eq.s32.totalorder %s27, 0
      %p140 = por %p138, %p139
      %s142 = sadd.s32 %s141, 1
      %p145 = scmp.eq.s32.totalorder %s21, 1
      %p146 = scmp.ne.s32.totalorder %s141, %s143
      %p147 = scmp.eq.s32.totalorder %s21, 0
      %p148 = por %p146, %p147
      %p149 = scmp.ne.s32.totalorder %s141, %s143
      %p150 = scmp.eq.s32.totalorder %s26, 1
      %p151 = por %p149, %p150
      %p152 = scmp.ne.s32.totalorder %s143, %s144
      %p153 = scmp.eq.s32.totalorder %s26, 0
      %p154 = por %p152, %p153
      %p155 = scmp.ne.s32.totalorder %s143, %s144
      %p156 = scmp.eq.s32.totalorder %s27, 1
      %p157 = por %p155, %p156
      %p159 = scmp.ne.s32.totalorder %s144, %s158
      %p160 = scmp.eq.s32.totalorder %s27, 0
      %p161 = por %p159, %p160
      %s162 = ssub.s32 %s28, %s40
      %s163 = ssub.s32 %s29, %s36
      %s164 = sor.u32 %s162, %s163
      %p165 = scmp.eq.s32.totalorder %s164, 0
      %s167 = sadd.s32 %s166, 1
      %s168 = scalar_select %p165, %s166, %s167
      %p171 = pneg %p165
      %p172 = scmp.eq.s32.totalorder %s21, 1
      %p173 = por %p171, %p172
      %p174 = scmp.ne.s32.totalorder %s166, %s169
      %p175 = scmp.eq.s32.totalorder %s21, 0
      %p176 = por %p174, %p175
      %p177 = scmp.ne.s32.totalorder %s166, %s169
      %p178 = scmp.eq.s32.totalorder %s26, 1
      %p179 = por %p177, %p178
      %p180 = scmp.ne.s32.totalorder %s169, %s170
      %p181 = scmp.eq.s32.totalorder %s26, 0
      %p182 = por %p180, %p181
      %p183 = scmp.ne.s32.totalorder %s169, %s170
      %p184 = scmp.eq.s32.totalorder %s27, 1
      %p185 = por %p183, %p184
      %p187 = scmp.ne.s32.totalorder %s170, %s186
      %p188 = scmp.eq.s32.totalorder %s27, 0
      %p189 = por %p187, %p188
      %s190 = ssub.s32 %s28, %s40
      %s191 = ssub.s32 %s29, %s36
      %s192 = sor.u32 %s190, %s191
      %p193 = scmp.eq.s32.totalorder %s192, 0
      %s195 = sadd.s32 %s194, 1
      %s196 = scalar_select %p193, %s194, %s195
      %p199 = pneg %p193
      %p200 = scmp.eq.s32.totalorder %s21, 1
      %p201 = por %p199, %p200
      %p202 = scmp.ne.s32.totalorder %s194, %s197
      %p203 = scmp.eq.s32.totalorder %s21, 0
      %p204 = por %p202, %p203
      %p205 = scmp.ne.s32.totalorder %s194, %s197
      %p206 = scmp.eq.s32.totalorder %s26, 1
      %p207 = por %p205, %p206
      %p208 = scmp.ne.s32.totalorder %s197, %s198
      %p209 = scmp.eq.s32.totalorder %s26, 0
      %p210 = por %p208, %p209
      %p211 = scmp.ne.s32.totalorder %s197, %s198
      %p212 = scmp.eq.s32.totalorder %s27, 1
      %p213 = por %p211, %p212
      %p215 = scmp.ne.s32.totalorder %s198, %s214
      %p216 = scmp.eq.s32.totalorder %s27, 0
      %p217 = por %p215, %p216
      %p218 = scmp.le.s32.totalorder 1, %s21
      %p219 = scmp.lt.s32.totalorder %s21, 3
      %p220 = pnand %p218, %p219
      %p221 = pneg %p220
      // Predicated region
      $region9: #{tpu_custom_call.1} parent=5 // pred_check
        _
      $region10: #{tpu_custom_call.1} parent=5 // pred_check_branch
        %223 = sbr.rel (%p220) target = $region12
      $region11: #{tpu_custom_call.1} parent=5 // pred_region
        %s224 = ssub.s32 %s21, 1
        // Predicated region
        $region13: #{tpu_custom_call.1} parent=11 // pred_check
          %p225 = pneg %p154
        $region14: #{tpu_custom_call.1} parent=11 // pred_check_branch
          %227 = sbr.rel (%p225) target = $region16
        $region15: #{tpu_custom_call.1} parent=11 // pred_region
          %s229 = ssub.s32 32768, 32768
          %230 = vsyncadd [#allocation9], %s229
          %s231 = sshll.u32 [#allocation8], 4
          %s232 = int_to_ptr.vmem [resolvable:$true] %s231
          %237 = dma.hbm_to_vmem [thread:$0]  %s3, 32768, %s232, [#allocation9], 256, 256, 16
        $region16: #{tpu_custom_call.1} parent=11 // pred_fallthru
          _
      $region12: #{tpu_custom_call.1} parent=5 // pred_fallthru
        _
      %p238 = scmp.lt.s32.totalorder %s21, 2
      // Predicated region
      $region17: #{tpu_custom_call.1} parent=5 // pred_check
        %p239 = pneg %p238
      $region18: #{tpu_custom_call.1} parent=5 // pred_check_branch
        %241 = sbr.rel (%p239) target = $region20
      $region19: #{tpu_custom_call.1} parent=5 // pred_region
        // Predicated region
        $region21: #{tpu_custom_call.1} parent=19 // pred_check
          %p242 = pneg %p55
        $region22: #{tpu_custom_call.1} parent=19 // pred_check_branch
          %244 = sbr.rel (%p242) target = $region24
        $region23: #{tpu_custom_call.1} parent=19 // pred_region
          %s245 = sand.u32 %s21, 1
          %s246 = scalar_lea.sflag [#allocation3], %s245
          %s247 = sand.u32 %s45, 1
          %s248 = smul.addr %s247, 64
          %s249 = scalar_lea.vmem [#allocation2], %s248
          %s250 = smul.u32 2, %s29
          %s252 = ssub.s32 1024, 1024
          %253 = vsyncadd %s246, %s252
          %s254 = smul.addr %s250, 8
          %s255 = smul.addr %s28, 16
          %s256 = sadd.s32 %s254, %s255
          %s257 = smul.addr %s256, 64
          %s258 = scalar_lea.hbm %s0, %s257
          %s259 = sshll.u32 %s249, 4
          %s260 = int_to_ptr.vmem [resolvable:$true] %s259
          %265 = dma.hbm_to_vmem [thread:$0]  %s258, 1024, %s260, %s246, 512, 512, 32
        $region24: #{tpu_custom_call.1} parent=19 // pred_fallthru
          _
        // Predicated region
        $region25: #{tpu_custom_call.1} parent=19 // pred_check
          %p266 = pneg %p91
        $region26: #{tpu_custom_call.1} parent=19 // pred_check_branch
          %268 = sbr.rel (%p266) target = $region28
        $region27: #{tpu_custom_call.1} parent=19 // pred_region
          %s269 = sand.u32 %s21, 1
          %s270 = scalar_lea.sflag [#allocation6], %s269
          %s271 = sand.u32 %s81, 1
          %s272 = smul.addr %s271, 32
          %s273 = scalar_lea.vmem [#allocation5], %s272
          %s274 = smul.u32 %s29, 2
          %s275 = ssub.s32 %s274, 1
          %p276 = scmp.gt.s32.totalorder %s275, 0
          %s277 = scalar_select %p276, %s275, 0
          %s279 = ssub.s32 512, 512
          %280 = vsyncadd %s270, %s279
          %s281 = smul.addr %s277, 8
          %s282 = smul.addr %s28, 16
          %s283 = sadd.s32 %s281, %s282
          %s284 = smul.addr %s283, 64
          %s285 = scalar_lea.hbm %s1, %s284
          %s287 = sshll.u32 %s273, 4
          %s288 = int_to_ptr.vmem [resolvable:$true] %s287
          %290 = dma.hbm_to_vmem [thread:$0]  %s285, 512, %s288, %s270
        $region28: #{tpu_custom_call.1} parent=19 // pred_fallthru
          _
        // Predicated region
        $region29: #{tpu_custom_call.1} parent=19 // pred_check
          %p291 = pneg %p127
        $region30: #{tpu_custom_call.1} parent=19 // pred_check_branch
          %293 = sbr.rel (%p291) target = $region32
        $region31: #{tpu_custom_call.1} parent=19 // pred_region
          %s294 = sand.u32 %s21, 1
          %s295 = scalar_lea.sflag [#allocation6], %s294
          %s296 = sand.u32 %s117, 1
          %s297 = smul.addr %s296, 32
          %s298 = scalar_lea.vmem [#allocation7], %s297
          %s299 = sadd.s32 %s29, 1
          %s300 = smul.u32 %s299, 2
          %p301 = scmp.lt.s32.totalorder %s300, 1
          %s302 = scalar_select %p301, %s300, 1
          %s304 = ssub.s32 512, 512
          %305 = vsyncadd %s295, %s304
          %s306 = smul.addr %s302, 8
          %s307 = smul.addr %s28, 16
          %s308 = sadd.s32 %s306, %s307
          %s309 = smul.addr %s308, 64
          %s310 = scalar_lea.hbm %s2, %s309
          %s312 = sshll.u32 %s298, 4
          %s313 = int_to_ptr.vmem [resolvable:$true] %s312
          %315 = dma.hbm_to_vmem [thread:$0]  %s310, 512, %s313, %s295
        $region32: #{tpu_custom_call.1} parent=19 // pred_fallthru
          _
        // Predicated region
        $region33: #{tpu_custom_call.1} parent=19 // pred_check
          %p316 = pneg %p176
        $region34: #{tpu_custom_call.1} parent=19 // pred_check_branch
          %318 = sbr.rel (%p316) target = $region36
        $region35: #{tpu_custom_call.1} parent=19 // pred_region
          %s319 = sand.u32 %s21, 1
          %s320 = scalar_lea.sflag [#allocation3], %s319
          %s321 = sand.u32 %s166, 1
          %s322 = smul.addr %s321, 128
          %s323 = scalar_lea.vmem [#allocation10], %s322
          %s324 = smul.u32 2, %s29
          %s326 = ssub.s32 2048, 2048
          %327 = vsyncadd %s320, %s326
          %s328 = smul.addr %s324, 16
          %s329 = smul.addr %s28, 32
          %s330 = sadd.s32 %s328, %s329
          %s331 = smul.addr %s330, 64
          %s332 = scalar_lea.hbm %s4, %s331
          %s333 = sshll.u32 %s323, 4
          %s334 = int_to_ptr.vmem [resolvable:$true] %s333
          %339 = dma.hbm_to_vmem [thread:$0]  %s332, 2048, %s334, %s320, 512, 512, 32
        $region36: #{tpu_custom_call.1} parent=19 // pred_fallthru
          _
      $region20: #{tpu_custom_call.1} parent=5 // pred_fallthru
        _
      %p340 = scmp.le.s32.totalorder 1, %s21
      %p341 = scmp.lt.s32.totalorder %s21, 3
      %p342 = pnand %p340, %p341
      %p343 = pneg %p342
      // Predicated region
      $region37: #{tpu_custom_call.1} parent=5 // pred_check
        _
      $region38: #{tpu_custom_call.1} parent=5 // pred_check_branch
        %345 = sbr.rel (%p342) target = $region40
      $region39: #{tpu_custom_call.1} parent=5 // pred_region
        %s346 = ssub.s32 %s21, 1
        %s347 = sand.u32 %s26, 1
        %s348 = scalar_lea.sflag [#allocation3], %s347
        %s349 = sand.u32 %s48, 1
        %s350 = smul.addr %s349, 64
        %s351 = scalar_lea.vmem [#allocation2], %s350
        // Predicated region
        $region41: #{tpu_custom_call.1} parent=39 // pred_check
          %p352 = pneg %p61
        $region42: #{tpu_custom_call.1} parent=39 // pred_check_branch
          %354 = sbr.rel (%p352) target = $region44
        $region43: #{tpu_custom_call.1} parent=39 // pred_region
          %355 = dma.done %s348, 1024
        $region44: #{tpu_custom_call.1} parent=39 // pred_fallthru
          _
        %s356 = sand.u32 %s26, 1
        %s357 = scalar_lea.sflag [#allocation6], %s356
        %s358 = sand.u32 %s84, 1
        %s359 = smul.addr %s358, 32
        %s360 = scalar_lea.vmem [#allocation5], %s359
        // Predicated region
        $region45: #{tpu_custom_call.1} parent=39 // pred_check
          %p361 = pneg %p97
        $region46: #{tpu_custom_call.1} parent=39 // pred_check_branch
          %363 = sbr.rel (%p361) target = $region48
        $region47: #{tpu_custom_call.1} parent=39 // pred_region
          %364 = dma.done %s357, 512
        $region48: #{tpu_custom_call.1} parent=39 // pred_fallthru
          _
        %s365 = sand.u32 %s26, 1
        %s366 = scalar_lea.sflag [#allocation6], %s365
        %s367 = sand.u32 %s120, 1
        %s368 = smul.addr %s367, 32
        %s369 = scalar_lea.vmem [#allocation7], %s368
        // Predicated region
        $region49: #{tpu_custom_call.1} parent=39 // pred_check
          %p370 = pneg %p133
        $region50: #{tpu_custom_call.1} parent=39 // pred_check_branch
          %372 = sbr.rel (%p370) target = $region52
        $region51: #{tpu_custom_call.1} parent=39 // pred_region
          %373 = dma.done %s366, 512
        $region52: #{tpu_custom_call.1} parent=39 // pred_fallthru
          _
        // Predicated region
        $region53: #{tpu_custom_call.1} parent=39 // pred_check
          %p374 = pneg %p154
        $region54: #{tpu_custom_call.1} parent=39 // pred_check_branch
          %376 = sbr.rel (%p374) target = $region56
        $region55: #{tpu_custom_call.1} parent=39 // pred_region
          %377 = dma.done [#allocation9], 32768
        $region56: #{tpu_custom_call.1} parent=39 // pred_fallthru
          _
        %s378 = sand.u32 %s26, 1
        %s379 = scalar_lea.sflag [#allocation3], %s378
        %s380 = sand.u32 %s169, 1
        %s381 = smul.addr %s380, 128
        %s382 = scalar_lea.vmem [#allocation10], %s381
        // Predicated region
        $region57: #{tpu_custom_call.1} parent=39 // pred_check
          %p383 = pneg %p182
        $region58: #{tpu_custom_call.1} parent=39 // pred_check_branch
          %385 = sbr.rel (%p383) target = $region60
        $region59: #{tpu_custom_call.1} parent=39 // pred_region
          %386 = dma.done %s379, 2048
        $region60: #{tpu_custom_call.1} parent=39 // pred_fallthru
          _
        %s387 = sand.u32 %s26, 1
        %s388 = scalar_lea.sflag [#allocation3], %s387
        %s389 = sand.u32 %s48, 1
        %s390 = smul.addr %s389, 64
        %s391 = scalar_lea.vmem [#allocation2], %s390
        %p392 = pneg %p61
        %p393 = pneg %p58
        %s394 = sand.u32 %s26, 1
        %s395 = scalar_lea.sflag [#allocation6], %s394
        %s396 = sand.u32 %s84, 1
        %s397 = smul.addr %s396, 32
        %s398 = scalar_lea.vmem [#allocation5], %s397
        %p399 = pneg %p97
        %p400 = pneg %p94
        %s401 = sand.u32 %s26, 1
        %s402 = scalar_lea.sflag [#allocation6], %s401
        %s403 = sand.u32 %s120, 1
        %s404 = smul.addr %s403, 32
        %s405 = scalar_lea.vmem [#allocation7], %s404
        %p406 = pneg %p133
        %p407 = pneg %p130
        %p408 = pneg %p154
        %p409 = pneg %p151
        %s410 = sand.u32 %s26, 1
        %s411 = scalar_lea.sflag [#allocation3], %s410
        %s412 = sand.u32 %s169, 1
        %s413 = smul.addr %s412, 128
        %s414 = scalar_lea.vmem [#allocation10], %s413
        %p415 = pneg %p182
        %p416 = pneg %p179
        %p417 = pneg %p210
        %p418 = pneg %p207
        %s419 = sand.u32 %s197, 1
        %s420 = scalar_lea.sflag [#allocation4], %s419
        %s421 = sand.u32 %s197, 1
        %s422 = smul.addr %s421, 128
        %s423 = scalar_lea.vmem [#allocation11], %s422
        %s424 = smul.u32 2, %s31
        %s425 = smul.u32 %s31, 2
        %s426 = ssub.s32 %s425, 1
        %p427 = scmp.gt.s32.totalorder %s426, 0
        %s428 = scalar_select %p427, %s426, 0
        %s429 = sadd.s32 %s31, 1
        %s430 = smul.u32 %s429, 2
        %p431 = scmp.lt.s32.totalorder %s430, 1
        %s432 = scalar_select %p431, %s430, 1
        %s433 = smul.u32 2, %s31
        %s434 = smul.u32 2, %s31
        %v435 = vld [vmem:[#allocation8] sm:$0xff]
        %v436 = vld [vmem:[#allocation8 + $0x8] sm:$0xff]
        %v437 = vld [vmem:[#allocation8 + $0x10] sm:$0xff]
        %v438 = vld [vmem:[#allocation8 + $0x18] sm:$0xff]
        %v439 = vld [vmem:[#allocation8 + $0x20] sm:$0xff]
        %v440 = vld [vmem:[#allocation8 + $0x28] sm:$0xff]
        %v441 = vld [vmem:[#allocation8 + $0x30] sm:$0xff]
        %v442 = vld [vmem:[#allocation8 + $0x38] sm:$0xff]
        %v443 = vld [vmem:[#allocation8 + $0x40] sm:$0xff]
        %v444 = vld [vmem:[#allocation8 + $0x48] sm:$0xff]
        %v445 = vld [vmem:[#allocation8 + $0x50] sm:$0xff]
        %v446 = vld [vmem:[#allocation8 + $0x58] sm:$0xff]
        %v447 = vld [vmem:[#allocation8 + $0x60] sm:$0xff]
        %v448 = vld [vmem:[#allocation8 + $0x68] sm:$0xff]
        %v449 = vld [vmem:[#allocation8 + $0x70] sm:$0xff]
        %v450 = vld [vmem:[#allocation8 + $0x78] sm:$0xff]
        %v451 = vld [vmem:[#allocation8 + $0x80] sm:$0xff]
        %v452 = vld [vmem:[#allocation8 + $0x88] sm:$0xff]
        %v453 = vld [vmem:[#allocation8 + $0x90] sm:$0xff]
        %v454 = vld [vmem:[#allocation8 + $0x98] sm:$0xff]
        %v455 = vld [vmem:[#allocation8 + $0xa0] sm:$0xff]
        %v456 = vld [vmem:[#allocation8 + $0xa8] sm:$0xff]
        %v457 = vld [vmem:[#allocation8 + $0xb0] sm:$0xff]
        %v458 = vld [vmem:[#allocation8 + $0xb8] sm:$0xff]
        %v459 = vld [vmem:[#allocation8 + $0xc0] sm:$0xff]
        %v460 = vld [vmem:[#allocation8 + $0xc8] sm:$0xff]
        %v461 = vld [vmem:[#allocation8 + $0xd0] sm:$0xff]
        %v462 = vld [vmem:[#allocation8 + $0xd8] sm:$0xff]
        %v463 = vld [vmem:[#allocation8 + $0xe0] sm:$0xff]
        %v464 = vld [vmem:[#allocation8 + $0xe8] sm:$0xff]
        %v465 = vld [vmem:[#allocation8 + $0xf0] sm:$0xff]
        %v466 = vld [vmem:[#allocation8 + $0xf8] sm:$0xff]
        %v467 = vld [vmem:[#allocation8 + $0x100] sm:$0xff]
        %v468 = vld [vmem:[#allocation8 + $0x108] sm:$0xff]
        %v469 = vld [vmem:[#allocation8 + $0x110] sm:$0xff]
        %v470 = vld [vmem:[#allocation8 + $0x118] sm:$0xff]
        %v471 = vld [vmem:[#allocation8 + $0x120] sm:$0xff]
        %v472 = vld [vmem:[#allocation8 + $0x128] sm:$0xff]
        %v473 = vld [vmem:[#allocation8 + $0x130] sm:$0xff]
        %v474 = vld [vmem:[#allocation8 + $0x138] sm:$0xff]
        %v475 = vld [vmem:[#allocation8 + $0x140] sm:$0xff]
        %v476 = vld [vmem:[#allocation8 + $0x148] sm:$0xff]
        %v477 = vld [vmem:[#allocation8 + $0x150] sm:$0xff]
        %v478 = vld [vmem:[#allocation8 + $0x158] sm:$0xff]
        %v479 = vld [vmem:[#allocation8 + $0x160] sm:$0xff]
        %v480 = vld [vmem:[#allocation8 + $0x168] sm:$0xff]
        %v481 = vld [vmem:[#allocation8 + $0x170] sm:$0xff]
        %v482 = vld [vmem:[#allocation8 + $0x178] sm:$0xff]
        %v483 = vld [vmem:[#allocation8 + $0x180] sm:$0xff]
        %v484 = vld [vmem:[#allocation8 + $0x188] sm:$0xff]
        %v485 = vld [vmem:[#allocation8 + $0x190] sm:$0xff]
        %v486 = vld [vmem:[#allocation8 + $0x198] sm:$0xff]
        %v487 = vld [vmem:[#allocation8 + $0x1a0] sm:$0xff]
        %v488 = vld [vmem:[#allocation8 + $0x1a8] sm:$0xff]
        %v489 = vld [vmem:[#allocation8 + $0x1b0] sm:$0xff]
        %v490 = vld [vmem:[#allocation8 + $0x1b8] sm:$0xff]
        %v491 = vld [vmem:[#allocation8 + $0x1c0] sm:$0xff]
        %v492 = vld [vmem:[#allocation8 + $0x1c8] sm:$0xff]
        %v493 = vld [vmem:[#allocation8 + $0x1d0] sm:$0xff]
        %v494 = vld [vmem:[#allocation8 + $0x1d8] sm:$0xff]
        %v495 = vld [vmem:[#allocation8 + $0x1e0] sm:$0xff]
        %v496 = vld [vmem:[#allocation8 + $0x1e8] sm:$0xff]
        %v497 = vld [vmem:[#allocation8 + $0x1f0] sm:$0xff]
        %v498 = vld [vmem:[#allocation8 + $0x1f8] sm:$0xff]
        %v499 = vld [vmem:[#allocation8 + $0x200] sm:$0xff]
        %v500 = vld [vmem:[#allocation8 + $0x208] sm:$0xff]
        %v501 = vld [vmem:[#allocation8 + $0x210] sm:$0xff]
        %v502 = vld [vmem:[#allocation8 + $0x218] sm:$0xff]
        %v503 = vld [vmem:[#allocation8 + $0x220] sm:$0xff]
        %v504 = vld [vmem:[#allocation8 + $0x228] sm:$0xff]
        %v505 = vld [vmem:[#allocation8 + $0x230] sm:$0xff]
        %v506 = vld [vmem:[#allocation8 + $0x238] sm:$0xff]
        %v507 = vld [vmem:[#allocation8 + $0x240] sm:$0xff]
        %v508 = vld [vmem:[#allocation8 + $0x248] sm:$0xff]
        %v509 = vld [vmem:[#allocation8 + $0x250] sm:$0xff]
        %v510 = vld [vmem:[#allocation8 + $0x258] sm:$0xff]
        %v511 = vld [vmem:[#allocation8 + $0x260] sm:$0xff]
        %v512 = vld [vmem:[#allocation8 + $0x268] sm:$0xff]
        %v513 = vld [vmem:[#allocation8 + $0x270] sm:$0xff]
        %v514 = vld [vmem:[#allocation8 + $0x278] sm:$0xff]
        %v515 = vld [vmem:[#allocation8 + $0x280] sm:$0xff]
        %v516 = vld [vmem:[#allocation8 + $0x288] sm:$0xff]
        %v517 = vld [vmem:[#allocation8 + $0x290] sm:$0xff]
        %v518 = vld [vmem:[#allocation8 + $0x298] sm:$0xff]
        %v519 = vld [vmem:[#allocation8 + $0x2a0] sm:$0xff]
        %v520 = vld [vmem:[#allocation8 + $0x2a8] sm:$0xff]
        %v521 = vld [vmem:[#allocation8 + $0x2b0] sm:$0xff]
        %v522 = vld [vmem:[#allocation8 + $0x2b8] sm:$0xff]
        %v523 = vld [vmem:[#allocation8 + $0x2c0] sm:$0xff]
        %v524 = vld [vmem:[#allocation8 + $0x2c8] sm:$0xff]
        %v525 = vld [vmem:[#allocation8 + $0x2d0] sm:$0xff]
        %v526 = vld [vmem:[#allocation8 + $0x2d8] sm:$0xff]
        %v527 = vld [vmem:[#allocation8 + $0x2e0] sm:$0xff]
        %v528 = vld [vmem:[#allocation8 + $0x2e8] sm:$0xff]
        %v529 = vld [vmem:[#allocation8 + $0x2f0] sm:$0xff]
        %v530 = vld [vmem:[#allocation8 + $0x2f8] sm:$0xff]
        %v531 = vld [vmem:[#allocation8 + $0x300] sm:$0xff]
        %v532 = vld [vmem:[#allocation8 + $0x308] sm:$0xff]
        %v533 = vld [vmem:[#allocation8 + $0x310] sm:$0xff]
        %v534 = vld [vmem:[#allocation8 + $0x318] sm:$0xff]
        %v535 = vld [vmem:[#allocation8 + $0x320] sm:$0xff]
        %v536 = vld [vmem:[#allocation8 + $0x328] sm:$0xff]
        %v537 = vld [vmem:[#allocation8 + $0x330] sm:$0xff]
        %v538 = vld [vmem:[#allocation8 + $0x338] sm:$0xff]
        %v539 = vld [vmem:[#allocation8 + $0x340] sm:$0xff]
        %v540 = vld [vmem:[#allocation8 + $0x348] sm:$0xff]
        %v541 = vld [vmem:[#allocation8 + $0x350] sm:$0xff]
        %v542 = vld [vmem:[#allocation8 + $0x358] sm:$0xff]
        %v543 = vld [vmem:[#allocation8 + $0x360] sm:$0xff]
        %v544 = vld [vmem:[#allocation8 + $0x368] sm:$0xff]
        %v545 = vld [vmem:[#allocation8 + $0x370] sm:$0xff]
        %v546 = vld [vmem:[#allocation8 + $0x378] sm:$0xff]
        %v547 = vld [vmem:[#allocation8 + $0x380] sm:$0xff]
        %v548 = vld [vmem:[#allocation8 + $0x388] sm:$0xff]
        %v549 = vld [vmem:[#allocation8 + $0x390] sm:$0xff]
        %v550 = vld [vmem:[#allocation8 + $0x398] sm:$0xff]
        %v551 = vld [vmem:[#allocation8 + $0x3a0] sm:$0xff]
        %v552 = vld [vmem:[#allocation8 + $0x3a8] sm:$0xff]
        %v553 = vld [vmem:[#allocation8 + $0x3b0] sm:$0xff]
        %v554 = vld [vmem:[#allocation8 + $0x3b8] sm:$0xff]
        %v555 = vld [vmem:[#allocation8 + $0x3c0] sm:$0xff]
        %v556 = vld [vmem:[#allocation8 + $0x3c8] sm:$0xff]
        %v557 = vld [vmem:[#allocation8 + $0x3d0] sm:$0xff]
        %v558 = vld [vmem:[#allocation8 + $0x3d8] sm:$0xff]
        %v559 = vld [vmem:[#allocation8 + $0x3e0] sm:$0xff]
        %v560 = vld [vmem:[#allocation8 + $0x3e8] sm:$0xff]
        %v561 = vld [vmem:[#allocation8 + $0x3f0] sm:$0xff]
        %v562 = vld [vmem:[#allocation8 + $0x3f8] sm:$0xff]
        %v563 = vld [vmem:[#allocation8 + $0x400] sm:$0xff]
        %v564 = vld [vmem:[#allocation8 + $0x408] sm:$0xff]
        %v565 = vld [vmem:[#allocation8 + $0x410] sm:$0xff]
        %v566 = vld [vmem:[#allocation8 + $0x418] sm:$0xff]
        %v567 = vld [vmem:[#allocation8 + $0x420] sm:$0xff]
        %v568 = vld [vmem:[#allocation8 + $0x428] sm:$0xff]
        %v569 = vld [vmem:[#allocation8 + $0x430] sm:$0xff]
        %v570 = vld [vmem:[#allocation8 + $0x438] sm:$0xff]
        %v571 = vld [vmem:[#allocation8 + $0x440] sm:$0xff]
        %v572 = vld [vmem:[#allocation8 + $0x448] sm:$0xff]
        %v573 = vld [vmem:[#allocation8 + $0x450] sm:$0xff]
        %v574 = vld [vmem:[#allocation8 + $0x458] sm:$0xff]
        %v575 = vld [vmem:[#allocation8 + $0x460] sm:$0xff]
        %v576 = vld [vmem:[#allocation8 + $0x468] sm:$0xff]
        %v577 = vld [vmem:[#allocation8 + $0x470] sm:$0xff]
        %v578 = vld [vmem:[#allocation8 + $0x478] sm:$0xff]
        %v579 = vld [vmem:[#allocation8 + $0x480] sm:$0xff]
        %v580 = vld [vmem:[#allocation8 + $0x488] sm:$0xff]
        %v581 = vld [vmem:[#allocation8 + $0x490] sm:$0xff]
        %v582 = vld [vmem:[#allocation8 + $0x498] sm:$0xff]
        %v583 = vld [vmem:[#allocation8 + $0x4a0] sm:$0xff]
        %v584 = vld [vmem:[#allocation8 + $0x4a8] sm:$0xff]
        %v585 = vld [vmem:[#allocation8 + $0x4b0] sm:$0xff]
        %v586 = vld [vmem:[#allocation8 + $0x4b8] sm:$0xff]
        %v587 = vld [vmem:[#allocation8 + $0x4c0] sm:$0xff]
        %v588 = vld [vmem:[#allocation8 + $0x4c8] sm:$0xff]
        %v589 = vld [vmem:[#allocation8 + $0x4d0] sm:$0xff]
        %v590 = vld [vmem:[#allocation8 + $0x4d8] sm:$0xff]
        %v591 = vld [vmem:[#allocation8 + $0x4e0] sm:$0xff]
        %v592 = vld [vmem:[#allocation8 + $0x4e8] sm:$0xff]
        %v593 = vld [vmem:[#allocation8 + $0x4f0] sm:$0xff]
        %v594 = vld [vmem:[#allocation8 + $0x4f8] sm:$0xff]
        %v595 = vld [vmem:[#allocation8 + $0x500] sm:$0xff]
        %v596 = vld [vmem:[#allocation8 + $0x508] sm:$0xff]
        %v597 = vld [vmem:[#allocation8 + $0x510] sm:$0xff]
        %v598 = vld [vmem:[#allocation8 + $0x518] sm:$0xff]
        %v599 = vld [vmem:[#allocation8 + $0x520] sm:$0xff]
        %v600 = vld [vmem:[#allocation8 + $0x528] sm:$0xff]
        %v601 = vld [vmem:[#allocation8 + $0x530] sm:$0xff]
        %v602 = vld [vmem:[#allocation8 + $0x538] sm:$0xff]
        %v603 = vld [vmem:[#allocation8 + $0x540] sm:$0xff]
        %v604 = vld [vmem:[#allocation8 + $0x548] sm:$0xff]
        %v605 = vld [vmem:[#allocation8 + $0x550] sm:$0xff]
        %v606 = vld [vmem:[#allocation8 + $0x558] sm:$0xff]
        %v607 = vld [vmem:[#allocation8 + $0x560] sm:$0xff]
        %v608 = vld [vmem:[#allocation8 + $0x568] sm:$0xff]
        %v609 = vld [vmem:[#allocation8 + $0x570] sm:$0xff]
        %v610 = vld [vmem:[#allocation8 + $0x578] sm:$0xff]
        %v611 = vld [vmem:[#allocation8 + $0x580] sm:$0xff]
        %v612 = vld [vmem:[#allocation8 + $0x588] sm:$0xff]
        %v613 = vld [vmem:[#allocation8 + $0x590] sm:$0xff]
        %v614 = vld [vmem:[#allocation8 + $0x598] sm:$0xff]
        %v615 = vld [vmem:[#allocation8 + $0x5a0] sm:$0xff]
        %v616 = vld [vmem:[#allocation8 + $0x5a8] sm:$0xff]
        %v617 = vld [vmem:[#allocation8 + $0x5b0] sm:$0xff]
        %v618 = vld [vmem:[#allocation8 + $0x5b8] sm:$0xff]
        %v619 = vld [vmem:[#allocation8 + $0x5c0] sm:$0xff]
        %v620 = vld [vmem:[#allocation8 + $0x5c8] sm:$0xff]
        %v621 = vld [vmem:[#allocation8 + $0x5d0] sm:$0xff]
        %v622 = vld [vmem:[#allocation8 + $0x5d8] sm:$0xff]
        %v623 = vld [vmem:[#allocation8 + $0x5e0] sm:$0xff]
        %v624 = vld [vmem:[#allocation8 + $0x5e8] sm:$0xff]
        %v625 = vld [vmem:[#allocation8 + $0x5f0] sm:$0xff]
        %v626 = vld [vmem:[#allocation8 + $0x5f8] sm:$0xff]
        %v627 = vld [vmem:[#allocation8 + $0x600] sm:$0xff]
        %v628 = vld [vmem:[#allocation8 + $0x608] sm:$0xff]
        %v629 = vld [vmem:[#allocation8 + $0x610] sm:$0xff]
        %v630 = vld [vmem:[#allocation8 + $0x618] sm:$0xff]
        %v631 = vld [vmem:[#allocation8 + $0x620] sm:$0xff]
        %v632 = vld [vmem:[#allocation8 + $0x628] sm:$0xff]
        %v633 = vld [vmem:[#allocation8 + $0x630] sm:$0xff]
        %v634 = vld [vmem:[#allocation8 + $0x638] sm:$0xff]
        %v635 = vld [vmem:[#allocation8 + $0x640] sm:$0xff]
        %v636 = vld [vmem:[#allocation8 + $0x648] sm:$0xff]
        %v637 = vld [vmem:[#allocation8 + $0x650] sm:$0xff]
        %v638 = vld [vmem:[#allocation8 + $0x658] sm:$0xff]
        %v639 = vld [vmem:[#allocation8 + $0x660] sm:$0xff]
        %v640 = vld [vmem:[#allocation8 + $0x668] sm:$0xff]
        %v641 = vld [vmem:[#allocation8 + $0x670] sm:$0xff]
        %v642 = vld [vmem:[#allocation8 + $0x678] sm:$0xff]
        %v643 = vld [vmem:[#allocation8 + $0x680] sm:$0xff]
        %v644 = vld [vmem:[#allocation8 + $0x688] sm:$0xff]
        %v645 = vld [vmem:[#allocation8 + $0x690] sm:$0xff]
        %v646 = vld [vmem:[#allocation8 + $0x698] sm:$0xff]
        %v647 = vld [vmem:[#allocation8 + $0x6a0] sm:$0xff]
        %v648 = vld [vmem:[#allocation8 + $0x6a8] sm:$0xff]
        %v649 = vld [vmem:[#allocation8 + $0x6b0] sm:$0xff]
        %v650 = vld [vmem:[#allocation8 + $0x6b8] sm:$0xff]
        %v651 = vld [vmem:[#allocation8 + $0x6c0] sm:$0xff]
        %v652 = vld [vmem:[#allocation8 + $0x6c8] sm:$0xff]
        %v653 = vld [vmem:[#allocation8 + $0x6d0] sm:$0xff]
        %v654 = vld [vmem:[#allocation8 + $0x6d8] sm:$0xff]
        %v655 = vld [vmem:[#allocation8 + $0x6e0] sm:$0xff]
        %v656 = vld [vmem:[#allocation8 + $0x6e8] sm:$0xff]
        %v657 = vld [vmem:[#allocation8 + $0x6f0] sm:$0xff]
        %v658 = vld [vmem:[#allocation8 + $0x6f8] sm:$0xff]
        %v659 = vld [vmem:[#allocation8 + $0x700] sm:$0xff]
        %v660 = vld [vmem:[#allocation8 + $0x708] sm:$0xff]
        %v661 = vld [vmem:[#allocation8 + $0x710] sm:$0xff]
        %v662 = vld [vmem:[#allocation8 + $0x718] sm:$0xff]
        %v663 = vld [vmem:[#allocation8 + $0x720] sm:$0xff]
        %v664 = vld [vmem:[#allocation8 + $0x728] sm:$0xff]
        %v665 = vld [vmem:[#allocation8 + $0x730] sm:$0xff]
        %v666 = vld [vmem:[#allocation8 + $0x738] sm:$0xff]
        %v667 = vld [vmem:[#allocation8 + $0x740] sm:$0xff]
        %v668 = vld [vmem:[#allocation8 + $0x748] sm:$0xff]
        %v669 = vld [vmem:[#allocation8 + $0x750] sm:$0xff]
        %v670 = vld [vmem:[#allocation8 + $0x758] sm:$0xff]
        %v671 = vld [vmem:[#allocation8 + $0x760] sm:$0xff]
        %v672 = vld [vmem:[#allocation8 + $0x768] sm:$0xff]
        %v673 = vld [vmem:[#allocation8 + $0x770] sm:$0xff]
        %v674 = vld [vmem:[#allocation8 + $0x778] sm:$0xff]
        %v675 = vld [vmem:[#allocation8 + $0x780] sm:$0xff]
        %v676 = vld [vmem:[#allocation8 + $0x788] sm:$0xff]
        %v677 = vld [vmem:[#allocation8 + $0x790] sm:$0xff]
        %v678 = vld [vmem:[#allocation8 + $0x798] sm:$0xff]
        %v679 = vld [vmem:[#allocation8 + $0x7a0] sm:$0xff]
        %v680 = vld [vmem:[#allocation8 + $0x7a8] sm:$0xff]
        %v681 = vld [vmem:[#allocation8 + $0x7b0] sm:$0xff]
        %v682 = vld [vmem:[#allocation8 + $0x7b8] sm:$0xff]
        %v683 = vld [vmem:[#allocation8 + $0x7c0] sm:$0xff]
        %v684 = vld [vmem:[#allocation8 + $0x7c8] sm:$0xff]
        %v685 = vld [vmem:[#allocation8 + $0x7d0] sm:$0xff]
        %v686 = vld [vmem:[#allocation8 + $0x7d8] sm:$0xff]
        %v687 = vld [vmem:[#allocation8 + $0x7e0] sm:$0xff]
        %v688 = vld [vmem:[#allocation8 + $0x7e8] sm:$0xff]
        %v689 = vld [vmem:[#allocation8 + $0x7f0] sm:$0xff]
        %v690 = vld [vmem:[#allocation8 + $0x7f8] sm:$0xff]
        %v691 = vld [vmem:[%s351] sm:$0xff]
        %v692 = vld [vmem:[%s351 + $0x8] sm:$0xff]
        %v693 = vld [vmem:[%s351 + $0x10] sm:$0xff]
        %v694 = vld [vmem:[%s351 + $0x18] sm:$0xff]
        %v695 = vld [vmem:[%s351 + $0x20] sm:$0xff]
        %v696 = vld [vmem:[%s351 + $0x28] sm:$0xff]
        %v697 = vld [vmem:[%s351 + $0x30] sm:$0xff]
        %v698 = vld [vmem:[%s351 + $0x38] sm:$0xff]
        %v707 = vunpack.c.l.b16 %v691
        %v708 = vunpack.c.h.b16 %v691
        %v709 = vunpack.c.l.b16 %v692
        %v710 = vunpack.c.h.b16 %v692
        %v711 = vunpack.c.l.b16 %v693
        %v712 = vunpack.c.h.b16 %v693
        %v713 = vunpack.c.l.b16 %v694
        %v714 = vunpack.c.h.b16 %v694
        %v715 = vunpack.c.l.b16 %v695
        %v716 = vunpack.c.h.b16 %v695
        %v717 = vunpack.c.l.b16 %v696
        %v718 = vunpack.c.h.b16 %v696
        %v719 = vunpack.c.l.b16 %v697
        %v720 = vunpack.c.h.b16 %v697
        %v721 = vunpack.c.l.b16 %v698
        %v722 = vunpack.c.h.b16 %v698
        %v723 = vpack.c.b16 %v715, %v707
        %v724 = vpack.c.b16 %v716, %v708
        %v725 = vpack.c.b16 %v717, %v709
        %v726 = vpack.c.b16 %v718, %v710
        %v727 = vpack.c.b16 %v719, %v711
        %v728 = vpack.c.b16 %v720, %v712
        %v729 = vpack.c.b16 %v721, %v713
        %v730 = vpack.c.b16 %v722, %v714
        %v995 = vunpack.c.l.b16 %v435
        %v996 = vunpack.c.h.b16 %v435
        %v997 = vunpack.c.l.b16 %v436
        %v998 = vunpack.c.h.b16 %v436
        %v999 = vunpack.c.l.b16 %v437
        %v1000 = vunpack.c.h.b16 %v437
        %v1001 = vunpack.c.l.b16 %v438
        %v1002 = vunpack.c.h.b16 %v438
        %v1003 = vunpack.c.l.b16 %v439
        %v1004 = vunpack.c.h.b16 %v439
        %v1005 = vunpack.c.l.b16 %v440
        %v1006 = vunpack.c.h.b16 %v440
        %v1007 = vunpack.c.l.b16 %v441
        %v1008 = vunpack.c.h.b16 %v441
        %v1009 = vunpack.c.l.b16 %v442
        %v1010 = vunpack.c.h.b16 %v442
        %v1011 = vunpack.c.l.b16 %v443
        %v1012 = vunpack.c.h.b16 %v443
        %v1013 = vunpack.c.l.b16 %v444
        %v1014 = vunpack.c.h.b16 %v444
        %v1015 = vunpack.c.l.b16 %v445
        %v1016 = vunpack.c.h.b16 %v445
        %v1017 = vunpack.c.l.b16 %v446
        %v1018 = vunpack.c.h.b16 %v446
        %v1019 = vunpack.c.l.b16 %v447
        %v1020 = vunpack.c.h.b16 %v447
        %v1021 = vunpack.c.l.b16 %v448
        %v1022 = vunpack.c.h.b16 %v448
        %v1023 = vunpack.c.l.b16 %v449
        %v1024 = vunpack.c.h.b16 %v449
        %v1025 = vunpack.c.l.b16 %v450
        %v1026 = vunpack.c.h.b16 %v450
        %v1027 = vunpack.c.l.b16 %v451
        %v1028 = vunpack.c.h.b16 %v451
        %v1029 = vunpack.c.l.b16 %v452
        %v1030 = vunpack.c.h.b16 %v452
        %v1031 = vunpack.c.l.b16 %v453
        %v1032 = vunpack.c.h.b16 %v453
        %v1033 = vunpack.c.l.b16 %v454
        %v1034 = vunpack.c.h.b16 %v454
        %v1035 = vunpack.c.l.b16 %v455
        %v1036 = vunpack.c.h.b16 %v455
        %v1037 = vunpack.c.l.b16 %v456
        %v1038 = vunpack.c.h.b16 %v456
        %v1039 = vunpack.c.l.b16 %v457
        %v1040 = vunpack.c.h.b16 %v457
        %v1041 = vunpack.c.l.b16 %v458
        %v1042 = vunpack.c.h.b16 %v458
        %v1043 = vunpack.c.l.b16 %v459
        %v1044 = vunpack.c.h.b16 %v459
        %v1045 = vunpack.c.l.b16 %v460
        %v1046 = vunpack.c.h.b16 %v460
        %v1047 = vunpack.c.l.b16 %v461
        %v1048 = vunpack.c.h.b16 %v461
        %v1049 = vunpack.c.l.b16 %v462
        %v1050 = vunpack.c.h.b16 %v462
        %v1051 = vunpack.c.l.b16 %v463
        %v1052 = vunpack.c.h.b16 %v463
        %v1053 = vunpack.c.l.b16 %v464
        %v1054 = vunpack.c.h.b16 %v464
        %v1055 = vunpack.c.l.b16 %v465
        %v1056 = vunpack.c.h.b16 %v465
        %v1057 = vunpack.c.l.b16 %v466
        %v1058 = vunpack.c.h.b16 %v466
        %v1059 = vunpack.c.l.b16 %v467
        %v1060 = vunpack.c.h.b16 %v467
        %v1061 = vunpack.c.l.b16 %v468
        %v1062 = vunpack.c.h.b16 %v468
        %v1063 = vunpack.c.l.b16 %v469
        %v1064 = vunpack.c.h.b16 %v469
        %v1065 = vunpack.c.l.b16 %v470
        %v1066 = vunpack.c.h.b16 %v470
        %v1067 = vunpack.c.l.b16 %v471
        %v1068 = vunpack.c.h.b16 %v471
        %v1069 = vunpack.c.l.b16 %v472
        %v1070 = vunpack.c.h.b16 %v472
        %v1071 = vunpack.c.l.b16 %v473
        %v1072 = vunpack.c.h.b16 %v473
        %v1073 = vunpack.c.l.b16 %v474
        %v1074 = vunpack.c.h.b16 %v474
        %v1075 = vunpack.c.l.b16 %v475
        %v1076 = vunpack.c.h.b16 %v475
        %v1077 = vunpack.c.l.b16 %v476
        %v1078 = vunpack.c.h.b16 %v476
        %v1079 = vunpack.c.l.b16 %v477
        %v1080 = vunpack.c.h.b16 %v477
        %v1081 = vunpack.c.l.b16 %v478
        %v1082 = vunpack.c.h.b16 %v478
        %v1083 = vunpack.c.l.b16 %v479
        %v1084 = vunpack.c.h.b16 %v479
        %v1085 = vunpack.c.l.b16 %v480
        %v1086 = vunpack.c.h.b16 %v480
        %v1087 = vunpack.c.l.b16 %v481
        %v1088 = vunpack.c.h.b16 %v481
        %v1089 = vunpack.c.l.b16 %v482
        %v1090 = vunpack.c.h.b16 %v482
        %v1091 = vunpack.c.l.b16 %v483
        %v1092 = vunpack.c.h.b16 %v483
        %v1093 = vunpack.c.l.b16 %v484
        %v1094 = vunpack.c.h.b16 %v484
        %v1095 = vunpack.c.l.b16 %v485
        %v1096 = vunpack.c.h.b16 %v485
        %v1097 = vunpack.c.l.b16 %v486
        %v1098 = vunpack.c.h.b16 %v486
        %v1099 = vunpack.c.l.b16 %v487
        %v1100 = vunpack.c.h.b16 %v487
        %v1101 = vunpack.c.l.b16 %v488
        %v1102 = vunpack.c.h.b16 %v488
        %v1103 = vunpack.c.l.b16 %v489
        %v1104 = vunpack.c.h.b16 %v489
        %v1105 = vunpack.c.l.b16 %v490
        %v1106 = vunpack.c.h.b16 %v490
        %v1107 = vunpack.c.l.b16 %v491
        %v1108 = vunpack.c.h.b16 %v491
        %v1109 = vunpack.c.l.b16 %v492
        %v1110 = vunpack.c.h.b16 %v492
        %v1111 = vunpack.c.l.b16 %v493
        %v1112 = vunpack.c.h.b16 %v493
        %v1113 = vunpack.c.l.b16 %v494
        %v1114 = vunpack.c.h.b16 %v494
        %v1115 = vunpack.c.l.b16 %v495
        %v1116 = vunpack.c.h.b16 %v495
        %v1117 = vunpack.c.l.b16 %v496
        %v1118 = vunpack.c.h.b16 %v496
        %v1119 = vunpack.c.l.b16 %v497
        %v1120 = vunpack.c.h.b16 %v497
        %v1121 = vunpack.c.l.b16 %v498
        %v1122 = vunpack.c.h.b16 %v498
        %v1123 = vunpack.c.l.b16 %v499
        %v1124 = vunpack.c.h.b16 %v499
        %v1125 = vunpack.c.l.b16 %v500
        %v1126 = vunpack.c.h.b16 %v500
        %v1127 = vunpack.c.l.b16 %v501
        %v1128 = vunpack.c.h.b16 %v501
        %v1129 = vunpack.c.l.b16 %v502
        %v1130 = vunpack.c.h.b16 %v502
        %v1131 = vunpack.c.l.b16 %v503
        %v1132 = vunpack.c.h.b16 %v503
        %v1133 = vunpack.c.l.b16 %v504
        %v1134 = vunpack.c.h.b16 %v504
        %v1135 = vunpack.c.l.b16 %v505
        %v1136 = vunpack.c.h.b16 %v505
        %v1137 = vunpack.c.l.b16 %v506
        %v1138 = vunpack.c.h.b16 %v506
        %v1139 = vunpack.c.l.b16 %v507
        %v1140 = vunpack.c.h.b16 %v507
        %v1141 = vunpack.c.l.b16 %v508
        %v1142 = vunpack.c.h.b16 %v508
        %v1143 = vunpack.c.l.b16 %v509
        %v1144 = vunpack.c.h.b16 %v509
        %v1145 = vunpack.c.l.b16 %v510
        %v1146 = vunpack.c.h.b16 %v510
        %v1147 = vunpack.c.l.b16 %v511
        %v1148 = vunpack.c.h.b16 %v511
        %v1149 = vunpack.c.l.b16 %v512
        %v1150 = vunpack.c.h.b16 %v512
        %v1151 = vunpack.c.l.b16 %v513
        %v1152 = vunpack.c.h.b16 %v513
        %v1153 = vunpack.c.l.b16 %v514
        %v1154 = vunpack.c.h.b16 %v514
        %v1155 = vunpack.c.l.b16 %v515
        %v1156 = vunpack.c.h.b16 %v515
        %v1157 = vunpack.c.l.b16 %v516
        %v1158 = vunpack.c.h.b16 %v516
        %v1159 = vunpack.c.l.b16 %v517
        %v1160 = vunpack.c.h.b16 %v517
        %v1161 = vunpack.c.l.b16 %v518
        %v1162 = vunpack.c.h.b16 %v518
        %v1163 = vunpack.c.l.b16 %v519
        %v1164 = vunpack.c.h.b16 %v519
        %v1165 = vunpack.c.l.b16 %v520
        %v1166 = vunpack.c.h.b16 %v520
        %v1167 = vunpack.c.l.b16 %v521
        %v1168 = vunpack.c.h.b16 %v521
        %v1169 = vunpack.c.l.b16 %v522
        %v1170 = vunpack.c.h.b16 %v522
        %v1171 = vunpack.c.l.b16 %v523
        %v1172 = vunpack.c.h.b16 %v523
        %v1173 = vunpack.c.l.b16 %v524
        %v1174 = vunpack.c.h.b16 %v524
        %v1175 = vunpack.c.l.b16 %v525
        %v1176 = vunpack.c.h.b16 %v525
        %v1177 = vunpack.c.l.b16 %v526
        %v1178 = vunpack.c.h.b16 %v526
        %v1179 = vunpack.c.l.b16 %v527
        %v1180 = vunpack.c.h.b16 %v527
        %v1181 = vunpack.c.l.b16 %v528
        %v1182 = vunpack.c.h.b16 %v528
        %v1183 = vunpack.c.l.b16 %v529
        %v1184 = vunpack.c.h.b16 %v529
        %v1185 = vunpack.c.l.b16 %v530
        %v1186 = vunpack.c.h.b16 %v530
        %v1187 = vunpack.c.l.b16 %v531
        %v1188 = vunpack.c.h.b16 %v531
        %v1189 = vunpack.c.l.b16 %v532
        %v1190 = vunpack.c.h.b16 %v532
        %v1191 = vunpack.c.l.b16 %v533
        %v1192 = vunpack.c.h.b16 %v533
        %v1193 = vunpack.c.l.b16 %v534
        %v1194 = vunpack.c.h.b16 %v534
        %v1195 = vunpack.c.l.b16 %v535
        %v1196 = vunpack.c.h.b16 %v535
        %v1197 = vunpack.c.l.b16 %v536
        %v1198 = vunpack.c.h.b16 %v536
        %v1199 = vunpack.c.l.b16 %v537
        %v1200 = vunpack.c.h.b16 %v537
        %v1201 = vunpack.c.l.b16 %v538
        %v1202 = vunpack.c.h.b16 %v538
        %v1203 = vunpack.c.l.b16 %v539
        %v1204 = vunpack.c.h.b16 %v539
        %v1205 = vunpack.c.l.b16 %v540
        %v1206 = vunpack.c.h.b16 %v540
        %v1207 = vunpack.c.l.b16 %v541
        %v1208 = vunpack.c.h.b16 %v541
        %v1209 = vunpack.c.l.b16 %v542
        %v1210 = vunpack.c.h.b16 %v542
        %v1211 = vunpack.c.l.b16 %v543
        %v1212 = vunpack.c.h.b16 %v543
        %v1213 = vunpack.c.l.b16 %v544
        %v1214 = vunpack.c.h.b16 %v544
        %v1215 = vunpack.c.l.b16 %v545
        %v1216 = vunpack.c.h.b16 %v545
        %v1217 = vunpack.c.l.b16 %v546
        %v1218 = vunpack.c.h.b16 %v546
        %v1219 = vunpack.c.l.b16 %v547
        %v1220 = vunpack.c.h.b16 %v547
        %v1221 = vunpack.c.l.b16 %v548
        %v1222 = vunpack.c.h.b16 %v548
        %v1223 = vunpack.c.l.b16 %v549
        %v1224 = vunpack.c.h.b16 %v549
        %v1225 = vunpack.c.l.b16 %v550
        %v1226 = vunpack.c.h.b16 %v550
        %v1227 = vunpack.c.l.b16 %v551
        %v1228 = vunpack.c.h.b16 %v551
        %v1229 = vunpack.c.l.b16 %v552
        %v1230 = vunpack.c.h.b16 %v552
        %v1231 = vunpack.c.l.b16 %v553
        %v1232 = vunpack.c.h.b16 %v553
        %v1233 = vunpack.c.l.b16 %v554
        %v1234 = vunpack.c.h.b16 %v554
        %v1235 = vunpack.c.l.b16 %v555
        %v1236 = vunpack.c.h.b16 %v555
        %v1237 = vunpack.c.l.b16 %v556
        %v1238 = vunpack.c.h.b16 %v556
        %v1239 = vunpack.c.l.b16 %v557
        %v1240 = vunpack.c.h.b16 %v557
        %v1241 = vunpack.c.l.b16 %v558
        %v1242 = vunpack.c.h.b16 %v558
        %v1243 = vunpack.c.l.b16 %v559
        %v1244 = vunpack.c.h.b16 %v559
        %v1245 = vunpack.c.l.b16 %v560
        %v1246 = vunpack.c.h.b16 %v560
        %v1247 = vunpack.c.l.b16 %v561
        %v1248 = vunpack.c.h.b16 %v561
        %v1249 = vunpack.c.l.b16 %v562
        %v1250 = vunpack.c.h.b16 %v562
        %v1251 = vunpack.c.l.b16 %v563
        %v1252 = vunpack.c.h.b16 %v563
        %v1253 = vunpack.c.l.b16 %v564
        %v1254 = vunpack.c.h.b16 %v564
        %v1255 = vunpack.c.l.b16 %v565
        %v1256 = vunpack.c.h.b16 %v565
        %v1257 = vunpack.c.l.b16 %v566
        %v1258 = vunpack.c.h.b16 %v566
        %v1259 = vunpack.c.l.b16 %v567
        %v1260 = vunpack.c.h.b16 %v567
        %v1261 = vunpack.c.l.b16 %v568
        %v1262 = vunpack.c.h.b16 %v568
        %v1263 = vunpack.c.l.b16 %v569
        %v1264 = vunpack.c.h.b16 %v569
        %v1265 = vunpack.c.l.b16 %v570
        %v1266 = vunpack.c.h.b16 %v570
        %v1267 = vunpack.c.l.b16 %v571
        %v1268 = vunpack.c.h.b16 %v571
        %v1269 = vunpack.c.l.b16 %v572
        %v1270 = vunpack.c.h.b16 %v572
        %v1271 = vunpack.c.l.b16 %v573
        %v1272 = vunpack.c.h.b16 %v573
        %v1273 = vunpack.c.l.b16 %v574
        %v1274 = vunpack.c.h.b16 %v574
        %v1275 = vunpack.c.l.b16 %v575
        %v1276 = vunpack.c.h.b16 %v575
        %v1277 = vunpack.c.l.b16 %v576
        %v1278 = vunpack.c.h.b16 %v576
        %v1279 = vunpack.c.l.b16 %v577
        %v1280 = vunpack.c.h.b16 %v577
        %v1281 = vunpack.c.l.b16 %v578
        %v1282 = vunpack.c.h.b16 %v578
        %v1283 = vunpack.c.l.b16 %v579
        %v1284 = vunpack.c.h.b16 %v579
        %v1285 = vunpack.c.l.b16 %v580
        %v1286 = vunpack.c.h.b16 %v580
        %v1287 = vunpack.c.l.b16 %v581
        %v1288 = vunpack.c.h.b16 %v581
        %v1289 = vunpack.c.l.b16 %v582
        %v1290 = vunpack.c.h.b16 %v582
        %v1291 = vunpack.c.l.b16 %v583
        %v1292 = vunpack.c.h.b16 %v583
        %v1293 = vunpack.c.l.b16 %v584
        %v1294 = vunpack.c.h.b16 %v584
        %v1295 = vunpack.c.l.b16 %v585
        %v1296 = vunpack.c.h.b16 %v585
        %v1297 = vunpack.c.l.b16 %v586
        %v1298 = vunpack.c.h.b16 %v586
        %v1299 = vunpack.c.l.b16 %v587
        %v1300 = vunpack.c.h.b16 %v587
        %v1301 = vunpack.c.l.b16 %v588
        %v1302 = vunpack.c.h.b16 %v588
        %v1303 = vunpack.c.l.b16 %v589
        %v1304 = vunpack.c.h.b16 %v589
        %v1305 = vunpack.c.l.b16 %v590
        %v1306 = vunpack.c.h.b16 %v590
        %v1307 = vunpack.c.l.b16 %v591
        %v1308 = vunpack.c.h.b16 %v591
        %v1309 = vunpack.c.l.b16 %v592
        %v1310 = vunpack.c.h.b16 %v592
        %v1311 = vunpack.c.l.b16 %v593
        %v1312 = vunpack.c.h.b16 %v593
        %v1313 = vunpack.c.l.b16 %v594
        %v1314 = vunpack.c.h.b16 %v594
        %v1315 = vunpack.c.l.b16 %v595
        %v1316 = vunpack.c.h.b16 %v595
        %v1317 = vunpack.c.l.b16 %v596
        %v1318 = vunpack.c.h.b16 %v596
        %v1319 = vunpack.c.l.b16 %v597
        %v1320 = vunpack.c.h.b16 %v597
        %v1321 = vunpack.c.l.b16 %v598
        %v1322 = vunpack.c.h.b16 %v598
        %v1323 = vunpack.c.l.b16 %v599
        %v1324 = vunpack.c.h.b16 %v599
        %v1325 = vunpack.c.l.b16 %v600
        %v1326 = vunpack.c.h.b16 %v600
        %v1327 = vunpack.c.l.b16 %v601
        %v1328 = vunpack.c.h.b16 %v601
        %v1329 = vunpack.c.l.b16 %v602
        %v1330 = vunpack.c.h.b16 %v602
        %v1331 = vunpack.c.l.b16 %v603
        %v1332 = vunpack.c.h.b16 %v603
        %v1333 = vunpack.c.l.b16 %v604
        %v1334 = vunpack.c.h.b16 %v604
        %v1335 = vunpack.c.l.b16 %v605
        %v1336 = vunpack.c.h.b16 %v605
        %v1337 = vunpack.c.l.b16 %v606
        %v1338 = vunpack.c.h.b16 %v606
        %v1339 = vunpack.c.l.b16 %v607
        %v1340 = vunpack.c.h.b16 %v607
        %v1341 = vunpack.c.l.b16 %v608
        %v1342 = vunpack.c.h.b16 %v608
        %v1343 = vunpack.c.l.b16 %v609
        %v1344 = vunpack.c.h.b16 %v609
        %v1345 = vunpack.c.l.b16 %v610
        %v1346 = vunpack.c.h.b16 %v610
        %v1347 = vunpack.c.l.b16 %v611
        %v1348 = vunpack.c.h.b16 %v611
        %v1349 = vunpack.c.l.b16 %v612
        %v1350 = vunpack.c.h.b16 %v612
        %v1351 = vunpack.c.l.b16 %v613
        %v1352 = vunpack.c.h.b16 %v613
        %v1353 = vunpack.c.l.b16 %v614
        %v1354 = vunpack.c.h.b16 %v614
        %v1355 = vunpack.c.l.b16 %v615
        %v1356 = vunpack.c.h.b16 %v615
        %v1357 = vunpack.c.l.b16 %v616
        %v1358 = vunpack.c.h.b16 %v616
        %v1359 = vunpack.c.l.b16 %v617
        %v1360 = vunpack.c.h.b16 %v617
        %v1361 = vunpack.c.l.b16 %v618
        %v1362 = vunpack.c.h.b16 %v618
        %v1363 = vunpack.c.l.b16 %v619
        %v1364 = vunpack.c.h.b16 %v619
        %v1365 = vunpack.c.l.b16 %v620
        %v1366 = vunpack.c.h.b16 %v620
        %v1367 = vunpack.c.l.b16 %v621
        %v1368 = vunpack.c.h.b16 %v621
        %v1369 = vunpack.c.l.b16 %v622
        %v1370 = vunpack.c.h.b16 %v622
        %v1371 = vunpack.c.l.b16 %v623
        %v1372 = vunpack.c.h.b16 %v623
        %v1373 = vunpack.c.l.b16 %v624
        %v1374 = vunpack.c.h.b16 %v624
        %v1375 = vunpack.c.l.b16 %v625
        %v1376 = vunpack.c.h.b16 %v625
        %v1377 = vunpack.c.l.b16 %v626
        %v1378 = vunpack.c.h.b16 %v626
        %v1379 = vunpack.c.l.b16 %v627
        %v1380 = vunpack.c.h.b16 %v627
        %v1381 = vunpack.c.l.b16 %v628
        %v1382 = vunpack.c.h.b16 %v628
        %v1383 = vunpack.c.l.b16 %v629
        %v1384 = vunpack.c.h.b16 %v629
        %v1385 = vunpack.c.l.b16 %v630
        %v1386 = vunpack.c.h.b16 %v630
        %v1387 = vunpack.c.l.b16 %v631
        %v1388 = vunpack.c.h.b16 %v631
        %v1389 = vunpack.c.l.b16 %v632
        %v1390 = vunpack.c.h.b16 %v632
        %v1391 = vunpack.c.l.b16 %v633
        %v1392 = vunpack.c.h.b16 %v633
        %v1393 = vunpack.c.l.b16 %v634
        %v1394 = vunpack.c.h.b16 %v634
        %v1395 = vunpack.c.l.b16 %v635
        %v1396 = vunpack.c.h.b16 %v635
        %v1397 = vunpack.c.l.b16 %v636
        %v1398 = vunpack.c.h.b16 %v636
        %v1399 = vunpack.c.l.b16 %v637
        %v1400 = vunpack.c.h.b16 %v637
        %v1401 = vunpack.c.l.b16 %v638
        %v1402 = vunpack.c.h.b16 %v638
        %v1403 = vunpack.c.l.b16 %v639
        %v1404 = vunpack.c.h.b16 %v639
        %v1405 = vunpack.c.l.b16 %v640
        %v1406 = vunpack.c.h.b16 %v640
        %v1407 = vunpack.c.l.b16 %v641
        %v1408 = vunpack.c.h.b16 %v641
        %v1409 = vunpack.c.l.b16 %v642
        %v1410 = vunpack.c.h.b16 %v642
        %v1411 = vunpack.c.l.b16 %v643
        %v1412 = vunpack.c.h.b16 %v643
        %v1413 = vunpack.c.l.b16 %v644
        %v1414 = vunpack.c.h.b16 %v644
        %v1415 = vunpack.c.l.b16 %v645
        %v1416 = vunpack.c.h.b16 %v645
        %v1417 = vunpack.c.l.b16 %v646
        %v1418 = vunpack.c.h.b16 %v646
        %v1419 = vunpack.c.l.b16 %v647
        %v1420 = vunpack.c.h.b16 %v647
        %v1421 = vunpack.c.l.b16 %v648
        %v1422 = vunpack.c.h.b16 %v648
        %v1423 = vunpack.c.l.b16 %v649
        %v1424 = vunpack.c.h.b16 %v649
        %v1425 = vunpack.c.l.b16 %v650
        %v1426 = vunpack.c.h.b16 %v650
        %v1427 = vunpack.c.l.b16 %v651
        %v1428 = vunpack.c.h.b16 %v651
        %v1429 = vunpack.c.l.b16 %v652
        %v1430 = vunpack.c.h.b16 %v652
        %v1431 = vunpack.c.l.b16 %v653
        %v1432 = vunpack.c.h.b16 %v653
        %v1433 = vunpack.c.l.b16 %v654
        %v1434 = vunpack.c.h.b16 %v654
        %v1435 = vunpack.c.l.b16 %v655
        %v1436 = vunpack.c.h.b16 %v655
        %v1437 = vunpack.c.l.b16 %v656
        %v1438 = vunpack.c.h.b16 %v656
        %v1439 = vunpack.c.l.b16 %v657
        %v1440 = vunpack.c.h.b16 %v657
        %v1441 = vunpack.c.l.b16 %v658
        %v1442 = vunpack.c.h.b16 %v658
        %v1443 = vunpack.c.l.b16 %v659
        %v1444 = vunpack.c.h.b16 %v659
        %v1445 = vunpack.c.l.b16 %v660
        %v1446 = vunpack.c.h.b16 %v660
        %v1447 = vunpack.c.l.b16 %v661
        %v1448 = vunpack.c.h.b16 %v661
        %v1449 = vunpack.c.l.b16 %v662
        %v1450 = vunpack.c.h.b16 %v662
        %v1451 = vunpack.c.l.b16 %v663
        %v1452 = vunpack.c.h.b16 %v663
        %v1453 = vunpack.c.l.b16 %v664
        %v1454 = vunpack.c.h.b16 %v664
        %v1455 = vunpack.c.l.b16 %v665
        %v1456 = vunpack.c.h.b16 %v665
        %v1457 = vunpack.c.l.b16 %v666
        %v1458 = vunpack.c.h.b16 %v666
        %v1459 = vunpack.c.l.b16 %v667
        %v1460 = vunpack.c.h.b16 %v667
        %v1461 = vunpack.c.l.b16 %v668
        %v1462 = vunpack.c.h.b16 %v668
        %v1463 = vunpack.c.l.b16 %v669
        %v1464 = vunpack.c.h.b16 %v669
        %v1465 = vunpack.c.l.b16 %v670
        %v1466 = vunpack.c.h.b16 %v670
        %v1467 = vunpack.c.l.b16 %v671
        %v1468 = vunpack.c.h.b16 %v671
        %v1469 = vunpack.c.l.b16 %v672
        %v1470 = vunpack.c.h.b16 %v672
        %v1471 = vunpack.c.l.b16 %v673
        %v1472 = vunpack.c.h.b16 %v673
        %v1473 = vunpack.c.l.b16 %v674
        %v1474 = vunpack.c.h.b16 %v674
        %v1475 = vunpack.c.l.b16 %v675
        %v1476 = vunpack.c.h.b16 %v675
        %v1477 = vunpack.c.l.b16 %v676
        %v1478 = vunpack.c.h.b16 %v676
        %v1479 = vunpack.c.l.b16 %v677
        %v1480 = vunpack.c.h.b16 %v677
        %v1481 = vunpack.c.l.b16 %v678
        %v1482 = vunpack.c.h.b16 %v678
        %v1483 = vunpack.c.l.b16 %v679
        %v1484 = vunpack.c.h.b16 %v679
        %v1485 = vunpack.c.l.b16 %v680
        %v1486 = vunpack.c.h.b16 %v680
        %v1487 = vunpack.c.l.b16 %v681
        %v1488 = vunpack.c.h.b16 %v681
        %v1489 = vunpack.c.l.b16 %v682
        %v1490 = vunpack.c.h.b16 %v682
        %v1491 = vunpack.c.l.b16 %v683
        %v1492 = vunpack.c.h.b16 %v683
        %v1493 = vunpack.c.l.b16 %v684
        %v1494 = vunpack.c.h.b16 %v684
        %v1495 = vunpack.c.l.b16 %v685
        %v1496 = vunpack.c.h.b16 %v685
        %v1497 = vunpack.c.l.b16 %v686
        %v1498 = vunpack.c.h.b16 %v686
        %v1499 = vunpack.c.l.b16 %v687
        %v1500 = vunpack.c.h.b16 %v687
        %v1501 = vunpack.c.l.b16 %v688
        %v1502 = vunpack.c.h.b16 %v688
        %v1503 = vunpack.c.l.b16 %v689
        %v1504 = vunpack.c.h.b16 %v689
        %v1505 = vunpack.c.l.b16 %v690
        %v1506 = vunpack.c.h.b16 %v690
        %v1507 = vpack.c.b16 %v999, %v995
        %v1508 = vpack.c.b16 %v1000, %v996
        %v1509 = vpack.c.b16 %v1001, %v997
        %v1510 = vpack.c.b16 %v1002, %v998
        %v1511 = vpack.c.b16 %v1007, %v1003
        %v1512 = vpack.c.b16 %v1008, %v1004
        %v1513 = vpack.c.b16 %v1009, %v1005
        %v1514 = vpack.c.b16 %v1010, %v1006
        %v1515 = vpack.c.b16 %v1015, %v1011
        %v1516 = vpack.c.b16 %v1016, %v1012
        %v1517 = vpack.c.b16 %v1017, %v1013
        %v1518 = vpack.c.b16 %v1018, %v1014
        %v1519 = vpack.c.b16 %v1023, %v1019
        %v1520 = vpack.c.b16 %v1024, %v1020
        %v1521 = vpack.c.b16 %v1025, %v1021
        %v1522 = vpack.c.b16 %v1026, %v1022
        %v1523 = vpack.c.b16 %v1031, %v1027
        %v1524 = vpack.c.b16 %v1032, %v1028
        %v1525 = vpack.c.b16 %v1033, %v1029
        %v1526 = vpack.c.b16 %v1034, %v1030
        %v1527 = vpack.c.b16 %v1039, %v1035
        %v1528 = vpack.c.b16 %v1040, %v1036
        %v1529 = vpack.c.b16 %v1041, %v1037
        %v1530 = vpack.c.b16 %v1042, %v1038
        %v1531 = vpack.c.b16 %v1047, %v1043
        %v1532 = vpack.c.b16 %v1048, %v1044
        %v1533 = vpack.c.b16 %v1049, %v1045
        %v1534 = vpack.c.b16 %v1050, %v1046
        %v1535 = vpack.c.b16 %v1055, %v1051
        %v1536 = vpack.c.b16 %v1056, %v1052
        %v1537 = vpack.c.b16 %v1057, %v1053
        %v1538 = vpack.c.b16 %v1058, %v1054
        %v1539 = vpack.c.b16 %v1063, %v1059
        %v1540 = vpack.c.b16 %v1064, %v1060
        %v1541 = vpack.c.b16 %v1065, %v1061
        %v1542 = vpack.c.b16 %v1066, %v1062
        %v1543 = vpack.c.b16 %v1071, %v1067
        %v1544 = vpack.c.b16 %v1072, %v1068
        %v1545 = vpack.c.b16 %v1073, %v1069
        %v1546 = vpack.c.b16 %v1074, %v1070
        %v1547 = vpack.c.b16 %v1079, %v1075
        %v1548 = vpack.c.b16 %v1080, %v1076
        %v1549 = vpack.c.b16 %v1081, %v1077
        %v1550 = vpack.c.b16 %v1082, %v1078
        %v1551 = vpack.c.b16 %v1087, %v1083
        %v1552 = vpack.c.b16 %v1088, %v1084
        %v1553 = vpack.c.b16 %v1089, %v1085
        %v1554 = vpack.c.b16 %v1090, %v1086
        %v1555 = vpack.c.b16 %v1095, %v1091
        %v1556 = vpack.c.b16 %v1096, %v1092
        %v1557 = vpack.c.b16 %v1097, %v1093
        %v1558 = vpack.c.b16 %v1098, %v1094
        %v1559 = vpack.c.b16 %v1103, %v1099
        %v1560 = vpack.c.b16 %v1104, %v1100
        %v1561 = vpack.c.b16 %v1105, %v1101
        %v1562 = vpack.c.b16 %v1106, %v1102
        %v1563 = vpack.c.b16 %v1111, %v1107
        %v1564 = vpack.c.b16 %v1112, %v1108
        %v1565 = vpack.c.b16 %v1113, %v1109
        %v1566 = vpack.c.b16 %v1114, %v1110
        %v1567 = vpack.c.b16 %v1119, %v1115
        %v1568 = vpack.c.b16 %v1120, %v1116
        %v1569 = vpack.c.b16 %v1121, %v1117
        %v1570 = vpack.c.b16 %v1122, %v1118
        %v1571 = vpack.c.b16 %v1127, %v1123
        %v1572 = vpack.c.b16 %v1128, %v1124
        %v1573 = vpack.c.b16 %v1129, %v1125
        %v1574 = vpack.c.b16 %v1130, %v1126
        %v1575 = vpack.c.b16 %v1135, %v1131
        %v1576 = vpack.c.b16 %v1136, %v1132
        %v1577 = vpack.c.b16 %v1137, %v1133
        %v1578 = vpack.c.b16 %v1138, %v1134
        %v1579 = vpack.c.b16 %v1143, %v1139
        %v1580 = vpack.c.b16 %v1144, %v1140
        %v1581 = vpack.c.b16 %v1145, %v1141
        %v1582 = vpack.c.b16 %v1146, %v1142
        %v1583 = vpack.c.b16 %v1151, %v1147
        %v1584 = vpack.c.b16 %v1152, %v1148
        %v1585 = vpack.c.b16 %v1153, %v1149
        %v1586 = vpack.c.b16 %v1154, %v1150
        %v1587 = vpack.c.b16 %v1159, %v1155
        %v1588 = vpack.c.b16 %v1160, %v1156
        %v1589 = vpack.c.b16 %v1161, %v1157
        %v1590 = vpack.c.b16 %v1162, %v1158
        %v1591 = vpack.c.b16 %v1167, %v1163
        %v1592 = vpack.c.b16 %v1168, %v1164
        %v1593 = vpack.c.b16 %v1169, %v1165
        %v1594 = vpack.c.b16 %v1170, %v1166
        %v1595 = vpack.c.b16 %v1175, %v1171
        %v1596 = vpack.c.b16 %v1176, %v1172
        %v1597 = vpack.c.b16 %v1177, %v1173
        %v1598 = vpack.c.b16 %v1178, %v1174
        %v1599 = vpack.c.b16 %v1183, %v1179
        %v1600 = vpack.c.b16 %v1184, %v1180
        %v1601 = vpack.c.b16 %v1185, %v1181
        %v1602 = vpack.c.b16 %v1186, %v1182
        %v1603 = vpack.c.b16 %v1191, %v1187
        %v1604 = vpack.c.b16 %v1192, %v1188
        %v1605 = vpack.c.b16 %v1193, %v1189
        %v1606 = vpack.c.b16 %v1194, %v1190
        %v1607 = vpack.c.b16 %v1199, %v1195
        %v1608 = vpack.c.b16 %v1200, %v1196
        %v1609 = vpack.c.b16 %v1201, %v1197
        %v1610 = vpack.c.b16 %v1202, %v1198
        %v1611 = vpack.c.b16 %v1207, %v1203
        %v1612 = vpack.c.b16 %v1208, %v1204
        %v1613 = vpack.c.b16 %v1209, %v1205
        %v1614 = vpack.c.b16 %v1210, %v1206
        %v1615 = vpack.c.b16 %v1215, %v1211
        %v1616 = vpack.c.b16 %v1216, %v1212
        %v1617 = vpack.c.b16 %v1217, %v1213
        %v1618 = vpack.c.b16 %v1218, %v1214
        %v1619 = vpack.c.b16 %v1223, %v1219
        %v1620 = vpack.c.b16 %v1224, %v1220
        %v1621 = vpack.c.b16 %v1225, %v1221
        %v1622 = vpack.c.b16 %v1226, %v1222
        %v1623 = vpack.c.b16 %v1231, %v1227
        %v1624 = vpack.c.b16 %v1232, %v1228
        %v1625 = vpack.c.b16 %v1233, %v1229
        %v1626 = vpack.c.b16 %v1234, %v1230
        %v1627 = vpack.c.b16 %v1239, %v1235
        %v1628 = vpack.c.b16 %v1240, %v1236
        %v1629 = vpack.c.b16 %v1241, %v1237
        %v1630 = vpack.c.b16 %v1242, %v1238
        %v1631 = vpack.c.b16 %v1247, %v1243
        %v1632 = vpack.c.b16 %v1248, %v1244
        %v1633 = vpack.c.b16 %v1249, %v1245
        %v1634 = vpack.c.b16 %v1250, %v1246
        %v1635 = vpack.c.b16 %v1255, %v1251
        %v1636 = vpack.c.b16 %v1256, %v1252
        %v1637 = vpack.c.b16 %v1257, %v1253
        %v1638 = vpack.c.b16 %v1258, %v1254
        %v1639 = vpack.c.b16 %v1263, %v1259
        %v1640 = vpack.c.b16 %v1264, %v1260
        %v1641 = vpack.c.b16 %v1265, %v1261
        %v1642 = vpack.c.b16 %v1266, %v1262
        %v1643 = vpack.c.b16 %v1271, %v1267
        %v1644 = vpack.c.b16 %v1272, %v1268
        %v1645 = vpack.c.b16 %v1273, %v1269
        %v1646 = vpack.c.b16 %v1274, %v1270
        %v1647 = vpack.c.b16 %v1279, %v1275
        %v1648 = vpack.c.b16 %v1280, %v1276
        %v1649 = vpack.c.b16 %v1281, %v1277
        %v1650 = vpack.c.b16 %v1282, %v1278
        %v1651 = vpack.c.b16 %v1287, %v1283
        %v1652 = vpack.c.b16 %v1288, %v1284
        %v1653 = vpack.c.b16 %v1289, %v1285
        %v1654 = vpack.c.b16 %v1290, %v1286
        %v1655 = vpack.c.b16 %v1295, %v1291
        %v1656 = vpack.c.b16 %v1296, %v1292
        %v1657 = vpack.c.b16 %v1297, %v1293
        %v1658 = vpack.c.b16 %v1298, %v1294
        %v1659 = vpack.c.b16 %v1303, %v1299
        %v1660 = vpack.c.b16 %v1304, %v1300
        %v1661 = vpack.c.b16 %v1305, %v1301
        %v1662 = vpack.c.b16 %v1306, %v1302
        %v1663 = vpack.c.b16 %v1311, %v1307
        %v1664 = vpack.c.b16 %v1312, %v1308
        %v1665 = vpack.c.b16 %v1313, %v1309
        %v1666 = vpack.c.b16 %v1314, %v1310
        %v1667 = vpack.c.b16 %v1319, %v1315
        %v1668 = vpack.c.b16 %v1320, %v1316
        %v1669 = vpack.c.b16 %v1321, %v1317
        %v1670 = vpack.c.b16 %v1322, %v1318
        %v1671 = vpack.c.b16 %v1327, %v1323
        %v1672 = vpack.c.b16 %v1328, %v1324
        %v1673 = vpack.c.b16 %v1329, %v1325
        %v1674 = vpack.c.b16 %v1330, %v1326
        %v1675 = vpack.c.b16 %v1335, %v1331
        %v1676 = vpack.c.b16 %v1336, %v1332
        %v1677 = vpack.c.b16 %v1337, %v1333
        %v1678 = vpack.c.b16 %v1338, %v1334
        %v1679 = vpack.c.b16 %v1343, %v1339
        %v1680 = vpack.c.b16 %v1344, %v1340
        %v1681 = vpack.c.b16 %v1345, %v1341
        %v1682 = vpack.c.b16 %v1346, %v1342
        %v1683 = vpack.c.b16 %v1351, %v1347
        %v1684 = vpack.c.b16 %v1352, %v1348
        %v1685 = vpack.c.b16 %v1353, %v1349
        %v1686 = vpack.c.b16 %v1354, %v1350
        %v1687 = vpack.c.b16 %v1359, %v1355
        %v1688 = vpack.c.b16 %v1360, %v1356
        %v1689 = vpack.c.b16 %v1361, %v1357
        %v1690 = vpack.c.b16 %v1362, %v1358
        %v1691 = vpack.c.b16 %v1367, %v1363
        %v1692 = vpack.c.b16 %v1368, %v1364
        %v1693 = vpack.c.b16 %v1369, %v1365
        %v1694 = vpack.c.b16 %v1370, %v1366
        %v1695 = vpack.c.b16 %v1375, %v1371
        %v1696 = vpack.c.b16 %v1376, %v1372
        %v1697 = vpack.c.b16 %v1377, %v1373
        %v1698 = vpack.c.b16 %v1378, %v1374
        %v1699 = vpack.c.b16 %v1383, %v1379
        %v1700 = vpack.c.b16 %v1384, %v1380
        %v1701 = vpack.c.b16 %v1385, %v1381
        %v1702 = vpack.c.b16 %v1386, %v1382
        %v1703 = vpack.c.b16 %v1391, %v1387
        %v1704 = vpack.c.b16 %v1392, %v1388
        %v1705 = vpack.c.b16 %v1393, %v1389
        %v1706 = vpack.c.b16 %v1394, %v1390
        %v1707 = vpack.c.b16 %v1399, %v1395
        %v1708 = vpack.c.b16 %v1400, %v1396
        %v1709 = vpack.c.b16 %v1401, %v1397
        %v1710 = vpack.c.b16 %v1402, %v1398
        %v1711 = vpack.c.b16 %v1407, %v1403
        %v1712 = vpack.c.b16 %v1408, %v1404
        %v1713 = vpack.c.b16 %v1409, %v1405
        %v1714 = vpack.c.b16 %v1410, %v1406
        %v1715 = vpack.c.b16 %v1415, %v1411
        %v1716 = vpack.c.b16 %v1416, %v1412
        %v1717 = vpack.c.b16 %v1417, %v1413
        %v1718 = vpack.c.b16 %v1418, %v1414
        %v1719 = vpack.c.b16 %v1423, %v1419
        %v1720 = vpack.c.b16 %v1424, %v1420
        %v1721 = vpack.c.b16 %v1425, %v1421
        %v1722 = vpack.c.b16 %v1426, %v1422
        %v1723 = vpack.c.b16 %v1431, %v1427
        %v1724 = vpack.c.b16 %v1432, %v1428
        %v1725 = vpack.c.b16 %v1433, %v1429
        %v1726 = vpack.c.b16 %v1434, %v1430
        %v1727 = vpack.c.b16 %v1439, %v1435
        %v1728 = vpack.c.b16 %v1440, %v1436
        %v1729 = vpack.c.b16 %v1441, %v1437
        %v1730 = vpack.c.b16 %v1442, %v1438
        %v1731 = vpack.c.b16 %v1447, %v1443
        %v1732 = vpack.c.b16 %v1448, %v1444
        %v1733 = vpack.c.b16 %v1449, %v1445
        %v1734 = vpack.c.b16 %v1450, %v1446
        %v1735 = vpack.c.b16 %v1455, %v1451
        %v1736 = vpack.c.b16 %v1456, %v1452
        %v1737 = vpack.c.b16 %v1457, %v1453
        %v1738 = vpack.c.b16 %v1458, %v1454
        %v1739 = vpack.c.b16 %v1463, %v1459
        %v1740 = vpack.c.b16 %v1464, %v1460
        %v1741 = vpack.c.b16 %v1465, %v1461
        %v1742 = vpack.c.b16 %v1466, %v1462
        %v1743 = vpack.c.b16 %v1471, %v1467
        %v1744 = vpack.c.b16 %v1472, %v1468
        %v1745 = vpack.c.b16 %v1473, %v1469
        %v1746 = vpack.c.b16 %v1474, %v1470
        %v1747 = vpack.c.b16 %v1479, %v1475
        %v1748 = vpack.c.b16 %v1480, %v1476
        %v1749 = vpack.c.b16 %v1481, %v1477
        %v1750 = vpack.c.b16 %v1482, %v1478
        %v1751 = vpack.c.b16 %v1487, %v1483
        %v1752 = vpack.c.b16 %v1488, %v1484
        %v1753 = vpack.c.b16 %v1489, %v1485
        %v1754 = vpack.c.b16 %v1490, %v1486
        %v1755 = vpack.c.b16 %v1495, %v1491
        %v1756 = vpack.c.b16 %v1496, %v1492
        %v1757 = vpack.c.b16 %v1497, %v1493
        %v1758 = vpack.c.b16 %v1498, %v1494
        %v1759 = vpack.c.b16 %v1503, %v1499
        %v1760 = vpack.c.b16 %v1504, %v1500
        %v1761 = vpack.c.b16 %v1505, %v1501
        %v1762 = vpack.c.b16 %v1506, %v1502
        %2019 = vmatprep.subr.bf16.mxu0 %v1536
        %2020 = vmatpush1.bf16.msra.mxu0 %v1535
        %2021 = vmatprep.subr.bf16.mxu0 %v1532
        %2022 = vmatpush1.bf16.msra.mxu0 %v1531
        %2023 = vmatprep.subr.bf16.mxu0 %v1528
        %2024 = vmatpush1.bf16.msra.mxu0 %v1527
        %2025 = vmatprep.subr.bf16.mxu0 %v1524
        %2026 = vmatpush1.bf16.msra.mxu0 %v1523
        %2027 = vmatprep.subr.bf16.mxu0 %v1520
        %2028 = vmatpush1.bf16.msra.mxu0 %v1519
        %2029 = vmatprep.subr.bf16.mxu0 %v1516
        %2030 = vmatpush1.bf16.msra.mxu0 %v1515
        %2031 = vmatprep.subr.bf16.mxu0 %v1512
        %2032 = vmatpush1.bf16.msra.mxu0 %v1511
        %2033 = vmatprep.subr.bf16.mxu0 %v1508
        %2034 = vmatpush1.bf16.msra.mxu0 %v1507
        %2035 = vmatprep.subr.bf16.mxu0 %v1568
        %2036 = vmatpush2.bf16.msra.mxu0 %v1567
        %2037 = vmatprep.subr.bf16.mxu0 %v1564
        %2038 = vmatpush2.bf16.msra.mxu0 %v1563
        %2039 = vmatprep.subr.bf16.mxu0 %v1560
        %2040 = vmatpush2.bf16.msra.mxu0 %v1559
        %2041 = vmatprep.subr.bf16.mxu0 %v1556
        %2042 = vmatpush2.bf16.msra.mxu0 %v1555
        %2043 = vmatprep.subr.bf16.mxu0 %v1552
        %2044 = vmatpush2.bf16.msra.mxu0 %v1551
        %2045 = vmatprep.subr.bf16.mxu0 %v1548
        %2046 = vmatpush2.bf16.msra.mxu0 %v1547
        %2047 = vmatprep.subr.bf16.mxu0 %v1544
        %2048 = vmatpush2.bf16.msra.mxu0 %v1543
        %2049 = vmatprep.subr.bf16.mxu0 %v1540
        %2050 = vmatpush2.bf16.msra.mxu0 %v1539
        %2051 = vmatprep.mubr.bf16.mxu0 %v724
        %2052 = vmatmul.mubr.bf16.gmra.mxu0 %v723
        %v2053 = vpop.f32.mrf.mxu0
        %v2054 = vadd.f32 0.0, %v2053
        %v2055 = vpop.f32.mrf.mxu0
        %v2056 = vadd.f32 0.0, %v2055
        %v2057 = vpop.f32.mrf.mxu0
        %v2058 = vadd.f32 0.0, %v2057
        %v2059 = vpop.f32.mrf.mxu0
        %v2060 = vadd.f32 0.0, %v2059
        %2061 = vdwg.mxu0
        %2062 = vmatprep.subr.bf16.mxu0 %v1600
        %2063 = vmatpush1.bf16.msra.mxu0 %v1599
        %2064 = vmatprep.subr.bf16.mxu0 %v1596
        %2065 = vmatpush1.bf16.msra.mxu0 %v1595
        %2066 = vmatprep.subr.bf16.mxu0 %v1592
        %2067 = vmatpush1.bf16.msra.mxu0 %v1591
        %2068 = vmatprep.subr.bf16.mxu0 %v1588
        %2069 = vmatpush1.bf16.msra.mxu0 %v1587
        %2070 = vmatprep.subr.bf16.mxu0 %v1584
        %2071 = vmatpush1.bf16.msra.mxu0 %v1583
        %2072 = vmatprep.subr.bf16.mxu0 %v1580
        %2073 = vmatpush1.bf16.msra.mxu0 %v1579
        %2074 = vmatprep.subr.bf16.mxu0 %v1576
        %2075 = vmatpush1.bf16.msra.mxu0 %v1575
        %2076 = vmatprep.subr.bf16.mxu0 %v1572
        %2077 = vmatpush1.bf16.msra.mxu0 %v1571
        %2078 = vmatprep.subr.bf16.mxu0 %v1632
        %2079 = vmatpush2.bf16.msra.mxu0 %v1631
        %2080 = vmatprep.subr.bf16.mxu0 %v1628
        %2081 = vmatpush2.bf16.msra.mxu0 %v1627
        %2082 = vmatprep.subr.bf16.mxu0 %v1624
        %2083 = vmatpush2.bf16.msra.mxu0 %v1623
        %2084 = vmatprep.subr.bf16.mxu0 %v1620
        %2085 = vmatpush2.bf16.msra.mxu0 %v1619
        %2086 = vmatprep.subr.bf16.mxu0 %v1616
        %2087 = vmatpush2.bf16.msra.mxu0 %v1615
        %2088 = vmatprep.subr.bf16.mxu0 %v1612
        %2089 = vmatpush2.bf16.msra.mxu0 %v1611
        %2090 = vmatprep.subr.bf16.mxu0 %v1608
        %2091 = vmatpush2.bf16.msra.mxu0 %v1607
        %2092 = vmatprep.subr.bf16.mxu0 %v1604
        %2093 = vmatpush2.bf16.msra.mxu0 %v1603
        %2094 = vmatprep.mubr.bf16.mxu0 %v726
        %2095 = vmatmul.mubr.bf16.gmra.mxu0 %v725
        %v2096 = vpop.f32.mrf.mxu0
        %v2097 = vadd.f32 %v2054, %v2096
        %v2098 = vpop.f32.mrf.mxu0
        %v2099 = vadd.f32 %v2056, %v2098
        %v2100 = vpop.f32.mrf.mxu0
        %v2101 = vadd.f32 %v2058, %v2100
        %v2102 = vpop.f32.mrf.mxu0
        %v2103 = vadd.f32 %v2060, %v2102
        %2104 = vdwg.mxu0
        %2105 = vmatprep.subr.bf16.mxu0 %v1664
        %2106 = vmatpush1.bf16.msra.mxu0 %v1663
        %2107 = vmatprep.subr.bf16.mxu0 %v1660
        %2108 = vmatpush1.bf16.msra.mxu0 %v1659
        %2109 = vmatprep.subr.bf16.mxu0 %v1656
        %2110 = vmatpush1.bf16.msra.mxu0 %v1655
        %2111 = vmatprep.subr.bf16.mxu0 %v1652
        %2112 = vmatpush1.bf16.msra.mxu0 %v1651
        %2113 = vmatprep.subr.bf16.mxu0 %v1648
        %2114 = vmatpush1.bf16.msra.mxu0 %v1647
        %2115 = vmatprep.subr.bf16.mxu0 %v1644
        %2116 = vmatpush1.bf16.msra.mxu0 %v1643
        %2117 = vmatprep.subr.bf16.mxu0 %v1640
        %2118 = vmatpush1.bf16.msra.mxu0 %v1639
        %2119 = vmatprep.subr.bf16.mxu0 %v1636
        %2120 = vmatpush1.bf16.msra.mxu0 %v1635
        %2121 = vmatprep.subr.bf16.mxu0 %v1696
        %2122 = vmatpush2.bf16.msra.mxu0 %v1695
        %2123 = vmatprep.subr.bf16.mxu0 %v1692
        %2124 = vmatpush2.bf16.msra.mxu0 %v1691
        %2125 = vmatprep.subr.bf16.mxu0 %v1688
        %2126 = vmatpush2.bf16.msra.mxu0 %v1687
        %2127 = vmatprep.subr.bf16.mxu0 %v1684
        %2128 = vmatpush2.bf16.msra.mxu0 %v1683
        %2129 = vmatprep.subr.bf16.mxu0 %v1680
        %2130 = vmatpush2.bf16.msra.mxu0 %v1679
        %2131 = vmatprep.subr.bf16.mxu0 %v1676
        %2132 = vmatpush2.bf16.msra.mxu0 %v1675
        %2133 = vmatprep.subr.bf16.mxu0 %v1672
        %2134 = vmatpush2.bf16.msra.mxu0 %v1671
        %2135 = vmatprep.subr.bf16.mxu0 %v1668
        %2136 = vmatpush2.bf16.msra.mxu0 %v1667
        %2137 = vmatprep.mubr.bf16.mxu0 %v728
        %2138 = vmatmul.mubr.bf16.gmra.mxu0 %v727
        %v2139 = vpop.f32.mrf.mxu0
        %v2140 = vadd.f32 %v2097, %v2139
        %v2141 = vpop.f32.mrf.mxu0
        %v2142 = vadd.f32 %v2099, %v2141
        %v2143 = vpop.f32.mrf.mxu0
        %v2144 = vadd.f32 %v2101, %v2143
        %v2145 = vpop.f32.mrf.mxu0
        %v2146 = vadd.f32 %v2103, %v2145
        %2147 = vdwg.mxu0
        %2148 = vmatprep.subr.bf16.mxu0 %v1728
        %2149 = vmatpush1.bf16.msra.mxu0 %v1727
        %2150 = vmatprep.subr.bf16.mxu0 %v1724
        %2151 = vmatpush1.bf16.msra.mxu0 %v1723
        %2152 = vmatprep.subr.bf16.mxu0 %v1720
        %2153 = vmatpush1.bf16.msra.mxu0 %v1719
        %2154 = vmatprep.subr.bf16.mxu0 %v1716
        %2155 = vmatpush1.bf16.msra.mxu0 %v1715
        %2156 = vmatprep.subr.bf16.mxu0 %v1712
        %2157 = vmatpush1.bf16.msra.mxu0 %v1711
        %2158 = vmatprep.subr.bf16.mxu0 %v1708
        %2159 = vmatpush1.bf16.msra.mxu0 %v1707
        %2160 = vmatprep.subr.bf16.mxu0 %v1704
        %2161 = vmatpush1.bf16.msra.mxu0 %v1703
        %2162 = vmatprep.subr.bf16.mxu0 %v1700
        %2163 = vmatpush1.bf16.msra.mxu0 %v1699
        %2164 = vmatprep.subr.bf16.mxu0 %v1760
        %2165 = vmatpush2.bf16.msra.mxu0 %v1759
        %2166 = vmatprep.subr.bf16.mxu0 %v1756
        %2167 = vmatpush2.bf16.msra.mxu0 %v1755
        %2168 = vmatprep.subr.bf16.mxu0 %v1752
        %2169 = vmatpush2.bf16.msra.mxu0 %v1751
        %2170 = vmatprep.subr.bf16.mxu0 %v1748
        %2171 = vmatpush2.bf16.msra.mxu0 %v1747
        %2172 = vmatprep.subr.bf16.mxu0 %v1744
        %2173 = vmatpush2.bf16.msra.mxu0 %v1743
        %2174 = vmatprep.subr.bf16.mxu0 %v1740
        %2175 = vmatpush2.bf16.msra.mxu0 %v1739
        %2176 = vmatprep.subr.bf16.mxu0 %v1736
        %2177 = vmatpush2.bf16.msra.mxu0 %v1735
        %2178 = vmatprep.subr.bf16.mxu0 %v1732
        %2179 = vmatpush2.bf16.msra.mxu0 %v1731
        %2180 = vmatprep.mubr.bf16.mxu0 %v730
        %2181 = vmatmul.mubr.bf16.gmra.mxu0 %v729
        %v2182 = vpop.f32.mrf.mxu0
        %v2183 = vadd.f32 %v2140, %v2182
        %v2184 = vpop.f32.mrf.mxu0
        %v2185 = vadd.f32 %v2142, %v2184
        %v2186 = vpop.f32.mrf.mxu0
        %v2187 = vadd.f32 %v2144, %v2186
        %v2188 = vpop.f32.mrf.mxu0
        %v2189 = vadd.f32 %v2146, %v2188
        %2190 = vdwg.mxu0
        %2191 = vmatprep.subr.bf16.mxu0 %v1538
        %2192 = vmatpush1.bf16.msra.mxu0 %v1537
        %2193 = vmatprep.subr.bf16.mxu0 %v1534
        %2194 = vmatpush1.bf16.msra.mxu0 %v1533
        %2195 = vmatprep.subr.bf16.mxu0 %v1530
        %2196 = vmatpush1.bf16.msra.mxu0 %v1529
        %2197 = vmatprep.subr.bf16.mxu0 %v1526
        %2198 = vmatpush1.bf16.msra.mxu0 %v1525
        %2199 = vmatprep.subr.bf16.mxu0 %v1522
        %2200 = vmatpush1.bf16.msra.mxu0 %v1521
        %2201 = vmatprep.subr.bf16.mxu0 %v1518
        %2202 = vmatpush1.bf16.msra.mxu0 %v1517
        %2203 = vmatprep.subr.bf16.mxu0 %v1514
        %2204 = vmatpush1.bf16.msra.mxu0 %v1513
        %2205 = vmatprep.subr.bf16.mxu0 %v1510
        %2206 = vmatpush1.bf16.msra.mxu0 %v1509
        %2207 = vmatprep.subr.bf16.mxu0 %v1570
        %2208 = vmatpush2.bf16.msra.mxu0 %v1569
        %2209 = vmatprep.subr.bf16.mxu0 %v1566
        %2210 = vmatpush2.bf16.msra.mxu0 %v1565
        %2211 = vmatprep.subr.bf16.mxu0 %v1562
        %2212 = vmatpush2.bf16.msra.mxu0 %v1561
        %2213 = vmatprep.subr.bf16.mxu0 %v1558
        %2214 = vmatpush2.bf16.msra.mxu0 %v1557
        %2215 = vmatprep.subr.bf16.mxu0 %v1554
        %2216 = vmatpush2.bf16.msra.mxu0 %v1553
        %2217 = vmatprep.subr.bf16.mxu0 %v1550
        %2218 = vmatpush2.bf16.msra.mxu0 %v1549
        %2219 = vmatprep.subr.bf16.mxu0 %v1546
        %2220 = vmatpush2.bf16.msra.mxu0 %v1545
        %2221 = vmatprep.subr.bf16.mxu0 %v1542
        %2222 = vmatpush2.bf16.msra.mxu0 %v1541
        %2223 = vmatprep.mubr.bf16.mxu0 %v724
        %2224 = vmatmul.mubr.bf16.gmra.mxu0 %v723
        %v2225 = vpop.f32.mrf.mxu0
        %v2226 = vadd.f32 0.0, %v2225
        %v2227 = vpop.f32.mrf.mxu0
        %v2228 = vadd.f32 0.0, %v2227
        %v2229 = vpop.f32.mrf.mxu0
        %v2230 = vadd.f32 0.0, %v2229
        %v2231 = vpop.f32.mrf.mxu0
        %v2232 = vadd.f32 0.0, %v2231
        %2233 = vdwg.mxu0
        %2234 = vmatprep.subr.bf16.mxu0 %v1602
        %2235 = vmatpush1.bf16.msra.mxu0 %v1601
        %2236 = vmatprep.subr.bf16.mxu0 %v1598
        %2237 = vmatpush1.bf16.msra.mxu0 %v1597
        %2238 = vmatprep.subr.bf16.mxu0 %v1594
        %2239 = vmatpush1.bf16.msra.mxu0 %v1593
        %2240 = vmatprep.subr.bf16.mxu0 %v1590
        %2241 = vmatpush1.bf16.msra.mxu0 %v1589
        %2242 = vmatprep.subr.bf16.mxu0 %v1586
        %2243 = vmatpush1.bf16.msra.mxu0 %v1585
        %2244 = vmatprep.subr.bf16.mxu0 %v1582
        %2245 = vmatpush1.bf16.msra.mxu0 %v1581
        %2246 = vmatprep.subr.bf16.mxu0 %v1578
        %2247 = vmatpush1.bf16.msra.mxu0 %v1577
        %2248 = vmatprep.subr.bf16.mxu0 %v1574
        %2249 = vmatpush1.bf16.msra.mxu0 %v1573
        %2250 = vmatprep.subr.bf16.mxu0 %v1634
        %2251 = vmatpush2.bf16.msra.mxu0 %v1633
        %2252 = vmatprep.subr.bf16.mxu0 %v1630
        %2253 = vmatpush2.bf16.msra.mxu0 %v1629
        %2254 = vmatprep.subr.bf16.mxu0 %v1626
        %2255 = vmatpush2.bf16.msra.mxu0 %v1625
        %2256 = vmatprep.subr.bf16.mxu0 %v1622
        %2257 = vmatpush2.bf16.msra.mxu0 %v1621
        %2258 = vmatprep.subr.bf16.mxu0 %v1618
        %2259 = vmatpush2.bf16.msra.mxu0 %v1617
        %2260 = vmatprep.subr.bf16.mxu0 %v1614
        %2261 = vmatpush2.bf16.msra.mxu0 %v1613
        %2262 = vmatprep.subr.bf16.mxu0 %v1610
        %2263 = vmatpush2.bf16.msra.mxu0 %v1609
        %2264 = vmatprep.subr.bf16.mxu0 %v1606
        %2265 = vmatpush2.bf16.msra.mxu0 %v1605
        %2266 = vmatprep.mubr.bf16.mxu0 %v726
        %2267 = vmatmul.mubr.bf16.gmra.mxu0 %v725
        %v2268 = vpop.f32.mrf.mxu0
        %v2269 = vadd.f32 %v2226, %v2268
        %v2270 = vpop.f32.mrf.mxu0
        %v2271 = vadd.f32 %v2228, %v2270
        %v2272 = vpop.f32.mrf.mxu0
        %v2273 = vadd.f32 %v2230, %v2272
        %v2274 = vpop.f32.mrf.mxu0
        %v2275 = vadd.f32 %v2232, %v2274
        %2276 = vdwg.mxu0
        %2277 = vmatprep.subr.bf16.mxu0 %v1666
        %2278 = vmatpush1.bf16.msra.mxu0 %v1665
        %2279 = vmatprep.subr.bf16.mxu0 %v1662
        %2280 = vmatpush1.bf16.msra.mxu0 %v1661
        %2281 = vmatprep.subr.bf16.mxu0 %v1658
        %2282 = vmatpush1.bf16.msra.mxu0 %v1657
        %2283 = vmatprep.subr.bf16.mxu0 %v1654
        %2284 = vmatpush1.bf16.msra.mxu0 %v1653
        %2285 = vmatprep.subr.bf16.mxu0 %v1650
        %2286 = vmatpush1.bf16.msra.mxu0 %v1649
        %2287 = vmatprep.subr.bf16.mxu0 %v1646
        %2288 = vmatpush1.bf16.msra.mxu0 %v1645
        %2289 = vmatprep.subr.bf16.mxu0 %v1642
        %2290 = vmatpush1.bf16.msra.mxu0 %v1641
        %2291 = vmatprep.subr.bf16.mxu0 %v1638
        %2292 = vmatpush1.bf16.msra.mxu0 %v1637
        %2293 = vmatprep.subr.bf16.mxu0 %v1698
        %2294 = vmatpush2.bf16.msra.mxu0 %v1697
        %2295 = vmatprep.subr.bf16.mxu0 %v1694
        %2296 = vmatpush2.bf16.msra.mxu0 %v1693
        %2297 = vmatprep.subr.bf16.mxu0 %v1690
        %2298 = vmatpush2.bf16.msra.mxu0 %v1689
        %2299 = vmatprep.subr.bf16.mxu0 %v1686
        %2300 = vmatpush2.bf16.msra.mxu0 %v1685
        %2301 = vmatprep.subr.bf16.mxu0 %v1682
        %2302 = vmatpush2.bf16.msra.mxu0 %v1681
        %2303 = vmatprep.subr.bf16.mxu0 %v1678
        %2304 = vmatpush2.bf16.msra.mxu0 %v1677
        %2305 = vmatprep.subr.bf16.mxu0 %v1674
        %2306 = vmatpush2.bf16.msra.mxu0 %v1673
        %2307 = vmatprep.subr.bf16.mxu0 %v1670
        %2308 = vmatpush2.bf16.msra.mxu0 %v1669
        %2309 = vmatprep.mubr.bf16.mxu0 %v728
        %2310 = vmatmul.mubr.bf16.gmra.mxu0 %v727
        %v2311 = vpop.f32.mrf.mxu0
        %v2312 = vadd.f32 %v2269, %v2311
        %v2313 = vpop.f32.mrf.mxu0
        %v2314 = vadd.f32 %v2271, %v2313
        %v2315 = vpop.f32.mrf.mxu0
        %v2316 = vadd.f32 %v2273, %v2315
        %v2317 = vpop.f32.mrf.mxu0
        %v2318 = vadd.f32 %v2275, %v2317
        %2319 = vdwg.mxu0
        %2320 = vmatprep.subr.bf16.mxu0 %v1730
        %2321 = vmatpush1.bf16.msra.mxu0 %v1729
        %2322 = vmatprep.subr.bf16.mxu0 %v1726
        %2323 = vmatpush1.bf16.msra.mxu0 %v1725
        %2324 = vmatprep.subr.bf16.mxu0 %v1722
        %2325 = vmatpush1.bf16.msra.mxu0 %v1721
        %2326 = vmatprep.subr.bf16.mxu0 %v1718
        %2327 = vmatpush1.bf16.msra.mxu0 %v1717
        %2328 = vmatprep.subr.bf16.mxu0 %v1714
        %2329 = vmatpush1.bf16.msra.mxu0 %v1713
        %2330 = vmatprep.subr.bf16.mxu0 %v1710
        %2331 = vmatpush1.bf16.msra.mxu0 %v1709
        %2332 = vmatprep.subr.bf16.mxu0 %v1706
        %2333 = vmatpush1.bf16.msra.mxu0 %v1705
        %2334 = vmatprep.subr.bf16.mxu0 %v1702
        %2335 = vmatpush1.bf16.msra.mxu0 %v1701
        %2336 = vmatprep.subr.bf16.mxu0 %v1762
        %2337 = vmatpush2.bf16.msra.mxu0 %v1761
        %2338 = vmatprep.subr.bf16.mxu0 %v1758
        %2339 = vmatpush2.bf16.msra.mxu0 %v1757
        %2340 = vmatprep.subr.bf16.mxu0 %v1754
        %2341 = vmatpush2.bf16.msra.mxu0 %v1753
        %2342 = vmatprep.subr.bf16.mxu0 %v1750
        %2343 = vmatpush2.bf16.msra.mxu0 %v1749
        %2344 = vmatprep.subr.bf16.mxu0 %v1746
        %2345 = vmatpush2.bf16.msra.mxu0 %v1745
        %2346 = vmatprep.subr.bf16.mxu0 %v1742
        %2347 = vmatpush2.bf16.msra.mxu0 %v1741
        %2348 = vmatprep.subr.bf16.mxu0 %v1738
        %2349 = vmatpush2.bf16.msra.mxu0 %v1737
        %2350 = vmatprep.subr.bf16.mxu0 %v1734
        %2351 = vmatpush2.bf16.msra.mxu0 %v1733
        %2352 = vmatprep.mubr.bf16.mxu0 %v730
        %2353 = vmatmul.mubr.bf16.gmra.mxu0 %v729
        %v2354 = vpop.f32.mrf.mxu0
        %v2355 = vadd.f32 %v2312, %v2354
        %v2356 = vpop.f32.mrf.mxu0
        %v2357 = vadd.f32 %v2314, %v2356
        %v2358 = vpop.f32.mrf.mxu0
        %v2359 = vadd.f32 %v2316, %v2358
        %v2360 = vpop.f32.mrf.mxu0
        %v2361 = vadd.f32 %v2318, %v2360
        %2362 = vdwg.mxu0
        %v2363 = vmax.f32 %v2183, 0.0
        %v2364 = vmax.f32 %v2185, 0.0
        %v2365 = vmax.f32 %v2355, 0.0
        %v2366 = vmax.f32 %v2357, 0.0
        %v2367 = vmax.f32 %v2187, 0.0
        %v2368 = vmax.f32 %v2189, 0.0
        %v2369 = vmax.f32 %v2359, 0.0
        %v2370 = vmax.f32 %v2361, 0.0
        %v2371 = vld [vmem:[%s360] sm:$0xff]
        %v2372 = vld [vmem:[%s360 + $0x8] sm:$0xff]
        %v2373 = vld [vmem:[%s360 + $0x10] sm:$0xff]
        %v2374 = vld [vmem:[%s360 + $0x18] sm:$0xff]
        %v2375 = vld [vmem:[%s369] sm:$0xff]
        %v2376 = vld [vmem:[%s369 + $0x8] sm:$0xff]
        %v2377 = vld [vmem:[%s369 + $0x10] sm:$0xff]
        %v2378 = vld [vmem:[%s369 + $0x18] sm:$0xff]
        %v2387 = vunpack.c.l.b16 %v2371
        %v2388 = vunpack.c.h.b16 %v2371
        %v2389 = vunpack.c.l.b16 %v2372
        %v2390 = vunpack.c.h.b16 %v2372
        %v2391 = vunpack.c.l.b16 %v2373
        %v2392 = vunpack.c.h.b16 %v2373
        %v2393 = vunpack.c.l.b16 %v2374
        %v2394 = vunpack.c.h.b16 %v2374
        %v2395 = vunpack.c.l.b16 %v2375
        %v2396 = vunpack.c.h.b16 %v2375
        %v2397 = vunpack.c.l.b16 %v2376
        %v2398 = vunpack.c.h.b16 %v2376
        %v2399 = vunpack.c.l.b16 %v2377
        %v2400 = vunpack.c.h.b16 %v2377
        %v2401 = vunpack.c.l.b16 %v2378
        %v2402 = vunpack.c.h.b16 %v2378
        %v2403 = vpack.c.b16 %v2395, %v2387
        %v2404 = vpack.c.b16 %v2396, %v2388
        %v2405 = vpack.c.b16 %v2397, %v2389
        %v2406 = vpack.c.b16 %v2398, %v2390
        %v2407 = vpack.c.b16 %v2399, %v2391
        %v2408 = vpack.c.b16 %v2400, %v2392
        %v2409 = vpack.c.b16 %v2401, %v2393
        %v2410 = vpack.c.b16 %v2402, %v2394
        %2419 = vmatprep.subr.bf16.mxu0 %v1536
        %2420 = vmatpush1.bf16.msra.mxu0 %v1535
        %2421 = vmatprep.subr.bf16.mxu0 %v1532
        %2422 = vmatpush1.bf16.msra.mxu0 %v1531
        %2423 = vmatprep.subr.bf16.mxu0 %v1528
        %2424 = vmatpush1.bf16.msra.mxu0 %v1527
        %2425 = vmatprep.subr.bf16.mxu0 %v1524
        %2426 = vmatpush1.bf16.msra.mxu0 %v1523
        %2427 = vmatprep.subr.bf16.mxu0 %v1520
        %2428 = vmatpush1.bf16.msra.mxu0 %v1519
        %2429 = vmatprep.subr.bf16.mxu0 %v1516
        %2430 = vmatpush1.bf16.msra.mxu0 %v1515
        %2431 = vmatprep.subr.bf16.mxu0 %v1512
        %2432 = vmatpush1.bf16.msra.mxu0 %v1511
        %2433 = vmatprep.subr.bf16.mxu0 %v1508
        %2434 = vmatpush1.bf16.msra.mxu0 %v1507
        %2435 = vmatprep.subr.bf16.mxu0 %v1568
        %2436 = vmatpush2.bf16.msra.mxu0 %v1567
        %2437 = vmatprep.subr.bf16.mxu0 %v1564
        %2438 = vmatpush2.bf16.msra.mxu0 %v1563
        %2439 = vmatprep.subr.bf16.mxu0 %v1560
        %2440 = vmatpush2.bf16.msra.mxu0 %v1559
        %2441 = vmatprep.subr.bf16.mxu0 %v1556
        %2442 = vmatpush2.bf16.msra.mxu0 %v1555
        %2443 = vmatprep.subr.bf16.mxu0 %v1552
        %2444 = vmatpush2.bf16.msra.mxu0 %v1551
        %2445 = vmatprep.subr.bf16.mxu0 %v1548
        %2446 = vmatpush2.bf16.msra.mxu0 %v1547
        %2447 = vmatprep.subr.bf16.mxu0 %v1544
        %2448 = vmatpush2.bf16.msra.mxu0 %v1543
        %2449 = vmatprep.subr.bf16.mxu0 %v1540
        %2450 = vmatpush2.bf16.msra.mxu0 %v1539
        %2451 = vmatprep.mubr.bf16.mxu0 %v2404
        %2452 = vmatmul.mubr.bf16.gmra.mxu0 %v2403
        %v2453 = vpop.f32.mrf.mxu0
        %v2454 = vpop.f32.mrf.mxu0
        %v2455 = vpop.f32.mrf.mxu0
        %v2456 = vadd.f32 0.0, %v2455
        %v2457 = vpop.f32.mrf.mxu0
        %v2458 = vadd.f32 0.0, %v2457
        %2459 = vdwg.mxu0
        %2460 = vmatprep.subr.bf16.mxu0 %v1600
        %2461 = vmatpush1.bf16.msra.mxu0 %v1599
        %2462 = vmatprep.subr.bf16.mxu0 %v1596
        %2463 = vmatpush1.bf16.msra.mxu0 %v1595
        %2464 = vmatprep.subr.bf16.mxu0 %v1592
        %2465 = vmatpush1.bf16.msra.mxu0 %v1591
        %2466 = vmatprep.subr.bf16.mxu0 %v1588
        %2467 = vmatpush1.bf16.msra.mxu0 %v1587
        %2468 = vmatprep.subr.bf16.mxu0 %v1584
        %2469 = vmatpush1.bf16.msra.mxu0 %v1583
        %2470 = vmatprep.subr.bf16.mxu0 %v1580
        %2471 = vmatpush1.bf16.msra.mxu0 %v1579
        %2472 = vmatprep.subr.bf16.mxu0 %v1576
        %2473 = vmatpush1.bf16.msra.mxu0 %v1575
        %2474 = vmatprep.subr.bf16.mxu0 %v1572
        %2475 = vmatpush1.bf16.msra.mxu0 %v1571
        %2476 = vmatprep.subr.bf16.mxu0 %v1632
        %2477 = vmatpush2.bf16.msra.mxu0 %v1631
        %2478 = vmatprep.subr.bf16.mxu0 %v1628
        %2479 = vmatpush2.bf16.msra.mxu0 %v1627
        %2480 = vmatprep.subr.bf16.mxu0 %v1624
        %2481 = vmatpush2.bf16.msra.mxu0 %v1623
        %2482 = vmatprep.subr.bf16.mxu0 %v1620
        %2483 = vmatpush2.bf16.msra.mxu0 %v1619
        %2484 = vmatprep.subr.bf16.mxu0 %v1616
        %2485 = vmatpush2.bf16.msra.mxu0 %v1615
        %2486 = vmatprep.subr.bf16.mxu0 %v1612
        %2487 = vmatpush2.bf16.msra.mxu0 %v1611
        %2488 = vmatprep.subr.bf16.mxu0 %v1608
        %2489 = vmatpush2.bf16.msra.mxu0 %v1607
        %2490 = vmatprep.subr.bf16.mxu0 %v1604
        %2491 = vmatpush2.bf16.msra.mxu0 %v1603
        %2492 = vmatprep.mubr.bf16.mxu0 %v2406
        %2493 = vmatmul.mubr.bf16.gmra.mxu0 %v2405
        %v2494 = vpop.f32.mrf.mxu0
        %v2495 = vpop.f32.mrf.mxu0
        %v2496 = vpop.f32.mrf.mxu0
        %v2497 = vadd.f32 %v2456, %v2496
        %v2498 = vpop.f32.mrf.mxu0
        %v2499 = vadd.f32 %v2458, %v2498
        %2500 = vdwg.mxu0
        %2501 = vmatprep.subr.bf16.mxu0 %v1664
        %2502 = vmatpush1.bf16.msra.mxu0 %v1663
        %2503 = vmatprep.subr.bf16.mxu0 %v1660
        %2504 = vmatpush1.bf16.msra.mxu0 %v1659
        %2505 = vmatprep.subr.bf16.mxu0 %v1656
        %2506 = vmatpush1.bf16.msra.mxu0 %v1655
        %2507 = vmatprep.subr.bf16.mxu0 %v1652
        %2508 = vmatpush1.bf16.msra.mxu0 %v1651
        %2509 = vmatprep.subr.bf16.mxu0 %v1648
        %2510 = vmatpush1.bf16.msra.mxu0 %v1647
        %2511 = vmatprep.subr.bf16.mxu0 %v1644
        %2512 = vmatpush1.bf16.msra.mxu0 %v1643
        %2513 = vmatprep.subr.bf16.mxu0 %v1640
        %2514 = vmatpush1.bf16.msra.mxu0 %v1639
        %2515 = vmatprep.subr.bf16.mxu0 %v1636
        %2516 = vmatpush1.bf16.msra.mxu0 %v1635
        %2517 = vmatprep.subr.bf16.mxu0 %v1696
        %2518 = vmatpush2.bf16.msra.mxu0 %v1695
        %2519 = vmatprep.subr.bf16.mxu0 %v1692
        %2520 = vmatpush2.bf16.msra.mxu0 %v1691
        %2521 = vmatprep.subr.bf16.mxu0 %v1688
        %2522 = vmatpush2.bf16.msra.mxu0 %v1687
        %2523 = vmatprep.subr.bf16.mxu0 %v1684
        %2524 = vmatpush2.bf16.msra.mxu0 %v1683
        %2525 = vmatprep.subr.bf16.mxu0 %v1680
        %2526 = vmatpush2.bf16.msra.mxu0 %v1679
        %2527 = vmatprep.subr.bf16.mxu0 %v1676
        %2528 = vmatpush2.bf16.msra.mxu0 %v1675
        %2529 = vmatprep.subr.bf16.mxu0 %v1672
        %2530 = vmatpush2.bf16.msra.mxu0 %v1671
        %2531 = vmatprep.subr.bf16.mxu0 %v1668
        %2532 = vmatpush2.bf16.msra.mxu0 %v1667
        %2533 = vmatprep.mubr.bf16.mxu0 %v2408
        %2534 = vmatmul.mubr.bf16.gmra.mxu0 %v2407
        %v2535 = vpop.f32.mrf.mxu0
        %v2536 = vpop.f32.mrf.mxu0
        %v2537 = vpop.f32.mrf.mxu0
        %v2538 = vadd.f32 %v2497, %v2537
        %v2539 = vpop.f32.mrf.mxu0
        %v2540 = vadd.f32 %v2499, %v2539
        %2541 = vdwg.mxu0
        %2542 = vmatprep.subr.bf16.mxu0 %v1728
        %2543 = vmatpush1.bf16.msra.mxu0 %v1727
        %2544 = vmatprep.subr.bf16.mxu0 %v1724
        %2545 = vmatpush1.bf16.msra.mxu0 %v1723
        %2546 = vmatprep.subr.bf16.mxu0 %v1720
        %2547 = vmatpush1.bf16.msra.mxu0 %v1719
        %2548 = vmatprep.subr.bf16.mxu0 %v1716
        %2549 = vmatpush1.bf16.msra.mxu0 %v1715
        %2550 = vmatprep.subr.bf16.mxu0 %v1712
        %2551 = vmatpush1.bf16.msra.mxu0 %v1711
        %2552 = vmatprep.subr.bf16.mxu0 %v1708
        %2553 = vmatpush1.bf16.msra.mxu0 %v1707
        %2554 = vmatprep.subr.bf16.mxu0 %v1704
        %2555 = vmatpush1.bf16.msra.mxu0 %v1703
        %2556 = vmatprep.subr.bf16.mxu0 %v1700
        %2557 = vmatpush1.bf16.msra.mxu0 %v1699
        %2558 = vmatprep.subr.bf16.mxu0 %v1760
        %2559 = vmatpush2.bf16.msra.mxu0 %v1759
        %2560 = vmatprep.subr.bf16.mxu0 %v1756
        %2561 = vmatpush2.bf16.msra.mxu0 %v1755
        %2562 = vmatprep.subr.bf16.mxu0 %v1752
        %2563 = vmatpush2.bf16.msra.mxu0 %v1751
        %2564 = vmatprep.subr.bf16.mxu0 %v1748
        %2565 = vmatpush2.bf16.msra.mxu0 %v1747
        %2566 = vmatprep.subr.bf16.mxu0 %v1744
        %2567 = vmatpush2.bf16.msra.mxu0 %v1743
        %2568 = vmatprep.subr.bf16.mxu0 %v1740
        %2569 = vmatpush2.bf16.msra.mxu0 %v1739
        %2570 = vmatprep.subr.bf16.mxu0 %v1736
        %2571 = vmatpush2.bf16.msra.mxu0 %v1735
        %2572 = vmatprep.subr.bf16.mxu0 %v1732
        %2573 = vmatpush2.bf16.msra.mxu0 %v1731
        %2574 = vmatprep.mubr.bf16.mxu0 %v2410
        %2575 = vmatmul.mubr.bf16.gmra.mxu0 %v2409
        %v2576 = vpop.f32.mrf.mxu0
        %v2577 = vpop.f32.mrf.mxu0
        %v2578 = vpop.f32.mrf.mxu0
        %v2579 = vadd.f32 %v2538, %v2578
        %v2580 = vpop.f32.mrf.mxu0
        %v2581 = vadd.f32 %v2540, %v2580
        %2582 = vdwg.mxu0
        %2583 = vmatprep.subr.bf16.mxu0 %v1538
        %2584 = vmatpush1.bf16.msra.mxu0 %v1537
        %2585 = vmatprep.subr.bf16.mxu0 %v1534
        %2586 = vmatpush1.bf16.msra.mxu0 %v1533
        %2587 = vmatprep.subr.bf16.mxu0 %v1530
        %2588 = vmatpush1.bf16.msra.mxu0 %v1529
        %2589 = vmatprep.subr.bf16.mxu0 %v1526
        %2590 = vmatpush1.bf16.msra.mxu0 %v1525
        %2591 = vmatprep.subr.bf16.mxu0 %v1522
        %2592 = vmatpush1.bf16.msra.mxu0 %v1521
        %2593 = vmatprep.subr.bf16.mxu0 %v1518
        %2594 = vmatpush1.bf16.msra.mxu0 %v1517
        %2595 = vmatprep.subr.bf16.mxu0 %v1514
        %2596 = vmatpush1.bf16.msra.mxu0 %v1513
        %2597 = vmatprep.subr.bf16.mxu0 %v1510
        %2598 = vmatpush1.bf16.msra.mxu0 %v1509
        %2599 = vmatprep.subr.bf16.mxu0 %v1570
        %2600 = vmatpush2.bf16.msra.mxu0 %v1569
        %2601 = vmatprep.subr.bf16.mxu0 %v1566
        %2602 = vmatpush2.bf16.msra.mxu0 %v1565
        %2603 = vmatprep.subr.bf16.mxu0 %v1562
        %2604 = vmatpush2.bf16.msra.mxu0 %v1561
        %2605 = vmatprep.subr.bf16.mxu0 %v1558
        %2606 = vmatpush2.bf16.msra.mxu0 %v1557
        %2607 = vmatprep.subr.bf16.mxu0 %v1554
        %2608 = vmatpush2.bf16.msra.mxu0 %v1553
        %2609 = vmatprep.subr.bf16.mxu0 %v1550
        %2610 = vmatpush2.bf16.msra.mxu0 %v1549
        %2611 = vmatprep.subr.bf16.mxu0 %v1546
        %2612 = vmatpush2.bf16.msra.mxu0 %v1545
        %2613 = vmatprep.subr.bf16.mxu0 %v1542
        %2614 = vmatpush2.bf16.msra.mxu0 %v1541
        %2615 = vmatprep.mubr.bf16.mxu0 %v2404
        %2616 = vmatmul.mubr.bf16.gmra.mxu0 %v2403
        %v2617 = vpop.f32.mrf.mxu0
        %v2618 = vadd.f32 0.0, %v2617
        %v2619 = vpop.f32.mrf.mxu0
        %v2620 = vadd.f32 0.0, %v2619
        %v2621 = vpop.f32.mrf.mxu0
        %v2622 = vpop.f32.mrf.mxu0
        %2623 = vdwg.mxu0
        %2624 = vmatprep.subr.bf16.mxu0 %v1602
        %2625 = vmatpush1.bf16.msra.mxu0 %v1601
        %2626 = vmatprep.subr.bf16.mxu0 %v1598
        %2627 = vmatpush1.bf16.msra.mxu0 %v1597
        %2628 = vmatprep.subr.bf16.mxu0 %v1594
        %2629 = vmatpush1.bf16.msra.mxu0 %v1593
        %2630 = vmatprep.subr.bf16.mxu0 %v1590
        %2631 = vmatpush1.bf16.msra.mxu0 %v1589
        %2632 = vmatprep.subr.bf16.mxu0 %v1586
        %2633 = vmatpush1.bf16.msra.mxu0 %v1585
        %2634 = vmatprep.subr.bf16.mxu0 %v1582
        %2635 = vmatpush1.bf16.msra.mxu0 %v1581
        %2636 = vmatprep.subr.bf16.mxu0 %v1578
        %2637 = vmatpush1.bf16.msra.mxu0 %v1577
        %2638 = vmatprep.subr.bf16.mxu0 %v1574
        %2639 = vmatpush1.bf16.msra.mxu0 %v1573
        %2640 = vmatprep.subr.bf16.mxu0 %v1634
        %2641 = vmatpush2.bf16.msra.mxu0 %v1633
        %2642 = vmatprep.subr.bf16.mxu0 %v1630
        %2643 = vmatpush2.bf16.msra.mxu0 %v1629
        %2644 = vmatprep.subr.bf16.mxu0 %v1626
        %2645 = vmatpush2.bf16.msra.mxu0 %v1625
        %2646 = vmatprep.subr.bf16.mxu0 %v1622
        %2647 = vmatpush2.bf16.msra.mxu0 %v1621
        %2648 = vmatprep.subr.bf16.mxu0 %v1618
        %2649 = vmatpush2.bf16.msra.mxu0 %v1617
        %2650 = vmatprep.subr.bf16.mxu0 %v1614
        %2651 = vmatpush2.bf16.msra.mxu0 %v1613
        %2652 = vmatprep.subr.bf16.mxu0 %v1610
        %2653 = vmatpush2.bf16.msra.mxu0 %v1609
        %2654 = vmatprep.subr.bf16.mxu0 %v1606
        %2655 = vmatpush2.bf16.msra.mxu0 %v1605
        %2656 = vmatprep.mubr.bf16.mxu0 %v2406
        %2657 = vmatmul.mubr.bf16.gmra.mxu0 %v2405
        %v2658 = vpop.f32.mrf.mxu0
        %v2659 = vadd.f32 %v2618, %v2658
        %v2660 = vpop.f32.mrf.mxu0
        %v2661 = vadd.f32 %v2620, %v2660
        %v2662 = vpop.f32.mrf.mxu0
        %v2663 = vpop.f32.mrf.mxu0
        %2664 = vdwg.mxu0
        %2665 = vmatprep.subr.bf16.mxu0 %v1666
        %2666 = vmatpush1.bf16.msra.mxu0 %v1665
        %2667 = vmatprep.subr.bf16.mxu0 %v1662
        %2668 = vmatpush1.bf16.msra.mxu0 %v1661
        %2669 = vmatprep.subr.bf16.mxu0 %v1658
        %2670 = vmatpush1.bf16.msra.mxu0 %v1657
        %2671 = vmatprep.subr.bf16.mxu0 %v1654
        %2672 = vmatpush1.bf16.msra.mxu0 %v1653
        %2673 = vmatprep.subr.bf16.mxu0 %v1650
        %2674 = vmatpush1.bf16.msra.mxu0 %v1649
        %2675 = vmatprep.subr.bf16.mxu0 %v1646
        %2676 = vmatpush1.bf16.msra.mxu0 %v1645
        %2677 = vmatprep.subr.bf16.mxu0 %v1642
        %2678 = vmatpush1.bf16.msra.mxu0 %v1641
        %2679 = vmatprep.subr.bf16.mxu0 %v1638
        %2680 = vmatpush1.bf16.msra.mxu0 %v1637
        %2681 = vmatprep.subr.bf16.mxu0 %v1698
        %2682 = vmatpush2.bf16.msra.mxu0 %v1697
        %2683 = vmatprep.subr.bf16.mxu0 %v1694
        %2684 = vmatpush2.bf16.msra.mxu0 %v1693
        %2685 = vmatprep.subr.bf16.mxu0 %v1690
        %2686 = vmatpush2.bf16.msra.mxu0 %v1689
        %2687 = vmatprep.subr.bf16.mxu0 %v1686
        %2688 = vmatpush2.bf16.msra.mxu0 %v1685
        %2689 = vmatprep.subr.bf16.mxu0 %v1682
        %2690 = vmatpush2.bf16.msra.mxu0 %v1681
        %2691 = vmatprep.subr.bf16.mxu0 %v1678
        %2692 = vmatpush2.bf16.msra.mxu0 %v1677
        %2693 = vmatprep.subr.bf16.mxu0 %v1674
        %2694 = vmatpush2.bf16.msra.mxu0 %v1673
        %2695 = vmatprep.subr.bf16.mxu0 %v1670
        %2696 = vmatpush2.bf16.msra.mxu0 %v1669
        %2697 = vmatprep.mubr.bf16.mxu0 %v2408
        %2698 = vmatmul.mubr.bf16.gmra.mxu0 %v2407
        %v2699 = vpop.f32.mrf.mxu0
        %v2700 = vadd.f32 %v2659, %v2699
        %v2701 = vpop.f32.mrf.mxu0
        %v2702 = vadd.f32 %v2661, %v2701
        %v2703 = vpop.f32.mrf.mxu0
        %v2704 = vpop.f32.mrf.mxu0
        %2705 = vdwg.mxu0
        %2706 = vmatprep.subr.bf16.mxu0 %v1730
        %2707 = vmatpush1.bf16.msra.mxu0 %v1729
        %2708 = vmatprep.subr.bf16.mxu0 %v1726
        %2709 = vmatpush1.bf16.msra.mxu0 %v1725
        %2710 = vmatprep.subr.bf16.mxu0 %v1722
        %2711 = vmatpush1.bf16.msra.mxu0 %v1721
        %2712 = vmatprep.subr.bf16.mxu0 %v1718
        %2713 = vmatpush1.bf16.msra.mxu0 %v1717
        %2714 = vmatprep.subr.bf16.mxu0 %v1714
        %2715 = vmatpush1.bf16.msra.mxu0 %v1713
        %2716 = vmatprep.subr.bf16.mxu0 %v1710
        %2717 = vmatpush1.bf16.msra.mxu0 %v1709
        %2718 = vmatprep.subr.bf16.mxu0 %v1706
        %2719 = vmatpush1.bf16.msra.mxu0 %v1705
        %2720 = vmatprep.subr.bf16.mxu0 %v1702
        %2721 = vmatpush1.bf16.msra.mxu0 %v1701
        %2722 = vmatprep.subr.bf16.mxu0 %v1762
        %2723 = vmatpush2.bf16.msra.mxu0 %v1761
        %2724 = vmatprep.subr.bf16.mxu0 %v1758
        %2725 = vmatpush2.bf16.msra.mxu0 %v1757
        %2726 = vmatprep.subr.bf16.mxu0 %v1754
        %2727 = vmatpush2.bf16.msra.mxu0 %v1753
        %2728 = vmatprep.subr.bf16.mxu0 %v1750
        %2729 = vmatpush2.bf16.msra.mxu0 %v1749
        %2730 = vmatprep.subr.bf16.mxu0 %v1746
        %2731 = vmatpush2.bf16.msra.mxu0 %v1745
        %2732 = vmatprep.subr.bf16.mxu0 %v1742
        %2733 = vmatpush2.bf16.msra.mxu0 %v1741
        %2734 = vmatprep.subr.bf16.mxu0 %v1738
        %2735 = vmatpush2.bf16.msra.mxu0 %v1737
        %2736 = vmatprep.subr.bf16.mxu0 %v1734
        %2737 = vmatpush2.bf16.msra.mxu0 %v1733
        %2738 = vmatprep.mubr.bf16.mxu0 %v2410
        %2739 = vmatmul.mubr.bf16.gmra.mxu0 %v2409
        %v2740 = vpop.f32.mrf.mxu0
        %v2741 = vadd.f32 %v2700, %v2740
        %v2742 = vpop.f32.mrf.mxu0
        %v2743 = vadd.f32 %v2702, %v2742
        %v2744 = vpop.f32.mrf.mxu0
        %v2745 = vpop.f32.mrf.mxu0
        %2746 = vdwg.mxu0
        %v2747 = vmax.f32 %v2741, 0.0
        %v2748 = vmax.f32 %v2743, 0.0
        %v2749 = vmax.f32 %v2579, 0.0
        %v2750 = vmax.f32 %v2581, 0.0
        %p2751 = scmp.eq.s32.totalorder %s31, 0
        %s2752 = scalar_select %p2751, 1, 0
        %v2753 = vstv %s2752
        %vm2754 = vcmp.eq.s32.totalorder %v2753, 1
        %v2755 = vsel %vm2754, %v2363, %v2747
        %v2756 = vsel %vm2754, %v2364, %v2748
        %v2757 = vsel %vm2754, %v2369, %v2749
        %v2758 = vsel %vm2754, %v2370, %v2750
        %v2759 = vmul.f32 %v2363, 0.25
        %v2760 = vmul.f32 %v2364, 0.25
        %v2761 = vmul.f32 %v2367, 0.25
        %v2762 = vmul.f32 %v2368, 0.25
        %v2763 = vmul.f32 %v2363, 0.75
        %v2764 = vmul.f32 %v2364, 0.75
        %v2765 = vmul.f32 %v2367, 0.75
        %v2766 = vmul.f32 %v2368, 0.75
        %v2767 = vmul.f32 %v2365, 0.25
        %v2768 = vmul.f32 %v2366, 0.25
        %v2769 = vmul.f32 %v2369, 0.25
        %v2770 = vmul.f32 %v2370, 0.25
        %v2771 = vmul.f32 %v2365, 0.75
        %v2772 = vmul.f32 %v2366, 0.75
        %v2773 = vmul.f32 %v2369, 0.75
        %v2774 = vmul.f32 %v2370, 0.75
        %v2775 = vmul.f32 %v2755, 0.25
        %v2776 = vmul.f32 %v2756, 0.25
        %v2777 = vmul.f32 %v2757, 0.25
        %v2778 = vmul.f32 %v2758, 0.25
        %v2779 = vlaneseq
        %v2780 = vshrl.u32 %v2779, 7
        %v2781 = vadd.f32 %v2775, %v2763
        %v2782 = vadd.f32 %v2776, %v2764
        %v2783 = vadd.f32 %v2767, %v2765
        %v2784 = vadd.f32 %v2768, %v2766
        %v2785 = vadd.f32 %v2763, %v2767
        %v2786 = vadd.f32 %v2764, %v2768
        %v2787 = vadd.f32 %v2765, %v2769
        %v2788 = vadd.f32 %v2766, %v2770
        %v2789 = vmul.f32 %v2781, 0.75
        %v2790 = vmul.f32 %v2782, 0.75
        %v2791 = vmul.f32 %v2785, 0.75
        %v2792 = vmul.f32 %v2786, 0.75
        %v2793 = vmul.f32 %v2783, 0.75
        %v2794 = vmul.f32 %v2784, 0.75
        %v2795 = vmul.f32 %v2787, 0.75
        %v2796 = vmul.f32 %v2788, 0.75
        %vm2797 = vcmp.eq.s32.totalorder %v2780, 0
        %v2798 = vrot.slane %v2781, 7
        %v2799 = vrot.slane %v2782, 7
        %v2800 = vrot.slane %v2785, 7
        %v2801 = vrot.slane %v2786, 7
        %v2802 = vrot.slane %v2783, 7
        %v2803 = vrot.slane %v2784, 7
        %v2804 = vrot.slane %v2787, 7
        %v2805 = vrot.slane %v2788, 7
        %v2806 = vsel %vm2797, 1, 0
        %vm2807 = vcmp.eq.s32.totalorder %v2806, 1
        %v2808 = vsel %vm2807, %v2781, %v2798
        %v2809 = vsel %vm2807, %v2782, %v2799
        %v2810 = vsel %vm2807, %v2785, %v2800
        %v2811 = vsel %vm2807, %v2786, %v2801
        %v2812 = vsel %vm2807, %v2783, %v2802
        %v2813 = vsel %vm2807, %v2784, %v2803
        %v2814 = vsel %vm2807, %v2787, %v2804
        %v2815 = vsel %vm2807, %v2788, %v2805
        %vm2816 = vcmp.eq.s32.totalorder %v2780, 7
        %v2817 = vrot.slane %v2781, 1
        %v2818 = vrot.slane %v2782, 1
        %v2819 = vrot.slane %v2785, 1
        %v2820 = vrot.slane %v2786, 1
        %v2821 = vrot.slane %v2783, 1
        %v2822 = vrot.slane %v2784, 1
        %v2823 = vrot.slane %v2787, 1
        %v2824 = vrot.slane %v2788, 1
        %v2825 = vsel %vm2816, 1, 0
        %vm2826 = vcmp.eq.s32.totalorder %v2825, 1
        %v2827 = vsel %vm2826, %v2781, %v2817
        %v2828 = vsel %vm2826, %v2782, %v2818
        %v2829 = vsel %vm2826, %v2785, %v2819
        %v2830 = vsel %vm2826, %v2786, %v2820
        %v2831 = vsel %vm2826, %v2783, %v2821
        %v2832 = vsel %vm2826, %v2784, %v2822
        %v2833 = vsel %vm2826, %v2787, %v2823
        %v2834 = vsel %vm2826, %v2788, %v2824
        %v2835 = vmul.f32 %v2808, 0.25
        %v2836 = vmul.f32 %v2809, 0.25
        %v2837 = vmul.f32 %v2810, 0.25
        %v2838 = vmul.f32 %v2811, 0.25
        %v2839 = vmul.f32 %v2812, 0.25
        %v2840 = vmul.f32 %v2813, 0.25
        %v2841 = vmul.f32 %v2814, 0.25
        %v2842 = vmul.f32 %v2815, 0.25
        %v2843 = vadd.f32 %v2835, %v2789
        %v2844 = vadd.f32 %v2836, %v2790
        %v2845 = vadd.f32 %v2837, %v2791
        %v2846 = vadd.f32 %v2838, %v2792
        %v2847 = vadd.f32 %v2839, %v2793
        %v2848 = vadd.f32 %v2840, %v2794
        %v2849 = vadd.f32 %v2841, %v2795
        %v2850 = vadd.f32 %v2842, %v2796
        %v2851 = vmul.f32 %v2827, 0.25
        %v2852 = vmul.f32 %v2828, 0.25
        %v2853 = vmul.f32 %v2829, 0.25
        %v2854 = vmul.f32 %v2830, 0.25
        %v2855 = vmul.f32 %v2831, 0.25
        %v2856 = vmul.f32 %v2832, 0.25
        %v2857 = vmul.f32 %v2833, 0.25
        %v2858 = vmul.f32 %v2834, 0.25
        %v2859 = vadd.f32 %v2789, %v2851
        %v2860 = vadd.f32 %v2790, %v2852
        %v2861 = vadd.f32 %v2791, %v2853
        %v2862 = vadd.f32 %v2792, %v2854
        %v2863 = vadd.f32 %v2793, %v2855
        %v2864 = vadd.f32 %v2794, %v2856
        %v2865 = vadd.f32 %v2795, %v2857
        %v2866 = vadd.f32 %v2796, %v2858
        %v2867 = vld [vmem:[%s382] sm:$0xff]
        %v2868 = vld [vmem:[%s382 + $0x8] sm:$0xff]
        %v2869 = vld [vmem:[%s382 + $0x10] sm:$0xff]
        %v2870 = vld [vmem:[%s382 + $0x18] sm:$0xff]
        %v2871 = vld [vmem:[%s382 + $0x40] sm:$0xff]
        %v2872 = vld [vmem:[%s382 + $0x48] sm:$0xff]
        %v2873 = vld [vmem:[%s382 + $0x50] sm:$0xff]
        %v2874 = vld [vmem:[%s382 + $0x58] sm:$0xff]
        %v2875 = vunpack.c.l.bf16 %v2867
        %v2876 = vunpack.c.h.bf16 %v2867
        %v2877 = vunpack.c.l.bf16 %v2868
        %v2878 = vunpack.c.h.bf16 %v2868
        %v2879 = vunpack.c.l.bf16 %v2869
        %v2880 = vunpack.c.h.bf16 %v2869
        %v2881 = vunpack.c.l.bf16 %v2870
        %v2882 = vunpack.c.h.bf16 %v2870
        %v2883 = vunpack.c.l.bf16 %v2871
        %v2884 = vunpack.c.h.bf16 %v2871
        %v2885 = vunpack.c.l.bf16 %v2872
        %v2886 = vunpack.c.h.bf16 %v2872
        %v2887 = vunpack.c.l.bf16 %v2873
        %v2888 = vunpack.c.h.bf16 %v2873
        %v2889 = vunpack.c.l.bf16 %v2874
        %v2890 = vunpack.c.h.bf16 %v2874
        %v2891 = vadd.f32 %v2843, %v2875
        %v2892 = vadd.f32 %v2844, %v2876
        %v2893 = vadd.f32 %v2845, %v2877
        %v2894 = vadd.f32 %v2846, %v2878
        %v2895 = vadd.f32 %v2859, %v2879
        %v2896 = vadd.f32 %v2860, %v2880
        %v2897 = vadd.f32 %v2861, %v2881
        %v2898 = vadd.f32 %v2862, %v2882
        %v2899 = vadd.f32 %v2847, %v2883
        %v2900 = vadd.f32 %v2848, %v2884
        %v2901 = vadd.f32 %v2849, %v2885
        %v2902 = vadd.f32 %v2850, %v2886
        %v2903 = vadd.f32 %v2863, %v2887
        %v2904 = vadd.f32 %v2864, %v2888
        %v2905 = vadd.f32 %v2865, %v2889
        %v2906 = vadd.f32 %v2866, %v2890
        %v2907 = vpack.c.bf16 %v2891, %v2891
        %v2908 = vpack.c.bf16 %v2892, %v2892
        %v2909 = vpack.c.bf16 %v2893, %v2893
        %v2910 = vpack.c.bf16 %v2894, %v2894
        %v2911 = vpack.c.bf16 %v2895, %v2895
        %v2912 = vpack.c.bf16 %v2896, %v2896
        %v2913 = vpack.c.bf16 %v2897, %v2897
        %v2914 = vpack.c.bf16 %v2898, %v2898
        %v2915 = vpack.c.bf16 %v2899, %v2899
        %v2916 = vpack.c.bf16 %v2900, %v2900
        %v2917 = vpack.c.bf16 %v2901, %v2901
        %v2918 = vpack.c.bf16 %v2902, %v2902
        %v2919 = vpack.c.bf16 %v2903, %v2903
        %v2920 = vpack.c.bf16 %v2904, %v2904
        %v2921 = vpack.c.bf16 %v2905, %v2905
        %v2922 = vpack.c.bf16 %v2906, %v2906
        %v2939 = vunpack.c.l.b16 %v2907
        %v2940 = vunpack.c.l.b16 %v2908
        %v2941 = vunpack.c.l.b16 %v2909
        %v2942 = vunpack.c.l.b16 %v2910
        %v2943 = vunpack.c.l.b16 %v2911
        %v2944 = vunpack.c.l.b16 %v2912
        %v2945 = vunpack.c.l.b16 %v2913
        %v2946 = vunpack.c.l.b16 %v2914
        %v2947 = vunpack.c.l.b16 %v2915
        %v2948 = vunpack.c.l.b16 %v2916
        %v2949 = vunpack.c.l.b16 %v2917
        %v2950 = vunpack.c.l.b16 %v2918
        %v2951 = vunpack.c.l.b16 %v2919
        %v2952 = vunpack.c.l.b16 %v2920
        %v2953 = vunpack.c.l.b16 %v2921
        %v2954 = vunpack.c.l.b16 %v2922
        %v2955 = vpack.c.b16 %v2940, %v2939
        %v2956 = vpack.c.b16 %v2942, %v2941
        %v2957 = vpack.c.b16 %v2944, %v2943
        %v2958 = vpack.c.b16 %v2946, %v2945
        %v2959 = vpack.c.b16 %v2948, %v2947
        %v2960 = vpack.c.b16 %v2950, %v2949
        %v2961 = vpack.c.b16 %v2952, %v2951
        %v2962 = vpack.c.b16 %v2954, %v2953
        %2971 = vst [vmem:[%s423] sm:$0xff] %v2955
        %2972 = vst [vmem:[%s423 + $0x8] sm:$0xff] %v2956
        %2973 = vst [vmem:[%s423 + $0x10] sm:$0xff] %v2957
        %2974 = vst [vmem:[%s423 + $0x18] sm:$0xff] %v2958
        %2975 = vst [vmem:[%s423 + $0x40] sm:$0xff] %v2959
        %2976 = vst [vmem:[%s423 + $0x48] sm:$0xff] %v2960
        %2977 = vst [vmem:[%s423 + $0x50] sm:$0xff] %v2961
        %2978 = vst [vmem:[%s423 + $0x58] sm:$0xff] %v2962
        %v2979 = vadd.f32 %v2759, %v2771
        %v2980 = vadd.f32 %v2760, %v2772
        %v2981 = vadd.f32 %v2761, %v2773
        %v2982 = vadd.f32 %v2762, %v2774
        %v2983 = vadd.f32 %v2771, %v2761
        %v2984 = vadd.f32 %v2772, %v2762
        %v2985 = vadd.f32 %v2773, %v2777
        %v2986 = vadd.f32 %v2774, %v2778
        %v2987 = vmul.f32 %v2979, 0.75
        %v2988 = vmul.f32 %v2980, 0.75
        %v2989 = vmul.f32 %v2983, 0.75
        %v2990 = vmul.f32 %v2984, 0.75
        %v2991 = vmul.f32 %v2981, 0.75
        %v2992 = vmul.f32 %v2982, 0.75
        %v2993 = vmul.f32 %v2985, 0.75
        %v2994 = vmul.f32 %v2986, 0.75
        %v2995 = vrot.slane %v2979, 7
        %v2996 = vrot.slane %v2980, 7
        %v2997 = vrot.slane %v2983, 7
        %v2998 = vrot.slane %v2984, 7
        %v2999 = vrot.slane %v2981, 7
        %v3000 = vrot.slane %v2982, 7
        %v3001 = vrot.slane %v2985, 7
        %v3002 = vrot.slane %v2986, 7
        %v3003 = vsel %vm2807, %v2979, %v2995
        %v3004 = vsel %vm2807, %v2980, %v2996
        %v3005 = vsel %vm2807, %v2983, %v2997
        %v3006 = vsel %vm2807, %v2984, %v2998
        %v3007 = vsel %vm2807, %v2981, %v2999
        %v3008 = vsel %vm2807, %v2982, %v3000
        %v3009 = vsel %vm2807, %v2985, %v3001
        %v3010 = vsel %vm2807, %v2986, %v3002
        %v3011 = vrot.slane %v2979, 1
        %v3012 = vrot.slane %v2980, 1
        %v3013 = vrot.slane %v2983, 1
        %v3014 = vrot.slane %v2984, 1
        %v3015 = vrot.slane %v2981, 1
        %v3016 = vrot.slane %v2982, 1
        %v3017 = vrot.slane %v2985, 1
        %v3018 = vrot.slane %v2986, 1
        %v3019 = vsel %vm2826, %v2979, %v3011
        %v3020 = vsel %vm2826, %v2980, %v3012
        %v3021 = vsel %vm2826, %v2983, %v3013
        %v3022 = vsel %vm2826, %v2984, %v3014
        %v3023 = vsel %vm2826, %v2981, %v3015
        %v3024 = vsel %vm2826, %v2982, %v3016
        %v3025 = vsel %vm2826, %v2985, %v3017
        %v3026 = vsel %vm2826, %v2986, %v3018
        %v3027 = vmul.f32 %v3003, 0.25
        %v3028 = vmul.f32 %v3004, 0.25
        %v3029 = vmul.f32 %v3005, 0.25
        %v3030 = vmul.f32 %v3006, 0.25
        %v3031 = vmul.f32 %v3007, 0.25
        %v3032 = vmul.f32 %v3008, 0.25
        %v3033 = vmul.f32 %v3009, 0.25
        %v3034 = vmul.f32 %v3010, 0.25
        %v3035 = vadd.f32 %v3027, %v2987
        %v3036 = vadd.f32 %v3028, %v2988
        %v3037 = vadd.f32 %v3029, %v2989
        %v3038 = vadd.f32 %v3030, %v2990
        %v3039 = vadd.f32 %v3031, %v2991
        %v3040 = vadd.f32 %v3032, %v2992
        %v3041 = vadd.f32 %v3033, %v2993
        %v3042 = vadd.f32 %v3034, %v2994
        %v3043 = vmul.f32 %v3019, 0.25
        %v3044 = vmul.f32 %v3020, 0.25
        %v3045 = vmul.f32 %v3021, 0.25
        %v3046 = vmul.f32 %v3022, 0.25
        %v3047 = vmul.f32 %v3023, 0.25
        %v3048 = vmul.f32 %v3024, 0.25
        %v3049 = vmul.f32 %v3025, 0.25
        %v3050 = vmul.f32 %v3026, 0.25
        %v3051 = vadd.f32 %v2987, %v3043
        %v3052 = vadd.f32 %v2988, %v3044
        %v3053 = vadd.f32 %v2989, %v3045
        %v3054 = vadd.f32 %v2990, %v3046
        %v3055 = vadd.f32 %v2991, %v3047
        %v3056 = vadd.f32 %v2992, %v3048
        %v3057 = vadd.f32 %v2993, %v3049
        %v3058 = vadd.f32 %v2994, %v3050
        %s3059 = scalar_lea.vmem %s382, 32 [#allocation10]
        %v3060 = vld [vmem:[%s3059] sm:$0xff]
        %v3061 = vld [vmem:[%s3059 + $0x8] sm:$0xff]
        %v3062 = vld [vmem:[%s3059 + $0x10] sm:$0xff]
        %v3063 = vld [vmem:[%s3059 + $0x18] sm:$0xff]
        %v3064 = vld [vmem:[%s3059 + $0x40] sm:$0xff]
        %v3065 = vld [vmem:[%s3059 + $0x48] sm:$0xff]
        %v3066 = vld [vmem:[%s3059 + $0x50] sm:$0xff]
        %v3067 = vld [vmem:[%s3059 + $0x58] sm:$0xff]
        %v3068 = vunpack.c.l.bf16 %v3060
        %v3069 = vunpack.c.h.bf16 %v3060
        %v3070 = vunpack.c.l.bf16 %v3061
        %v3071 = vunpack.c.h.bf16 %v3061
        %v3072 = vunpack.c.l.bf16 %v3062
        %v3073 = vunpack.c.h.bf16 %v3062
        %v3074 = vunpack.c.l.bf16 %v3063
        %v3075 = vunpack.c.h.bf16 %v3063
        %v3076 = vunpack.c.l.bf16 %v3064
        %v3077 = vunpack.c.h.bf16 %v3064
        %v3078 = vunpack.c.l.bf16 %v3065
        %v3079 = vunpack.c.h.bf16 %v3065
        %v3080 = vunpack.c.l.bf16 %v3066
        %v3081 = vunpack.c.h.bf16 %v3066
        %v3082 = vunpack.c.l.bf16 %v3067
        %v3083 = vunpack.c.h.bf16 %v3067
        %v3084 = vadd.f32 %v3035, %v3068
        %v3085 = vadd.f32 %v3036, %v3069
        %v3086 = vadd.f32 %v3037, %v3070
        %v3087 = vadd.f32 %v3038, %v3071
        %v3088 = vadd.f32 %v3051, %v3072
        %v3089 = vadd.f32 %v3052, %v3073
        %v3090 = vadd.f32 %v3053, %v3074
        %v3091 = vadd.f32 %v3054, %v3075
        %v3092 = vadd.f32 %v3039, %v3076
        %v3093 = vadd.f32 %v3040, %v3077
        %v3094 = vadd.f32 %v3041, %v3078
        %v3095 = vadd.f32 %v3042, %v3079
        %v3096 = vadd.f32 %v3055, %v3080
        %v3097 = vadd.f32 %v3056, %v3081
        %v3098 = vadd.f32 %v3057, %v3082
        %v3099 = vadd.f32 %v3058, %v3083
        %v3100 = vpack.c.bf16 %v3084, %v3084
        %v3101 = vpack.c.bf16 %v3085, %v3085
        %v3102 = vpack.c.bf16 %v3086, %v3086
        %v3103 = vpack.c.bf16 %v3087, %v3087
        %v3104 = vpack.c.bf16 %v3088, %v3088
        %v3105 = vpack.c.bf16 %v3089, %v3089
        %v3106 = vpack.c.bf16 %v3090, %v3090
        %v3107 = vpack.c.bf16 %v3091, %v3091
        %v3108 = vpack.c.bf16 %v3092, %v3092
        %v3109 = vpack.c.bf16 %v3093, %v3093
        %v3110 = vpack.c.bf16 %v3094, %v3094
        %v3111 = vpack.c.bf16 %v3095, %v3095
        %v3112 = vpack.c.bf16 %v3096, %v3096
        %v3113 = vpack.c.bf16 %v3097, %v3097
        %v3114 = vpack.c.bf16 %v3098, %v3098
        %v3115 = vpack.c.bf16 %v3099, %v3099
        %v3132 = vunpack.c.l.b16 %v3100
        %v3133 = vunpack.c.l.b16 %v3101
        %v3134 = vunpack.c.l.b16 %v3102
        %v3135 = vunpack.c.l.b16 %v3103
        %v3136 = vunpack.c.l.b16 %v3104
        %v3137 = vunpack.c.l.b16 %v3105
        %v3138 = vunpack.c.l.b16 %v3106
        %v3139 = vunpack.c.l.b16 %v3107
        %v3140 = vunpack.c.l.b16 %v3108
        %v3141 = vunpack.c.l.b16 %v3109
        %v3142 = vunpack.c.l.b16 %v3110
        %v3143 = vunpack.c.l.b16 %v3111
        %v3144 = vunpack.c.l.b16 %v3112
        %v3145 = vunpack.c.l.b16 %v3113
        %v3146 = vunpack.c.l.b16 %v3114
        %v3147 = vunpack.c.l.b16 %v3115
        %v3148 = vpack.c.b16 %v3133, %v3132
        %v3149 = vpack.c.b16 %v3135, %v3134
        %v3150 = vpack.c.b16 %v3137, %v3136
        %v3151 = vpack.c.b16 %v3139, %v3138
        %v3152 = vpack.c.b16 %v3141, %v3140
        %v3153 = vpack.c.b16 %v3143, %v3142
        %v3154 = vpack.c.b16 %v3145, %v3144
        %v3155 = vpack.c.b16 %v3147, %v3146
        %s3164 = scalar_lea.vmem %s423, 32 [#allocation11]
        %3165 = vst [vmem:[%s3164] sm:$0xff] %v3148
        %3166 = vst [vmem:[%s3164 + $0x8] sm:$0xff] %v3149
        %3167 = vst [vmem:[%s3164 + $0x10] sm:$0xff] %v3150
        %3168 = vst [vmem:[%s3164 + $0x18] sm:$0xff] %v3151
        %3169 = vst [vmem:[%s3164 + $0x40] sm:$0xff] %v3152
        %3170 = vst [vmem:[%s3164 + $0x48] sm:$0xff] %v3153
        %3171 = vst [vmem:[%s3164 + $0x50] sm:$0xff] %v3154
        %3172 = vst [vmem:[%s3164 + $0x58] sm:$0xff] %v3155
        %s3173 = sand.u32 %s197, 1
        %s3174 = scalar_lea.sflag [#allocation4], %s3173
        %s3175 = sand.u32 %s197, 1
        %s3176 = smul.addr %s3175, 128
        %s3177 = scalar_lea.vmem [#allocation11], %s3176
        // Predicated region
        $region61: #{tpu_custom_call.1} parent=39 // pred_check
          %p3178 = pneg %p207
        $region62: #{tpu_custom_call.1} parent=39 // pred_check_branch
          %3180 = sbr.rel (%p3178) target = $region64
        $region63: #{tpu_custom_call.1} parent=39 // pred_region
          %s3181 = smul.u32 2, %s31
          %s3183 = ssub.s32 2048, 2048
          %3184 = vsyncadd %s3174, %s3183
          %s3185 = smul.addr %s3181, 16
          %s3186 = smul.addr %s30, 32
          %s3187 = sadd.s32 %s3185, %s3186
          %s3188 = smul.addr %s3187, 64
          %s3189 = scalar_lea.hbm %s5, %s3188
          %s3190 = sshll.u32 %s3177, 4
          %s3191 = int_to_ptr.vmem [resolvable:$true] %s3190
          %3196 = dma.vmem_to_hbm [thread:$0]  %s3191, 2048, %s3189, %s3174, 512, 512, 32
        $region64: #{tpu_custom_call.1} parent=39 // pred_fallthru
          _
      $region40: #{tpu_custom_call.1} parent=5 // pred_fallthru
        _
      %p3197 = scmp.le.s32.totalorder 2, %s21
      // Predicated region
      $region65: #{tpu_custom_call.1} parent=5 // pred_check
        %p3198 = pneg %p3197
      $region66: #{tpu_custom_call.1} parent=5 // pred_check_branch
        %3200 = sbr.rel (%p3198) target = $region68
      $region67: #{tpu_custom_call.1} parent=5 // pred_region
        %s3201 = ssub.s32 %s21, 2
        // Predicated region
        $region69: #{tpu_custom_call.1} parent=67 // pred_check
          %p3202 = pneg %p213
        $region70: #{tpu_custom_call.1} parent=67 // pred_check_branch
          %3204 = sbr.rel (%p3202) target = $region72
        $region71: #{tpu_custom_call.1} parent=67 // pred_region
          %s3205 = sand.u32 %s198, 1
          %s3206 = scalar_lea.sflag [#allocation4], %s3205
          %s3207 = sand.u32 %s198, 1
          %s3208 = smul.addr %s3207, 128
          %s3209 = scalar_lea.vmem [#allocation11], %s3208
          %3210 = dma.done %s3206, 2048
        $region72: #{tpu_custom_call.1} parent=67 // pred_fallthru
          _
      $region68: #{tpu_custom_call.1} parent=5 // pred_fallthru
        _
    $region6: #{tpu_custom_call.1} parent=1 // loop_footer
      %s25 = sadd.s32 1, %s21
    $region7: #{tpu_custom_call.1} parent=1 // loop_footer_branch
      %20 = sbr.rel target = $region3
    $region8: #{tpu_custom_call.1} parent=1 // loop_exit
      _
    %3211 = vsyncpa [#allocation3], 1
    %s3212 = scalar_lea.sflag [#allocation3], 1
    %3213 = vsyncpa %s3212, 1
    %3214 = vsyncpa [#allocation6], 1
    %s3215 = scalar_lea.sflag [#allocation6], 1
    %3216 = vsyncpa %s3215, 1
    %3217 = vsyncpa [#allocation9], 1
    %3218 = vsyncpa [#allocation4], 1
    %s3219 = scalar_lea.sflag [#allocation4], 1
    %3220 = vsyncpa %s3219, 1

</llo_original>
